<compile_context>
chip_gen: v6e
topology: v6e:2x2x1
jax: 0.10.0
libtpu: 0.0.40
codegen_flags: <defaults>
</compile_context>

<pallas_src>
import functools

import jax
import jax.numpy as jnp
from jax.experimental import pallas as pl
from jax.experimental.pallas import tpu as pltpu


def encoder_kernel(x_ref, w1_ref, w2_ref, w3g_ref, w3l_ref, b3f_ref,
                   w4_ref, b4_ref, o_ref, *, n, chunk):
    tm, cpad = o_ref.shape
    n_chunks = tm // chunk
    mc = chunk * n                       # point-rows handled per chunk

    def body(c, carry):
        row0 = pl.multiple_of(c * mc, mc)
        x = x_ref[pl.ds(row0, mc), :]                               # (mc, 8) f32

        # --- first_conv[0]: Conv1d(3,128,1) + BN1 + ReLU.  BN1 scale is folded
        #     into the w1 columns; conv bias + BN1 shift ride in the constant
        #     "ones" column (index 3) of the padded input -> one MXU matmul.
        h = jnp.dot(x, w1_ref[...], preferred_element_type=jnp.float32)
        h = jnp.maximum(h, 0.0)                                     # (mc, 128)

        # --- first_conv[3]: Conv1d(128,256,1).  Its bias is constant per
        #     channel, commutes with the group max, and is folded into b3f.
        f = jnp.dot(h.astype(w2_ref.dtype), w2_ref[...],
                    preferred_element_type=jnp.float32)             # (mc, 256)

        # --- feature_global = max over the n points of each group
        fg = jnp.max(f.reshape(chunk, n, f.shape[-1]), axis=1)      # (chunk, 256)

        # --- second_conv[0]: Conv1d(512,512,1) with w3 split [global | local];
        #     BN2 scale folded into both halves, all biases folded into b3f
        #     which is added on the small per-group slab before broadcasting.
        gl = jnp.dot(fg.astype(w3g_ref.dtype), w3g_ref[...],
                     preferred_element_type=jnp.float32) + b3f_ref[...]  # (chunk, 512)
        fl = jnp.dot(f.astype(w3l_ref.dtype), w3l_ref[...],
                     preferred_element_type=jnp.float32)                 # (mc, 512)
        h2 = jnp.maximum(fl.reshape(chunk, n, fl.shape[-1]) + gl[:, None, :],
                         0.0)                                            # (chunk, n, 512)

        # --- second_conv[3]: Conv1d(512,C,1); bias added after the reduction.
        y = jnp.dot(h2.reshape(mc, h2.shape[-1]).astype(w4_ref.dtype),
                    w4_ref[...], preferred_element_type=jnp.float32)     # (mc, cpad)
        out = jnp.max(y.reshape(chunk, n, cpad), axis=1) + b4_ref[...]   # (chunk, cpad)

        o_ref[pl.ds(pl.multiple_of(c * chunk, chunk), chunk), :] = out
        return carry

    jax.lax.fori_loop(0, n_chunks, body, 0, unroll=True)


def _pack_kernel_params(params, mxu_dtype=jnp.bfloat16):
    """Fold BN scales / conv biases into weights (f32), split w3, pad C."""
    f32 = jnp.float32

    s1 = params["bn1_scale"].astype(f32)             # (1, 128)
    t1 = params["bn1_shift"].astype(f32)
    w1 = params["w1"].astype(f32) * s1               # (3, 128)  column-scaled
    b1f = params["b1"].astype(f32) * s1 + t1         # (1, 128)
    # Augmented (8,128) weight: rows 0..2 = coords, row 3 multiplies the
    # constant-1 input column (carries the folded bias), rows 4..7 = zero pad.
    w1a = jnp.zeros((8, w1.shape[1]), f32)
    w1a = w1a.at[0:3, :].set(w1).at[3, :].set(b1f[0])

    w2 = params["w2"].astype(f32)                    # (128, 256)
    b2 = params["b2"].astype(f32)                    # (1, 256)

    s2 = params["bn2_scale"].astype(f32)             # (1, 512)
    t2 = params["bn2_shift"].astype(f32)
    w3 = params["w3"].astype(f32)                    # (512, 512)
    half = w2.shape[1]                               # 256
    w3g = w3[:half, :] * s2                          # global half, BN2-scaled
    w3l = w3[half:, :] * s2                          # local half, BN2-scaled
    # conv2 bias commutes with the per-group max -> fold its downstream
    # contribution through both w3 halves into the stage-2 bias.
    b3f = (params["b3"].astype(f32) + b2 @ (w3[:half, :] + w3[half:, :])) * s2 + t2

    w4 = params["w4"].astype(f32)
    b4 = params["b4"].astype(f32)
    C = w4.shape[1]
    Cpad = ((C + 127) // 128) * 128
    if Cpad != C:
        w4 = jnp.pad(w4, ((0, 0), (0, Cpad - C)))
        b4 = jnp.pad(b4, ((0, 0), (0, Cpad - C)))

    args = (w1a,
            w2.astype(mxu_dtype),
            w3g.astype(mxu_dtype), w3l.astype(mxu_dtype), b3f,
            w4.astype(mxu_dtype), b4)
    return args, C, Cpad


def encoder_forward(point_groups, params, tm=None, chunk_groups=None):
    """point_groups: (B, G, N, 3) float32 -> (B, G, C) float32"""
    B, G, N, _ = point_groups.shape
    BG = B * G
    pg = point_groups.astype(jnp.float32)

    # Pad the per-group point count to a multiple of 8 (sublane tile) by
    # repeating the first point of each group: duplicates never change a max.
    Np = ((N + 7) // 8) * 8
    if Np != N:
        pad = jnp.broadcast_to(pg[:, :, :1, :], (B, G, Np - N, 3))
        pg = jnp.concatenate([pg, pad], axis=2)

    # Input layout (BG*Np, 8): coords in cols 0..2, constant 1 in col 3 (bias
    # slot for the folded conv1 bias + BN1 shift), zeros in cols 4..7.
    x = pg.reshape(BG * Np, 3)
    x = jnp.concatenate(
        [x, jnp.ones((BG * Np, 1), jnp.float32),
         jnp.zeros((BG * Np, 4), jnp.float32)], axis=-1)

    w_args, C, Cpad = _pack_kernel_params(params)

    # --- tile sizing (VMEM-budgeted) -----------------------------------------
    # TM groups per grid step (default 128); the per-group pipeline is chunked
    # inside the kernel so the live (chunk*Np, 512) f32 intermediates stay
    # ~<16 MiB regardless of TM.
    if tm is None:
        tm = 128
    tm = max(8, (int(tm) // 8) * 8)
    tm = min(tm, ((BG + 7) // 8) * 8)
    if BG >= 16:
        # Keep >= 2 grid steps so both v7x TensorCores get work.
        tm = min(tm, max(8, (BG // 2 // 8) * 8))
    if chunk_groups is None:
        chunk_groups = max(8, ((2048 // max(Np, 1)) // 8) * 8)  # ~2k rows/chunk
    chunk = max(8, min((int(chunk_groups) // 8) * 8, tm))
    tm = ((tm + chunk - 1) // chunk) * chunk

    BGp = pl.cdiv(BG, tm) * tm
    if BGp != BG:
        x = jnp.pad(x, ((0, (BGp - BG) * Np), (0, 0)))

    def const_spec(arr):
        nd = arr.ndim
        return pl.BlockSpec(arr.shape, lambda i, _nd=nd: (0,) * _nd)

    kernel = functools.partial(encoder_kernel, n=Np, chunk=chunk)

    out = pl.pallas_call(
        kernel,
        out_shape=jax.ShapeDtypeStruct((BGp, Cpad), jnp.float32),
        grid_spec=pltpu.PrefetchScalarGridSpec(
            num_scalar_prefetch=0,
            grid=(BGp // tm,),
            in_specs=[pl.BlockSpec((tm * Np, 8), lambda i: (i, 0))]
                     + [const_spec(a) for a in w_args],
            out_specs=pl.BlockSpec((tm, Cpad), lambda i: (i, 0)),
        ),
        compiler_params=pltpu.CompilerParams(
            dimension_semantics=("parallel",),
            # <= 48 MiB: fits v7x's 64 MiB/TC with headroom; ample on v5e/v6e.
            vmem_limit_bytes=48 * 1024 * 1024,
        ),
    )(x, *w_args)

    return out[:BG, :C].reshape(B, G, C)


def init_params(key, encoder_channel):
    """Deterministic synthetic parameters (shapes from the PyTorch __init__)."""
    ks = jax.random.split(key, 12)
    eps = 1e-5

    def lin(k, cin, cout, scale=0.05):
        # Conv1d(cin, cout, 1): weight (cout, cin, 1) kept transposed (cin, cout)
        return scale * jax.random.normal(k, (cin, cout), jnp.float32)

    params = {}
    params["w1"] = lin(ks[0], 3, 128)
    params["b1"] = 0.05 * jax.random.normal(ks[1], (1, 128), jnp.float32)
    g1 = 1.0 + 0.05 * jax.random.normal(ks[2], (1, 128), jnp.float32)
    be1 = 0.05 * jax.random.normal(ks[3], (1, 128), jnp.float32)
    rm1 = jnp.zeros((1, 128), jnp.float32)
    rv1 = jnp.ones((1, 128), jnp.float32)
    params["bn1_scale"] = g1 / jnp.sqrt(rv1 + eps)
    params["bn1_shift"] = be1 - rm1 * params["bn1_scale"]

    params["w2"] = lin(ks[4], 128, 256)
    params["b2"] = 0.05 * jax.random.normal(ks[5], (1, 256), jnp.float32)

    params["w3"] = lin(ks[6], 512, 512)
    params["b3"] = 0.05 * jax.random.normal(ks[7], (1, 512), jnp.float32)
    g2 = 1.0 + 0.05 * jax.random.normal(ks[8], (1, 512), jnp.float32)
    be2 = 0.05 * jax.random.normal(ks[9], (1, 512), jnp.float32)
    rm2 = jnp.zeros((1, 512), jnp.float32)
    rv2 = jnp.ones((1, 512), jnp.float32)
    params["bn2_scale"] = g2 / jnp.sqrt(rv2 + eps)
    params["bn2_shift"] = be2 - rm2 * params["bn2_scale"]

    params["w4"] = lin(ks[10], 512, encoder_channel)
    params["b4"] = 0.05 * jax.random.normal(ks[11], (1, encoder_channel), jnp.float32)
    return params


def encoder_reference(point_groups, params):
    """Pure-JAX f32 reference mirroring the PyTorch forward (BN inference mode)."""
    B, G, N, _ = point_groups.shape
    x = point_groups.reshape(B * G, N, 3).astype(jnp.float32)          # (BG, N, 3)
    h = jnp.einsum("bni,ij->bnj", x, params["w1"]) + params["b1"]
    h = jnp.maximum(h * params["bn1_scale"] + params["bn1_shift"], 0.0)
    f = jnp.einsum("bni,ij->bnj", h, params["w2"]) + params["b2"]      # (BG, N, 256)
    fg = jnp.max(f, axis=1, keepdims=True)                             # (BG, 1, 256)
    feat = jnp.concatenate([jnp.broadcast_to(fg, f.shape), f], axis=-1)
    h2 = jnp.einsum("bni,ij->bnj", feat, params["w3"]) + params["b3"]
    h2 = jnp.maximum(h2 * params["bn2_scale"] + params["bn2_shift"], 0.0)
    y = jnp.einsum("bni,ij->bnj", h2, params["w4"]) + params["b4"]     # (BG, N, C)
    return jnp.max(y, axis=1).reshape(B, G, -1)


if __name__ == "__main__":
    B, G, N = 2, 4, 32
    encoder_channel = 128

    key = jax.random.PRNGKey(0)
    k_x, k_p = jax.random.split(key)
    point_groups = jax.random.normal(k_x, (B, G, N, 3), jnp.float32)
    params = init_params(k_p, encoder_channel)

    out = jax.block_until_ready(encoder_forward(point_groups, params))
    ref = encoder_reference(point_groups, params)

    assert out.shape == (B, G, encoder_channel), out.shape
    # bf16 MXU inputs (f32 accumulation) -> relaxed tolerance vs the f32 reference.
    err = float(jnp.max(jnp.abs(out - ref)))
    assert err < 2e-2, err

    print("KERNEL_OK")
</pallas_src>

<mosaic_0001>
module attributes {stable_mosaic.version = 11 : i64} {
  func.func @encoder_kernel(%arg0: i32, %arg1: memref<256x8xf32, #tpu.memory_space<vmem>>, %arg2: memref<8x128xf32, #tpu.memory_space<vmem>>, %arg3: memref<128x256xbf16, #tpu.memory_space<vmem>>, %arg4: memref<256x512xbf16, #tpu.memory_space<vmem>>, %arg5: memref<256x512xbf16, #tpu.memory_space<vmem>>, %arg6: memref<1x512xf32, #tpu.memory_space<vmem>>, %arg7: memref<512x128xbf16, #tpu.memory_space<vmem>>, %arg8: memref<1x128xf32, #tpu.memory_space<vmem>>, %arg9: memref<8x128xf32, #tpu.memory_space<vmem>>) attributes {dimension_semantics = [#tpu.dimension_semantics<parallel>], iteration_bounds = array<i64: 1>, scalar_prefetch = 0 : i64, scratch_operands = 0 : i64, tpu.core_type = #tpu.core_type<tc>, window_params = [{transform_indices = @transform_0, window_bounds = array<i64: 256, 8>}, {pipeline_mode = #tpu.pipeline_mode<synchronous>, transform_indices = @transform_1, window_bounds = array<i64: 8, 128>}, {pipeline_mode = #tpu.pipeline_mode<synchronous>, transform_indices = @transform_2, window_bounds = array<i64: 128, 256>}, {pipeline_mode = #tpu.pipeline_mode<synchronous>, transform_indices = @transform_3, window_bounds = array<i64: 256, 512>}, {pipeline_mode = #tpu.pipeline_mode<synchronous>, transform_indices = @transform_4, window_bounds = array<i64: 256, 512>}, {pipeline_mode = #tpu.pipeline_mode<synchronous>, transform_indices = @transform_5, window_bounds = array<i64: 1, 512>}, {pipeline_mode = #tpu.pipeline_mode<synchronous>, transform_indices = @transform_6, window_bounds = array<i64: 512, 128>}, {pipeline_mode = #tpu.pipeline_mode<synchronous>, transform_indices = @transform_7, window_bounds = array<i64: 1, 128>}, {transform_indices = @transform_8, window_bounds = array<i64: 8, 128>}]} {
    %c0_i32 = arith.constant 0 : i32
    %c256_i32 = arith.constant 256 : i32
    %0 = arith.muli %c0_i32, %c256_i32 : i32
    %1 = tpu.assume_multiple %0, 256 : i32
    %2 = arith.index_cast %1 : i32 to index
    %c0 = arith.constant 0 : index
    %3 = vector.load %arg1[%2, %c0] : memref<256x8xf32, #tpu.memory_space<vmem>>, vector<256x8xf32>
    %c0_0 = arith.constant 0 : index
    %c0_1 = arith.constant 0 : index
    %4 = vector.load %arg2[%c0_0, %c0_1] : memref<8x128xf32, #tpu.memory_space<vmem>>, vector<8x128xf32>
    %cst = arith.constant dense<0.000000e+00> : vector<256x128xf32>
    %5 = tpu.matmul %3, %4, %cst {dimension_numbers = #tpu.dot_dimension_numbers<[1], [0], [0], [1], [0, 0, 1, 1], [], []>} : vector<256x8xf32>, vector<8x128xf32>, vector<256x128xf32> -> vector<256x128xf32>
    %cst_2 = arith.constant 0.000000e+00 : f32
    %6 = vector.broadcast %cst_2 : f32 to vector<256x128xf32>
    %7 = arith.maximumf %5, %6 : vector<256x128xf32>
    %8 = arith.truncf %7 : vector<256x128xf32> to vector<256x128xbf16>
    %c0_3 = arith.constant 0 : index
    %c0_4 = arith.constant 0 : index
    %9 = vector.load %arg3[%c0_3, %c0_4] : memref<128x256xbf16, #tpu.memory_space<vmem>>, vector<128x256xbf16>
    %cst_5 = arith.constant dense<0.000000e+00> : vector<256x256xf32>
    %10 = tpu.matmul %8, %9, %cst_5 {dimension_numbers = #tpu.dot_dimension_numbers<[1], [0], [0], [1], [0, 0, 1, 1], [], []>} : vector<256x128xbf16>, vector<128x256xbf16>, vector<256x256xf32> -> vector<256x256xf32>
    %11 = vector.shape_cast %10 : vector<256x256xf32> to vector<8x32x256xf32>
    %cst_6 = arith.constant dense<0xFF800000> : vector<8x256xf32>
    %12 = vector.multi_reduction <maximumf>, %11, %cst_6 [1] : vector<8x32x256xf32> to vector<8x256xf32>
    %13 = arith.truncf %12 : vector<8x256xf32> to vector<8x256xbf16>
    %c0_7 = arith.constant 0 : index
    %c0_8 = arith.constant 0 : index
    %14 = vector.load %arg4[%c0_7, %c0_8] : memref<256x512xbf16, #tpu.memory_space<vmem>>, vector<256x512xbf16>
    %cst_9 = arith.constant dense<0.000000e+00> : vector<8x512xf32>
    %15 = tpu.matmul %13, %14, %cst_9 {dimension_numbers = #tpu.dot_dimension_numbers<[1], [0], [0], [1], [0, 0, 1, 1], [], []>} : vector<8x256xbf16>, vector<256x512xbf16>, vector<8x512xf32> -> vector<8x512xf32>
    %c0_10 = arith.constant 0 : index
    %c0_11 = arith.constant 0 : index
    %16 = vector.load %arg6[%c0_10, %c0_11] : memref<1x512xf32, #tpu.memory_space<vmem>>, vector<1x512xf32>
    %17 = vector.broadcast %16 : vector<1x512xf32> to vector<8x512xf32>
    %18 = arith.addf %15, %17 : vector<8x512xf32>
    %19 = arith.truncf %10 : vector<256x256xf32> to vector<256x256xbf16>
    %c0_12 = arith.constant 0 : index
    %c0_13 = arith.constant 0 : index
    %20 = vector.load %arg5[%c0_12, %c0_13] : memref<256x512xbf16, #tpu.memory_space<vmem>>, vector<256x512xbf16>
    %cst_14 = arith.constant dense<0.000000e+00> : vector<256x512xf32>
    %21 = tpu.matmul %19, %20, %cst_14 {dimension_numbers = #tpu.dot_dimension_numbers<[1], [0], [0], [1], [0, 0, 1, 1], [], []>} : vector<256x256xbf16>, vector<256x512xbf16>, vector<256x512xf32> -> vector<256x512xf32>
    %22 = vector.shape_cast %21 : vector<256x512xf32> to vector<8x32x512xf32>
    %23 = vector.shape_cast %18 : vector<8x512xf32> to vector<8x1x512xf32>
    %24 = vector.broadcast %23 : vector<8x1x512xf32> to vector<8x32x512xf32>
    %25 = arith.addf %22, %24 : vector<8x32x512xf32>
    %cst_15 = arith.constant 0.000000e+00 : f32
    %26 = vector.broadcast %cst_15 : f32 to vector<8x32x512xf32>
    %27 = arith.maximumf %25, %26 : vector<8x32x512xf32>
    %28 = vector.shape_cast %27 : vector<8x32x512xf32> to vector<256x512xf32>
    %29 = arith.truncf %28 : vector<256x512xf32> to vector<256x512xbf16>
    %c0_16 = arith.constant 0 : index
    %c0_17 = arith.constant 0 : index
    %30 = vector.load %arg7[%c0_16, %c0_17] : memref<512x128xbf16, #tpu.memory_space<vmem>>, vector<512x128xbf16>
    %cst_18 = arith.constant dense<0.000000e+00> : vector<256x128xf32>
    %31 = tpu.matmul %29, %30, %cst_18 {dimension_numbers = #tpu.dot_dimension_numbers<[1], [0], [0], [1], [0, 0, 1, 1], [], []>} : vector<256x512xbf16>, vector<512x128xbf16>, vector<256x128xf32> -> vector<256x128xf32>
    %32 = vector.shape_cast %31 : vector<256x128xf32> to vector<8x32x128xf32>
    %cst_19 = arith.constant dense<0xFF800000> : vector<8x128xf32>
    %33 = vector.multi_reduction <maximumf>, %32, %cst_19 [1] : vector<8x32x128xf32> to vector<8x128xf32>
    %c0_20 = arith.constant 0 : index
    %c0_21 = arith.constant 0 : index
    %34 = vector.load %arg8[%c0_20, %c0_21] : memref<1x128xf32, #tpu.memory_space<vmem>>, vector<1x128xf32>
    %35 = vector.broadcast %34 : vector<1x128xf32> to vector<8x128xf32>
    %36 = arith.addf %33, %35 : vector<8x128xf32>
    %c8_i32 = arith.constant 8 : i32
    %37 = arith.muli %c0_i32, %c8_i32 : i32
    %38 = tpu.assume_multiple %37, 8 : i32
    %39 = arith.index_cast %38 : i32 to index
    %c0_22 = arith.constant 0 : index
    %40 = vector.load %arg9[%39, %c0_22] : memref<8x128xf32, #tpu.memory_space<vmem>>, vector<8x128xf32>
    tpu.vector_store %arg9[%39, %c0_22], %36 {strides = array<i32>} : memref<8x128xf32, #tpu.memory_space<vmem>>, vector<8x128xf32>,
    %c1_i32 = arith.constant 1 : i32
    return
  }
  func.func @transform_0(%arg0: i32) -> (i32, i32) {
    %c0_i32 = arith.constant 0 : i32
    %c0_i32_0 = arith.constant 0 : i32
    return %arg0, %c0_i32 : i32, i32
  }
  func.func @transform_1(%arg0: i32) -> (i32, i32) {
    %c0_i32 = arith.constant 0 : i32
    %c0_i32_0 = arith.constant 0 : i32
    %c0_i32_1 = arith.constant 0 : i32
    return %c0_i32, %c0_i32_0 : i32, i32
  }
  func.func @transform_2(%arg0: i32) -> (i32, i32) {
    %c0_i32 = arith.constant 0 : i32
    %c0_i32_0 = arith.constant 0 : i32
    %c0_i32_1 = arith.constant 0 : i32
    return %c0_i32, %c0_i32_0 : i32, i32
  }
  func.func @transform_3(%arg0: i32) -> (i32, i32) {
    %c0_i32 = arith.constant 0 : i32
    %c0_i32_0 = arith.constant 0 : i32
    %c0_i32_1 = arith.constant 0 : i32
    return %c0_i32, %c0_i32_0 : i32, i32
  }
  func.func @transform_4(%arg0: i32) -> (i32, i32) {
    %c0_i32 = arith.constant 0 : i32
    %c0_i32_0 = arith.constant 0 : i32
    %c0_i32_1 = arith.constant 0 : i32
    return %c0_i32, %c0_i32_0 : i32, i32
  }
  func.func @transform_5(%arg0: i32) -> (i32, i32) {
    %c0_i32 = arith.constant 0 : i32
    %c0_i32_0 = arith.constant 0 : i32
    %c0_i32_1 = arith.constant 0 : i32
    return %c0_i32, %c0_i32_0 : i32, i32
  }
  func.func @transform_6(%arg0: i32) -> (i32, i32) {
    %c0_i32 = arith.constant 0 : i32
    %c0_i32_0 = arith.constant 0 : i32
    %c0_i32_1 = arith.constant 0 : i32
    return %c0_i32, %c0_i32_0 : i32, i32
  }
  func.func @transform_7(%arg0: i32) -> (i32, i32) {
    %c0_i32 = arith.constant 0 : i32
    %c0_i32_0 = arith.constant 0 : i32
    %c0_i32_1 = arith.constant 0 : i32
    return %c0_i32, %c0_i32_0 : i32, i32
  }
  func.func @transform_8(%arg0: i32) -> (i32, i32) {
    %c0_i32 = arith.constant 0 : i32
    %c0_i32_0 = arith.constant 0 : i32
    return %arg0, %c0_i32 : i32, i32
  }
}

</mosaic_0001>

<llo_original>
// kernel: tpu_custom_call.1
$region0: #{tpu_custom_call.1}
  #allocation0 [shape = 'u32[]', space=smem, size = 0x4, offset = 0x4, fixed_abs, tag = 'smem constant byte address 0x4 - core index']
  #allocation1 [shape = 'u32[144,128]{1,0:T(1,128)}', space=vmem, size = 0x12000, scoped, tag = 'internal scratch']
  %s0 = inlined_call_operand.vmem [shape: f32[256,8], index: 0, kind: input, shape index: {}]
  %s1 = inlined_call_operand.vmem [shape: f32[8,128], index: 1, kind: input, shape index: {}]
  %s2 = inlined_call_operand.hbm [shape: bf16[128,256], index: 2, kind: input, shape index: {}]
  %s3 = inlined_call_operand.hbm [shape: bf16[256,512], index: 3, kind: input, shape index: {}]
  %s4 = inlined_call_operand.hbm [shape: bf16[256,512], index: 4, kind: input, shape index: {}]
  %s5 = inlined_call_operand.vmem [shape: f32[1,512], index: 5, kind: input, shape index: {}]
  %s6 = inlined_call_operand.vmem [shape: bf16[512,128], index: 6, kind: input, shape index: {}]
  %s7 = inlined_call_operand.vmem [shape: f32[1,128], index: 7, kind: input, shape index: {}]
  %s8 = inlined_call_operand.hbm [shape: f32[8,128], index: 8, kind: output, shape index: {}]
  %s9 = sld [smem:[#allocation0]]
  $region54: #{tpu_custom_call.1} parent=0
    _
  %s11 = ssub.s32 1, %s9
  %s12 = scalar_select 0, %s11, %s9
  $region1: #{tpu_custom_call.1} parent=0
    #allocation2 [shape = 'u8[65536]{0}', space=vmem, size = 0x10000, scoped, tag = 'input window, operand 2, single buffered']
    #allocation3 [shape = 's32[1]{0}', space=sflag, size = 0x4, scoped, tag = 'scoped memory for tpu_custom_call.1']
    #allocation4 [shape = 's32[1]{0}', space=sflag, size = 0x4, scoped, tag = 'scoped memory for tpu_custom_call.1']
    #allocation5 [shape = 'u8[262144]{0}', space=vmem, size = 0x40000, scoped, tag = 'input window, operand 3, single buffered']
    #allocation6 [shape = 's32[1]{0}', space=sflag, size = 0x4, scoped, tag = 'scoped memory for tpu_custom_call.1']
    #allocation7 [shape = 'u8[262144]{0}', space=vmem, size = 0x40000, scoped, tag = 'input window, operand 4, single buffered']
    #allocation8 [shape = 'u8[4096]{0}', space=vmem, size = 0x1000, scoped, tag = 'output window, operand 0, single buffered']
    %13 = vsyncpa [#allocation3], 0
    %14 = vsyncpa [#allocation6], 0
    %15 = vsyncpa [#allocation4], 0
    // Predicated region
    $region2: #{tpu_custom_call.1} parent=1 // pred_check
      _
    $region3: #{tpu_custom_call.1} parent=1 // pred_check_branch
      %17 = sbr.rel (0) target = $region5
    $region4: #{tpu_custom_call.1} parent=1 // pred_region
      _
    $region5: #{tpu_custom_call.1} parent=1 // pred_fallthru
      _
    // Predicated region
    $region6: #{tpu_custom_call.1} parent=1 // pred_check
      _
    $region7: #{tpu_custom_call.1} parent=1 // pred_check_branch
      %19 = sbr.rel (0) target = $region9
    $region8: #{tpu_custom_call.1} parent=1 // pred_region
      _
    $region9: #{tpu_custom_call.1} parent=1 // pred_fallthru
      _
    // Predicated region
    $region10: #{tpu_custom_call.1} parent=1 // pred_check
      _
    $region11: #{tpu_custom_call.1} parent=1 // pred_check_branch
      %21 = sbr.rel (0) target = $region13
    $region12: #{tpu_custom_call.1} parent=1 // pred_region
      %s23 = ssub.s32 2048, 2048
      %24 = vsyncadd [#allocation3], %s23
      %s25 = sshll.u32 [#allocation2], 4
      %s26 = int_to_ptr.vmem [resolvable:$true] %s25
      %31 = dma.hbm_to_vmem [thread:$0]  %s2, 2048, %s26, [#allocation3], 128, 128, 8
    $region13: #{tpu_custom_call.1} parent=1 // pred_fallthru
      _
    // Predicated region
    $region14: #{tpu_custom_call.1} parent=1 // pred_check
      _
    $region15: #{tpu_custom_call.1} parent=1 // pred_check_branch
      %33 = sbr.rel (0) target = $region17
    $region16: #{tpu_custom_call.1} parent=1 // pred_region
      %s35 = ssub.s32 8192, 8192
      %36 = vsyncadd [#allocation6], %s35
      %s37 = sshll.u32 [#allocation5], 4
      %s38 = int_to_ptr.vmem [resolvable:$true] %s37
      %43 = dma.hbm_to_vmem [thread:$0]  %s3, 8192, %s38, [#allocation6], 256, 256, 16
    $region17: #{tpu_custom_call.1} parent=1 // pred_fallthru
      _
    // Predicated region
    $region18: #{tpu_custom_call.1} parent=1 // pred_check
      _
    $region19: #{tpu_custom_call.1} parent=1 // pred_check_branch
      %45 = sbr.rel (0) target = $region21
    $region20: #{tpu_custom_call.1} parent=1 // pred_region
      %s47 = ssub.s32 8192, 8192
      %48 = vsyncadd [#allocation6], %s47
      %s49 = sshll.u32 [#allocation7], 4
      %s50 = int_to_ptr.vmem [resolvable:$true] %s49
      %55 = dma.hbm_to_vmem [thread:$0]  %s4, 8192, %s50, [#allocation6], 256, 256, 16
    $region21: #{tpu_custom_call.1} parent=1 // pred_fallthru
      _
    // Predicated region
    $region22: #{tpu_custom_call.1} parent=1 // pred_check
      _
    $region23: #{tpu_custom_call.1} parent=1 // pred_check_branch
      %57 = sbr.rel (0) target = $region25
    $region24: #{tpu_custom_call.1} parent=1 // pred_region
      _
    $region25: #{tpu_custom_call.1} parent=1 // pred_fallthru
      _
    // Predicated region
    $region26: #{tpu_custom_call.1} parent=1 // pred_check
      _
    $region27: #{tpu_custom_call.1} parent=1 // pred_check_branch
      %59 = sbr.rel (0) target = $region29
    $region28: #{tpu_custom_call.1} parent=1 // pred_region
      _
    $region29: #{tpu_custom_call.1} parent=1 // pred_fallthru
      _
    // Predicated region
    $region30: #{tpu_custom_call.1} parent=1 // pred_check
      _
    $region31: #{tpu_custom_call.1} parent=1 // pred_check_branch
      %61 = sbr.rel (0) target = $region33
    $region32: #{tpu_custom_call.1} parent=1 // pred_region
      _
    $region33: #{tpu_custom_call.1} parent=1 // pred_fallthru
      _
    // Predicated region
    $region34: #{tpu_custom_call.1} parent=1 // pred_check
      _
    $region35: #{tpu_custom_call.1} parent=1 // pred_check_branch
      %63 = sbr.rel (0) target = $region37
    $region36: #{tpu_custom_call.1} parent=1 // pred_region
      %64 = dma.done [#allocation3], 2048
    $region37: #{tpu_custom_call.1} parent=1 // pred_fallthru
      _
    // Predicated region
    $region38: #{tpu_custom_call.1} parent=1 // pred_check
      _
    $region39: #{tpu_custom_call.1} parent=1 // pred_check_branch
      %66 = sbr.rel (0) target = $region41
    $region40: #{tpu_custom_call.1} parent=1 // pred_region
      %67 = dma.done [#allocation6], 8192
    $region41: #{tpu_custom_call.1} parent=1 // pred_fallthru
      _
    // Predicated region
    $region42: #{tpu_custom_call.1} parent=1 // pred_check
      _
    $region43: #{tpu_custom_call.1} parent=1 // pred_check_branch
      %69 = sbr.rel (0) target = $region45
    $region44: #{tpu_custom_call.1} parent=1 // pred_region
      %70 = dma.done [#allocation6], 8192
    $region45: #{tpu_custom_call.1} parent=1 // pred_fallthru
      _
    %v72 = vld [vmem:[%s0] sm:$0xff]
    %v73 = vld [vmem:[%s0 + $0x8] sm:$0xff]
    %v74 = vld [vmem:[%s0 + $0x10] sm:$0xff]
    %v75 = vld [vmem:[%s0 + $0x18] sm:$0xff]
    %v76 = vld [vmem:[%s0 + $0x20] sm:$0xff]
    %v77 = vld [vmem:[%s0 + $0x28] sm:$0xff]
    %v78 = vld [vmem:[%s0 + $0x30] sm:$0xff]
    %v79 = vld [vmem:[%s0 + $0x38] sm:$0xff]
    %v80 = vld [vmem:[%s0 + $0x40] sm:$0xff]
    %v81 = vld [vmem:[%s0 + $0x48] sm:$0xff]
    %v82 = vld [vmem:[%s0 + $0x50] sm:$0xff]
    %v83 = vld [vmem:[%s0 + $0x58] sm:$0xff]
    %v84 = vld [vmem:[%s0 + $0x60] sm:$0xff]
    %v85 = vld [vmem:[%s0 + $0x68] sm:$0xff]
    %v86 = vld [vmem:[%s0 + $0x70] sm:$0xff]
    %v87 = vld [vmem:[%s0 + $0x78] sm:$0xff]
    %v88 = vld [vmem:[%s0 + $0x80] sm:$0xff]
    %v89 = vld [vmem:[%s0 + $0x88] sm:$0xff]
    %v90 = vld [vmem:[%s0 + $0x90] sm:$0xff]
    %v91 = vld [vmem:[%s0 + $0x98] sm:$0xff]
    %v92 = vld [vmem:[%s0 + $0xa0] sm:$0xff]
    %v93 = vld [vmem:[%s0 + $0xa8] sm:$0xff]
    %v94 = vld [vmem:[%s0 + $0xb0] sm:$0xff]
    %v95 = vld [vmem:[%s0 + $0xb8] sm:$0xff]
    %v96 = vld [vmem:[%s0 + $0xc0] sm:$0xff]
    %v97 = vld [vmem:[%s0 + $0xc8] sm:$0xff]
    %v98 = vld [vmem:[%s0 + $0xd0] sm:$0xff]
    %v99 = vld [vmem:[%s0 + $0xd8] sm:$0xff]
    %v100 = vld [vmem:[%s0 + $0xe0] sm:$0xff]
    %v101 = vld [vmem:[%s0 + $0xe8] sm:$0xff]
    %v102 = vld [vmem:[%s0 + $0xf0] sm:$0xff]
    %v103 = vld [vmem:[%s0 + $0xf8] sm:$0xff]
    %v104 = vld [vmem:[%s1] sm:$0xff]
    %vm105 = vcmask 64512
    %v107 = vsel %vm105, %v72, 0
    %v110 = vsel %vm105, %v73, 0
    %v113 = vsel %vm105, %v74, 0
    %v116 = vsel %vm105, %v75, 0
    %v119 = vsel %vm105, %v76, 0
    %v122 = vsel %vm105, %v77, 0
    %v125 = vsel %vm105, %v78, 0
    %v128 = vsel %vm105, %v79, 0
    %v131 = vsel %vm105, %v80, 0
    %v134 = vsel %vm105, %v81, 0
    %v137 = vsel %vm105, %v82, 0
    %v140 = vsel %vm105, %v83, 0
    %v143 = vsel %vm105, %v84, 0
    %v146 = vsel %vm105, %v85, 0
    %v149 = vsel %vm105, %v86, 0
    %v152 = vsel %vm105, %v87, 0
    %v155 = vsel %vm105, %v88, 0
    %v158 = vsel %vm105, %v89, 0
    %v161 = vsel %vm105, %v90, 0
    %v164 = vsel %vm105, %v91, 0
    %v167 = vsel %vm105, %v92, 0
    %v170 = vsel %vm105, %v93, 0
    %v173 = vsel %vm105, %v94, 0
    %v176 = vsel %vm105, %v95, 0
    %v179 = vsel %vm105, %v96, 0
    %v182 = vsel %vm105, %v97, 0
    %v185 = vsel %vm105, %v98, 0
    %v188 = vsel %vm105, %v99, 0
    %v191 = vsel %vm105, %v100, 0
    %v194 = vsel %vm105, %v101, 0
    %v197 = vsel %vm105, %v102, 0
    %v200 = vsel %vm105, %v103, 0
    %202 = vmatprep.subr.mxu0 0.0
    %203 = vmatpush1.msra.mxu0 0.0
    %204 = vmatprep.subr.mxu0 0.0
    %205 = vmatpush1.msra.mxu0 0.0
    %206 = vmatprep.subr.mxu0 0.0
    %207 = vmatpush1.msra.mxu0 0.0
    %208 = vmatprep.subr.mxu0 0.0
    %209 = vmatpush1.msra.mxu0 0.0
    %210 = vmatprep.subr.mxu0 0.0
    %211 = vmatpush1.msra.mxu0 0.0
    %212 = vmatprep.subr.mxu0 0.0
    %213 = vmatpush1.msra.mxu0 0.0
    %214 = vmatprep.subr.mxu0 0.0
    %215 = vmatpush1.msra.mxu0 0.0
    %216 = vmatprep.subr.mxu0 0.0
    %217 = vmatpush1.msra.mxu0 0.0
    %218 = vmatprep.subr.mxu0 0.0
    %219 = vmatpush1.msra.mxu0 0.0
    %220 = vmatprep.subr.mxu0 0.0
    %221 = vmatpush1.msra.mxu0 0.0
    %222 = vmatprep.subr.mxu0 0.0
    %223 = vmatpush1.msra.mxu0 0.0
    %224 = vmatprep.subr.mxu0 0.0
    %225 = vmatpush1.msra.mxu0 0.0
    %226 = vmatprep.subr.mxu0 0.0
    %227 = vmatpush1.msra.mxu0 0.0
    %228 = vmatprep.subr.mxu0 0.0
    %229 = vmatpush1.msra.mxu0 0.0
    %230 = vmatprep.subr.mxu0 0.0
    %231 = vmatpush1.msra.mxu0 0.0
    %232 = vmatprep.subr.mxu0 0.0
    %233 = vmatpush1.msra.mxu0 %v104
    %234 = vmatprep.subr.mxu0 0.0
    %235 = vmatpush2.msra.mxu0 0.0
    %236 = vmatprep.subr.mxu0 0.0
    %237 = vmatpush2.msra.mxu0 0.0
    %238 = vmatprep.subr.mxu0 0.0
    %239 = vmatpush2.msra.mxu0 0.0
    %240 = vmatprep.subr.mxu0 0.0
    %241 = vmatpush2.msra.mxu0 0.0
    %242 = vmatprep.subr.mxu0 0.0
    %243 = vmatpush2.msra.mxu0 0.0
    %244 = vmatprep.subr.mxu0 0.0
    %245 = vmatpush2.msra.mxu0 0.0
    %246 = vmatprep.subr.mxu0 0.0
    %247 = vmatpush2.msra.mxu0 0.0
    %248 = vmatprep.subr.mxu0 0.0
    %249 = vmatpush2.msra.mxu0 0.0
    %250 = vmatprep.subr.mxu0 0.0
    %251 = vmatpush2.msra.mxu0 0.0
    %252 = vmatprep.subr.mxu0 0.0
    %253 = vmatpush2.msra.mxu0 0.0
    %254 = vmatprep.subr.mxu0 0.0
    %255 = vmatpush2.msra.mxu0 0.0
    %256 = vmatprep.subr.mxu0 0.0
    %257 = vmatpush2.msra.mxu0 0.0
    %258 = vmatprep.subr.mxu0 0.0
    %259 = vmatpush2.msra.mxu0 0.0
    %260 = vmatprep.subr.mxu0 0.0
    %261 = vmatpush2.msra.mxu0 0.0
    %262 = vmatprep.subr.mxu0 0.0
    %263 = vmatpush2.msra.mxu0 0.0
    %264 = vmatprep.subr.mxu0 0.0
    %265 = vmatpush2.msra.mxu0 0.0
    %266 = vmatprep.mubr.f32.mxu0 0.0
    %267 = vmatmul.mubr.f32.gmra.mxu0 %v107
    %v268 = vpop.f32.mrf.mxu0
    %v269 = vadd.f32 0.0, %v268
    %v270 = vpop.f32.mrf.mxu0
    %271 = vmatprep.mubr.f32.mxu0 0.0
    %272 = vmatmul.mubr.f32.gmra.mxu0 %v110
    %v273 = vpop.f32.mrf.mxu0
    %v274 = vadd.f32 0.0, %v273
    %v275 = vpop.f32.mrf.mxu0
    %276 = vmatprep.mubr.f32.mxu0 0.0
    %277 = vmatmul.mubr.f32.gmra.mxu0 %v113
    %v278 = vpop.f32.mrf.mxu0
    %v279 = vadd.f32 0.0, %v278
    %v280 = vpop.f32.mrf.mxu0
    %281 = vmatprep.mubr.f32.mxu0 0.0
    %282 = vmatmul.mubr.f32.gmra.mxu0 %v116
    %v283 = vpop.f32.mrf.mxu0
    %v284 = vadd.f32 0.0, %v283
    %v285 = vpop.f32.mrf.mxu0
    %286 = vmatprep.mubr.f32.mxu0 0.0
    %287 = vmatmul.mubr.f32.gmra.mxu0 %v119
    %v288 = vpop.f32.mrf.mxu0
    %v289 = vadd.f32 0.0, %v288
    %v290 = vpop.f32.mrf.mxu0
    %291 = vmatprep.mubr.f32.mxu0 0.0
    %292 = vmatmul.mubr.f32.gmra.mxu0 %v122
    %v293 = vpop.f32.mrf.mxu0
    %v294 = vadd.f32 0.0, %v293
    %v295 = vpop.f32.mrf.mxu0
    %296 = vmatprep.mubr.f32.mxu0 0.0
    %297 = vmatmul.mubr.f32.gmra.mxu0 %v125
    %v298 = vpop.f32.mrf.mxu0
    %v299 = vadd.f32 0.0, %v298
    %v300 = vpop.f32.mrf.mxu0
    %301 = vmatprep.mubr.f32.mxu0 0.0
    %302 = vmatmul.mubr.f32.gmra.mxu0 %v128
    %v303 = vpop.f32.mrf.mxu0
    %v304 = vadd.f32 0.0, %v303
    %v305 = vpop.f32.mrf.mxu0
    %306 = vmatprep.mubr.f32.mxu0 0.0
    %307 = vmatmul.mubr.f32.gmra.mxu0 %v131
    %v308 = vpop.f32.mrf.mxu0
    %v309 = vadd.f32 0.0, %v308
    %v310 = vpop.f32.mrf.mxu0
    %311 = vmatprep.mubr.f32.mxu0 0.0
    %312 = vmatmul.mubr.f32.gmra.mxu0 %v134
    %v313 = vpop.f32.mrf.mxu0
    %v314 = vadd.f32 0.0, %v313
    %v315 = vpop.f32.mrf.mxu0
    %316 = vmatprep.mubr.f32.mxu0 0.0
    %317 = vmatmul.mubr.f32.gmra.mxu0 %v137
    %v318 = vpop.f32.mrf.mxu0
    %v319 = vadd.f32 0.0, %v318
    %v320 = vpop.f32.mrf.mxu0
    %321 = vmatprep.mubr.f32.mxu0 0.0
    %322 = vmatmul.mubr.f32.gmra.mxu0 %v140
    %v323 = vpop.f32.mrf.mxu0
    %v324 = vadd.f32 0.0, %v323
    %v325 = vpop.f32.mrf.mxu0
    %326 = vmatprep.mubr.f32.mxu0 0.0
    %327 = vmatmul.mubr.f32.gmra.mxu0 %v143
    %v328 = vpop.f32.mrf.mxu0
    %v329 = vadd.f32 0.0, %v328
    %v330 = vpop.f32.mrf.mxu0
    %331 = vmatprep.mubr.f32.mxu0 0.0
    %332 = vmatmul.mubr.f32.gmra.mxu0 %v146
    %v333 = vpop.f32.mrf.mxu0
    %v334 = vadd.f32 0.0, %v333
    %v335 = vpop.f32.mrf.mxu0
    %336 = vmatprep.mubr.f32.mxu0 0.0
    %337 = vmatmul.mubr.f32.gmra.mxu0 %v149
    %v338 = vpop.f32.mrf.mxu0
    %v339 = vadd.f32 0.0, %v338
    %v340 = vpop.f32.mrf.mxu0
    %341 = vmatprep.mubr.f32.mxu0 0.0
    %342 = vmatmul.mubr.f32.gmra.mxu0 %v152
    %v343 = vpop.f32.mrf.mxu0
    %v344 = vadd.f32 0.0, %v343
    %v345 = vpop.f32.mrf.mxu0
    %346 = vmatprep.mubr.f32.mxu0 0.0
    %347 = vmatmul.mubr.f32.gmra.mxu0 %v155
    %v348 = vpop.f32.mrf.mxu0
    %v349 = vadd.f32 0.0, %v348
    %v350 = vpop.f32.mrf.mxu0
    %351 = vmatprep.mubr.f32.mxu0 0.0
    %352 = vmatmul.mubr.f32.gmra.mxu0 %v158
    %v353 = vpop.f32.mrf.mxu0
    %v354 = vadd.f32 0.0, %v353
    %v355 = vpop.f32.mrf.mxu0
    %356 = vmatprep.mubr.f32.mxu0 0.0
    %357 = vmatmul.mubr.f32.gmra.mxu0 %v161
    %v358 = vpop.f32.mrf.mxu0
    %v359 = vadd.f32 0.0, %v358
    %v360 = vpop.f32.mrf.mxu0
    %361 = vmatprep.mubr.f32.mxu0 0.0
    %362 = vmatmul.mubr.f32.gmra.mxu0 %v164
    %v363 = vpop.f32.mrf.mxu0
    %v364 = vadd.f32 0.0, %v363
    %v365 = vpop.f32.mrf.mxu0
    %366 = vmatprep.mubr.f32.mxu0 0.0
    %367 = vmatmul.mubr.f32.gmra.mxu0 %v167
    %v368 = vpop.f32.mrf.mxu0
    %v369 = vadd.f32 0.0, %v368
    %v370 = vpop.f32.mrf.mxu0
    %371 = vmatprep.mubr.f32.mxu0 0.0
    %372 = vmatmul.mubr.f32.gmra.mxu0 %v170
    %v373 = vpop.f32.mrf.mxu0
    %v374 = vadd.f32 0.0, %v373
    %v375 = vpop.f32.mrf.mxu0
    %376 = vmatprep.mubr.f32.mxu0 0.0
    %377 = vmatmul.mubr.f32.gmra.mxu0 %v173
    %v378 = vpop.f32.mrf.mxu0
    %v379 = vadd.f32 0.0, %v378
    %v380 = vpop.f32.mrf.mxu0
    %381 = vmatprep.mubr.f32.mxu0 0.0
    %382 = vmatmul.mubr.f32.gmra.mxu0 %v176
    %v383 = vpop.f32.mrf.mxu0
    %v384 = vadd.f32 0.0, %v383
    %v385 = vpop.f32.mrf.mxu0
    %386 = vmatprep.mubr.f32.mxu0 0.0
    %387 = vmatmul.mubr.f32.gmra.mxu0 %v179
    %v388 = vpop.f32.mrf.mxu0
    %v389 = vadd.f32 0.0, %v388
    %v390 = vpop.f32.mrf.mxu0
    %391 = vmatprep.mubr.f32.mxu0 0.0
    %392 = vmatmul.mubr.f32.gmra.mxu0 %v182
    %v393 = vpop.f32.mrf.mxu0
    %v394 = vadd.f32 0.0, %v393
    %v395 = vpop.f32.mrf.mxu0
    %396 = vmatprep.mubr.f32.mxu0 0.0
    %397 = vmatmul.mubr.f32.gmra.mxu0 %v185
    %v398 = vpop.f32.mrf.mxu0
    %v399 = vadd.f32 0.0, %v398
    %v400 = vpop.f32.mrf.mxu0
    %401 = vmatprep.mubr.f32.mxu0 0.0
    %402 = vmatmul.mubr.f32.gmra.mxu0 %v188
    %v403 = vpop.f32.mrf.mxu0
    %v404 = vadd.f32 0.0, %v403
    %v405 = vpop.f32.mrf.mxu0
    %406 = vmatprep.mubr.f32.mxu0 0.0
    %407 = vmatmul.mubr.f32.gmra.mxu0 %v191
    %v408 = vpop.f32.mrf.mxu0
    %v409 = vadd.f32 0.0, %v408
    %v410 = vpop.f32.mrf.mxu0
    %411 = vmatprep.mubr.f32.mxu0 0.0
    %412 = vmatmul.mubr.f32.gmra.mxu0 %v194
    %v413 = vpop.f32.mrf.mxu0
    %v414 = vadd.f32 0.0, %v413
    %v415 = vpop.f32.mrf.mxu0
    %416 = vmatprep.mubr.f32.mxu0 0.0
    %417 = vmatmul.mubr.f32.gmra.mxu0 %v197
    %v418 = vpop.f32.mrf.mxu0
    %v419 = vadd.f32 0.0, %v418
    %v420 = vpop.f32.mrf.mxu0
    %421 = vmatprep.mubr.f32.mxu0 0.0
    %422 = vmatmul.mubr.f32.gmra.mxu0 %v200
    %v423 = vpop.f32.mrf.mxu0
    %v424 = vadd.f32 0.0, %v423
    %v425 = vpop.f32.mrf.mxu0
    %426 = vdwg.mxu0
    %v427 = vmax.f32 %v269, 0.0
    %v428 = vmax.f32 %v274, 0.0
    %v429 = vmax.f32 %v279, 0.0
    %v430 = vmax.f32 %v284, 0.0
    %v431 = vmax.f32 %v289, 0.0
    %v432 = vmax.f32 %v294, 0.0
    %v433 = vmax.f32 %v299, 0.0
    %v434 = vmax.f32 %v304, 0.0
    %v435 = vmax.f32 %v309, 0.0
    %v436 = vmax.f32 %v314, 0.0
    %v437 = vmax.f32 %v319, 0.0
    %v438 = vmax.f32 %v324, 0.0
    %v439 = vmax.f32 %v329, 0.0
    %v440 = vmax.f32 %v334, 0.0
    %v441 = vmax.f32 %v339, 0.0
    %v442 = vmax.f32 %v344, 0.0
    %v443 = vmax.f32 %v349, 0.0
    %v444 = vmax.f32 %v354, 0.0
    %v445 = vmax.f32 %v359, 0.0
    %v446 = vmax.f32 %v364, 0.0
    %v447 = vmax.f32 %v369, 0.0
    %v448 = vmax.f32 %v374, 0.0
    %v449 = vmax.f32 %v379, 0.0
    %v450 = vmax.f32 %v384, 0.0
    %v451 = vmax.f32 %v389, 0.0
    %v452 = vmax.f32 %v394, 0.0
    %v453 = vmax.f32 %v399, 0.0
    %v454 = vmax.f32 %v404, 0.0
    %v455 = vmax.f32 %v409, 0.0
    %v456 = vmax.f32 %v414, 0.0
    %v457 = vmax.f32 %v419, 0.0
    %v458 = vmax.f32 %v424, 0.0
    %v459 = vpack.c.bf16 %v428, %v427
    %v460 = vpack.c.bf16 %v430, %v429
    %v461 = vpack.c.bf16 %v432, %v431
    %v462 = vpack.c.bf16 %v434, %v433
    %v463 = vpack.c.bf16 %v436, %v435
    %v464 = vpack.c.bf16 %v438, %v437
    %v465 = vpack.c.bf16 %v440, %v439
    %v466 = vpack.c.bf16 %v442, %v441
    %v467 = vpack.c.bf16 %v444, %v443
    %v468 = vpack.c.bf16 %v446, %v445
    %v469 = vpack.c.bf16 %v448, %v447
    %v470 = vpack.c.bf16 %v450, %v449
    %v471 = vpack.c.bf16 %v452, %v451
    %v472 = vpack.c.bf16 %v454, %v453
    %v473 = vpack.c.bf16 %v456, %v455
    %v474 = vpack.c.bf16 %v458, %v457
    %v475 = vld [vmem:[#allocation2] sm:$0xff]
    %v476 = vld [vmem:[#allocation2 + $0x8] sm:$0xff]
    %v477 = vld [vmem:[#allocation2 + $0x10] sm:$0xff]
    %v478 = vld [vmem:[#allocation2 + $0x18] sm:$0xff]
    %v479 = vld [vmem:[#allocation2 + $0x20] sm:$0xff]
    %v480 = vld [vmem:[#allocation2 + $0x28] sm:$0xff]
    %v481 = vld [vmem:[#allocation2 + $0x30] sm:$0xff]
    %v482 = vld [vmem:[#allocation2 + $0x38] sm:$0xff]
    %v483 = vld [vmem:[#allocation2 + $0x40] sm:$0xff]
    %v484 = vld [vmem:[#allocation2 + $0x48] sm:$0xff]
    %v485 = vld [vmem:[#allocation2 + $0x50] sm:$0xff]
    %v486 = vld [vmem:[#allocation2 + $0x58] sm:$0xff]
    %v487 = vld [vmem:[#allocation2 + $0x60] sm:$0xff]
    %v488 = vld [vmem:[#allocation2 + $0x68] sm:$0xff]
    %v489 = vld [vmem:[#allocation2 + $0x70] sm:$0xff]
    %v490 = vld [vmem:[#allocation2 + $0x78] sm:$0xff]
    %v507 = vunpack.c.l.b16 %v475
    %v508 = vunpack.c.h.b16 %v475
    %v509 = vunpack.c.l.b16 %v476
    %v510 = vunpack.c.h.b16 %v476
    %v511 = vunpack.c.l.b16 %v477
    %v512 = vunpack.c.h.b16 %v477
    %v513 = vunpack.c.l.b16 %v478
    %v514 = vunpack.c.h.b16 %v478
    %v515 = vunpack.c.l.b16 %v479
    %v516 = vunpack.c.h.b16 %v479
    %v517 = vunpack.c.l.b16 %v480
    %v518 = vunpack.c.h.b16 %v480
    %v519 = vunpack.c.l.b16 %v481
    %v520 = vunpack.c.h.b16 %v481
    %v521 = vunpack.c.l.b16 %v482
    %v522 = vunpack.c.h.b16 %v482
    %v523 = vunpack.c.l.b16 %v483
    %v524 = vunpack.c.h.b16 %v483
    %v525 = vunpack.c.l.b16 %v484
    %v526 = vunpack.c.h.b16 %v484
    %v527 = vunpack.c.l.b16 %v485
    %v528 = vunpack.c.h.b16 %v485
    %v529 = vunpack.c.l.b16 %v486
    %v530 = vunpack.c.h.b16 %v486
    %v531 = vunpack.c.l.b16 %v487
    %v532 = vunpack.c.h.b16 %v487
    %v533 = vunpack.c.l.b16 %v488
    %v534 = vunpack.c.h.b16 %v488
    %v535 = vunpack.c.l.b16 %v489
    %v536 = vunpack.c.h.b16 %v489
    %v537 = vunpack.c.l.b16 %v490
    %v538 = vunpack.c.h.b16 %v490
    %v539 = vpack.c.b16 %v509, %v507
    %v540 = vpack.c.b16 %v510, %v508
    %v541 = vpack.c.b16 %v513, %v511
    %v542 = vpack.c.b16 %v514, %v512
    %v543 = vpack.c.b16 %v517, %v515
    %v544 = vpack.c.b16 %v518, %v516
    %v545 = vpack.c.b16 %v521, %v519
    %v546 = vpack.c.b16 %v522, %v520
    %v547 = vpack.c.b16 %v525, %v523
    %v548 = vpack.c.b16 %v526, %v524
    %v549 = vpack.c.b16 %v529, %v527
    %v550 = vpack.c.b16 %v530, %v528
    %v551 = vpack.c.b16 %v533, %v531
    %v552 = vpack.c.b16 %v534, %v532
    %v553 = vpack.c.b16 %v537, %v535
    %v554 = vpack.c.b16 %v538, %v536
    %571 = vmatprep.subr.bf16.mxu0 %v554
    %572 = vmatpush1.bf16.msra.mxu0 %v553
    %573 = vmatprep.subr.bf16.mxu0 %v552
    %574 = vmatpush1.bf16.msra.mxu0 %v551
    %575 = vmatprep.subr.bf16.mxu0 %v550
    %576 = vmatpush1.bf16.msra.mxu0 %v549
    %577 = vmatprep.subr.bf16.mxu0 %v548
    %578 = vmatpush1.bf16.msra.mxu0 %v547
    %579 = vmatprep.subr.bf16.mxu0 %v546
    %580 = vmatpush1.bf16.msra.mxu0 %v545
    %581 = vmatprep.subr.bf16.mxu0 %v544
    %582 = vmatpush1.bf16.msra.mxu0 %v543
    %583 = vmatprep.subr.bf16.mxu0 %v542
    %584 = vmatpush1.bf16.msra.mxu0 %v541
    %585 = vmatprep.subr.bf16.mxu0 %v540
    %586 = vmatpush1.bf16.msra.mxu0 %v539
    %587 = vmatprep.subr.bf16.mxu0 0
    %588 = vmatpush2.bf16.msra.mxu0 0
    %589 = vmatprep.subr.bf16.mxu0 0
    %590 = vmatpush2.bf16.msra.mxu0 0
    %591 = vmatprep.subr.bf16.mxu0 0
    %592 = vmatpush2.bf16.msra.mxu0 0
    %593 = vmatprep.subr.bf16.mxu0 0
    %594 = vmatpush2.bf16.msra.mxu0 0
    %595 = vmatprep.subr.bf16.mxu0 0
    %596 = vmatpush2.bf16.msra.mxu0 0
    %597 = vmatprep.subr.bf16.mxu0 0
    %598 = vmatpush2.bf16.msra.mxu0 0
    %599 = vmatprep.subr.bf16.mxu0 0
    %600 = vmatpush2.bf16.msra.mxu0 0
    %601 = vmatprep.subr.bf16.mxu0 0
    %602 = vmatpush2.bf16.msra.mxu0 0
    %603 = vmatprep.mubr.bf16.mxu0 0
    %604 = vmatmul.mubr.bf16.gmra.mxu0 %v459
    %v605 = vpop.f32.mrf.mxu0
    %v606 = vadd.f32 0.0, %v605
    %v607 = vpop.f32.mrf.mxu0
    %v608 = vadd.f32 0.0, %v607
    %v609 = vpop.f32.mrf.mxu0
    %v610 = vadd.f32 0.0, %v609
    %v611 = vpop.f32.mrf.mxu0
    %v612 = vadd.f32 0.0, %v611
    %613 = vmatprep.mubr.bf16.mxu0 0
    %614 = vmatmul.mubr.bf16.gmra.mxu0 %v460
    %v615 = vpop.f32.mrf.mxu0
    %v616 = vadd.f32 0.0, %v615
    %v617 = vpop.f32.mrf.mxu0
    %v618 = vadd.f32 0.0, %v617
    %v619 = vpop.f32.mrf.mxu0
    %v620 = vadd.f32 0.0, %v619
    %v621 = vpop.f32.mrf.mxu0
    %v622 = vadd.f32 0.0, %v621
    %623 = vmatprep.mubr.bf16.mxu0 0
    %624 = vmatmul.mubr.bf16.gmra.mxu0 %v461
    %v625 = vpop.f32.mrf.mxu0
    %v626 = vadd.f32 0.0, %v625
    %v627 = vpop.f32.mrf.mxu0
    %v628 = vadd.f32 0.0, %v627
    %v629 = vpop.f32.mrf.mxu0
    %v630 = vadd.f32 0.0, %v629
    %v631 = vpop.f32.mrf.mxu0
    %v632 = vadd.f32 0.0, %v631
    %633 = vmatprep.mubr.bf16.mxu0 0
    %634 = vmatmul.mubr.bf16.gmra.mxu0 %v462
    %v635 = vpop.f32.mrf.mxu0
    %v636 = vadd.f32 0.0, %v635
    %v637 = vpop.f32.mrf.mxu0
    %v638 = vadd.f32 0.0, %v637
    %v639 = vpop.f32.mrf.mxu0
    %v640 = vadd.f32 0.0, %v639
    %v641 = vpop.f32.mrf.mxu0
    %v642 = vadd.f32 0.0, %v641
    %643 = vmatprep.mubr.bf16.mxu0 0
    %644 = vmatmul.mubr.bf16.gmra.mxu0 %v463
    %v645 = vpop.f32.mrf.mxu0
    %v646 = vadd.f32 0.0, %v645
    %v647 = vpop.f32.mrf.mxu0
    %v648 = vadd.f32 0.0, %v647
    %v649 = vpop.f32.mrf.mxu0
    %v650 = vadd.f32 0.0, %v649
    %v651 = vpop.f32.mrf.mxu0
    %v652 = vadd.f32 0.0, %v651
    %653 = vmatprep.mubr.bf16.mxu0 0
    %654 = vmatmul.mubr.bf16.gmra.mxu0 %v464
    %v655 = vpop.f32.mrf.mxu0
    %v656 = vadd.f32 0.0, %v655
    %v657 = vpop.f32.mrf.mxu0
    %v658 = vadd.f32 0.0, %v657
    %v659 = vpop.f32.mrf.mxu0
    %v660 = vadd.f32 0.0, %v659
    %v661 = vpop.f32.mrf.mxu0
    %v662 = vadd.f32 0.0, %v661
    %663 = vmatprep.mubr.bf16.mxu0 0
    %664 = vmatmul.mubr.bf16.gmra.mxu0 %v465
    %v665 = vpop.f32.mrf.mxu0
    %v666 = vadd.f32 0.0, %v665
    %v667 = vpop.f32.mrf.mxu0
    %v668 = vadd.f32 0.0, %v667
    %v669 = vpop.f32.mrf.mxu0
    %v670 = vadd.f32 0.0, %v669
    %v671 = vpop.f32.mrf.mxu0
    %v672 = vadd.f32 0.0, %v671
    %673 = vmatprep.mubr.bf16.mxu0 0
    %674 = vmatmul.mubr.bf16.gmra.mxu0 %v466
    %v675 = vpop.f32.mrf.mxu0
    %v676 = vadd.f32 0.0, %v675
    %v677 = vpop.f32.mrf.mxu0
    %v678 = vadd.f32 0.0, %v677
    %v679 = vpop.f32.mrf.mxu0
    %v680 = vadd.f32 0.0, %v679
    %v681 = vpop.f32.mrf.mxu0
    %v682 = vadd.f32 0.0, %v681
    %683 = vmatprep.mubr.bf16.mxu0 0
    %684 = vmatmul.mubr.bf16.gmra.mxu0 %v467
    %v685 = vpop.f32.mrf.mxu0
    %v686 = vadd.f32 0.0, %v685
    %v687 = vpop.f32.mrf.mxu0
    %v688 = vadd.f32 0.0, %v687
    %v689 = vpop.f32.mrf.mxu0
    %v690 = vadd.f32 0.0, %v689
    %v691 = vpop.f32.mrf.mxu0
    %v692 = vadd.f32 0.0, %v691
    %693 = vmatprep.mubr.bf16.mxu0 0
    %694 = vmatmul.mubr.bf16.gmra.mxu0 %v468
    %v695 = vpop.f32.mrf.mxu0
    %v696 = vadd.f32 0.0, %v695
    %v697 = vpop.f32.mrf.mxu0
    %v698 = vadd.f32 0.0, %v697
    %v699 = vpop.f32.mrf.mxu0
    %v700 = vadd.f32 0.0, %v699
    %v701 = vpop.f32.mrf.mxu0
    %v702 = vadd.f32 0.0, %v701
    %703 = vmatprep.mubr.bf16.mxu0 0
    %704 = vmatmul.mubr.bf16.gmra.mxu0 %v469
    %v705 = vpop.f32.mrf.mxu0
    %v706 = vadd.f32 0.0, %v705
    %v707 = vpop.f32.mrf.mxu0
    %v708 = vadd.f32 0.0, %v707
    %v709 = vpop.f32.mrf.mxu0
    %v710 = vadd.f32 0.0, %v709
    %v711 = vpop.f32.mrf.mxu0
    %v712 = vadd.f32 0.0, %v711
    %713 = vmatprep.mubr.bf16.mxu0 0
    %714 = vmatmul.mubr.bf16.gmra.mxu0 %v470
    %v715 = vpop.f32.mrf.mxu0
    %v716 = vadd.f32 0.0, %v715
    %v717 = vpop.f32.mrf.mxu0
    %v718 = vadd.f32 0.0, %v717
    %v719 = vpop.f32.mrf.mxu0
    %v720 = vadd.f32 0.0, %v719
    %v721 = vpop.f32.mrf.mxu0
    %v722 = vadd.f32 0.0, %v721
    %723 = vmatprep.mubr.bf16.mxu0 0
    %724 = vmatmul.mubr.bf16.gmra.mxu0 %v471
    %v725 = vpop.f32.mrf.mxu0
    %v726 = vadd.f32 0.0, %v725
    %v727 = vpop.f32.mrf.mxu0
    %v728 = vadd.f32 0.0, %v727
    %v729 = vpop.f32.mrf.mxu0
    %v730 = vadd.f32 0.0, %v729
    %v731 = vpop.f32.mrf.mxu0
    %v732 = vadd.f32 0.0, %v731
    %733 = vmatprep.mubr.bf16.mxu0 0
    %734 = vmatmul.mubr.bf16.gmra.mxu0 %v472
    %v735 = vpop.f32.mrf.mxu0
    %v736 = vadd.f32 0.0, %v735
    %v737 = vpop.f32.mrf.mxu0
    %v738 = vadd.f32 0.0, %v737
    %v739 = vpop.f32.mrf.mxu0
    %v740 = vadd.f32 0.0, %v739
    %v741 = vpop.f32.mrf.mxu0
    %v742 = vadd.f32 0.0, %v741
    %743 = vmatprep.mubr.bf16.mxu0 0
    %744 = vmatmul.mubr.bf16.gmra.mxu0 %v473
    %v745 = vpop.f32.mrf.mxu0
    %v746 = vadd.f32 0.0, %v745
    %v747 = vpop.f32.mrf.mxu0
    %v748 = vadd.f32 0.0, %v747
    %v749 = vpop.f32.mrf.mxu0
    %v750 = vadd.f32 0.0, %v749
    %v751 = vpop.f32.mrf.mxu0
    %v752 = vadd.f32 0.0, %v751
    %753 = vmatprep.mubr.bf16.mxu0 0
    %754 = vmatmul.mubr.bf16.gmra.mxu0 %v474
    %v755 = vpop.f32.mrf.mxu0
    %v756 = vadd.f32 0.0, %v755
    %v757 = vpop.f32.mrf.mxu0
    %v758 = vadd.f32 0.0, %v757
    %v759 = vpop.f32.mrf.mxu0
    %v760 = vadd.f32 0.0, %v759
    %v761 = vpop.f32.mrf.mxu0
    %v762 = vadd.f32 0.0, %v761
    %763 = vdwg.mxu0
    %v764 = vmax.f32 %v606, %v610
    %v765 = vmax.f32 %v764, %v616
    %v766 = vmax.f32 %v765, %v620
    %v767 = vrot.slane %v766, 4
    %v768 = vmax.f32 %v766, %v767
    %v769 = vrot.slane %v768, 2
    %v770 = vmax.f32 %v768, %v769
    %v771 = vrot.slane %v770, 1
    %v772 = vmax.f32 %v770, %v771
    %v773 = vmax.f32 %v608, %v612
    %v774 = vmax.f32 %v773, %v618
    %v775 = vmax.f32 %v774, %v622
    %v776 = vrot.slane %v775, 4
    %v777 = vmax.f32 %v775, %v776
    %v778 = vrot.slane %v777, 2
    %v779 = vmax.f32 %v777, %v778
    %v780 = vrot.slane %v779, 1
    %v781 = vmax.f32 %v779, %v780
    %v782 = vmax.f32 %v626, %v630
    %v783 = vmax.f32 %v782, %v636
    %v784 = vmax.f32 %v783, %v640
    %v785 = vrot.slane %v784, 4
    %v786 = vmax.f32 %v784, %v785
    %v787 = vrot.slane %v786, 2
    %v788 = vmax.f32 %v786, %v787
    %v789 = vrot.slane %v788, 1
    %v790 = vmax.f32 %v788, %v789
    %v791 = vmax.f32 %v628, %v632
    %v792 = vmax.f32 %v791, %v638
    %v793 = vmax.f32 %v792, %v642
    %v794 = vrot.slane %v793, 4
    %v795 = vmax.f32 %v793, %v794
    %v796 = vrot.slane %v795, 2
    %v797 = vmax.f32 %v795, %v796
    %v798 = vrot.slane %v797, 1
    %v799 = vmax.f32 %v797, %v798
    %v800 = vmax.f32 %v646, %v650
    %v801 = vmax.f32 %v800, %v656
    %v802 = vmax.f32 %v801, %v660
    %v803 = vrot.slane %v802, 4
    %v804 = vmax.f32 %v802, %v803
    %v805 = vrot.slane %v804, 2
    %v806 = vmax.f32 %v804, %v805
    %v807 = vrot.slane %v806, 1
    %v808 = vmax.f32 %v806, %v807
    %v809 = vmax.f32 %v648, %v652
    %v810 = vmax.f32 %v809, %v658
    %v811 = vmax.f32 %v810, %v662
    %v812 = vrot.slane %v811, 4
    %v813 = vmax.f32 %v811, %v812
    %v814 = vrot.slane %v813, 2
    %v815 = vmax.f32 %v813, %v814
    %v816 = vrot.slane %v815, 1
    %v817 = vmax.f32 %v815, %v816
    %v818 = vmax.f32 %v666, %v670
    %v819 = vmax.f32 %v818, %v676
    %v820 = vmax.f32 %v819, %v680
    %v821 = vrot.slane %v820, 4
    %v822 = vmax.f32 %v820, %v821
    %v823 = vrot.slane %v822, 2
    %v824 = vmax.f32 %v822, %v823
    %v825 = vrot.slane %v824, 1
    %v826 = vmax.f32 %v824, %v825
    %v827 = vmax.f32 %v668, %v672
    %v828 = vmax.f32 %v827, %v678
    %v829 = vmax.f32 %v828, %v682
    %v830 = vrot.slane %v829, 4
    %v831 = vmax.f32 %v829, %v830
    %v832 = vrot.slane %v831, 2
    %v833 = vmax.f32 %v831, %v832
    %v834 = vrot.slane %v833, 1
    %v835 = vmax.f32 %v833, %v834
    %v836 = vmax.f32 %v686, %v690
    %v837 = vmax.f32 %v836, %v696
    %v838 = vmax.f32 %v837, %v700
    %v839 = vrot.slane %v838, 4
    %v840 = vmax.f32 %v838, %v839
    %v841 = vrot.slane %v840, 2
    %v842 = vmax.f32 %v840, %v841
    %v843 = vrot.slane %v842, 1
    %v844 = vmax.f32 %v842, %v843
    %v845 = vmax.f32 %v688, %v692
    %v846 = vmax.f32 %v845, %v698
    %v847 = vmax.f32 %v846, %v702
    %v848 = vrot.slane %v847, 4
    %v849 = vmax.f32 %v847, %v848
    %v850 = vrot.slane %v849, 2
    %v851 = vmax.f32 %v849, %v850
    %v852 = vrot.slane %v851, 1
    %v853 = vmax.f32 %v851, %v852
    %v854 = vmax.f32 %v706, %v710
    %v855 = vmax.f32 %v854, %v716
    %v856 = vmax.f32 %v855, %v720
    %v857 = vrot.slane %v856, 4
    %v858 = vmax.f32 %v856, %v857
    %v859 = vrot.slane %v858, 2
    %v860 = vmax.f32 %v858, %v859
    %v861 = vrot.slane %v860, 1
    %v862 = vmax.f32 %v860, %v861
    %v863 = vmax.f32 %v708, %v712
    %v864 = vmax.f32 %v863, %v718
    %v865 = vmax.f32 %v864, %v722
    %v866 = vrot.slane %v865, 4
    %v867 = vmax.f32 %v865, %v866
    %v868 = vrot.slane %v867, 2
    %v869 = vmax.f32 %v867, %v868
    %v870 = vrot.slane %v869, 1
    %v871 = vmax.f32 %v869, %v870
    %v872 = vmax.f32 %v726, %v730
    %v873 = vmax.f32 %v872, %v736
    %v874 = vmax.f32 %v873, %v740
    %v875 = vrot.slane %v874, 4
    %v876 = vmax.f32 %v874, %v875
    %v877 = vrot.slane %v876, 2
    %v878 = vmax.f32 %v876, %v877
    %v879 = vrot.slane %v878, 1
    %v880 = vmax.f32 %v878, %v879
    %v881 = vmax.f32 %v728, %v732
    %v882 = vmax.f32 %v881, %v738
    %v883 = vmax.f32 %v882, %v742
    %v884 = vrot.slane %v883, 4
    %v885 = vmax.f32 %v883, %v884
    %v886 = vrot.slane %v885, 2
    %v887 = vmax.f32 %v885, %v886
    %v888 = vrot.slane %v887, 1
    %v889 = vmax.f32 %v887, %v888
    %v890 = vmax.f32 %v746, %v750
    %v891 = vmax.f32 %v890, %v756
    %v892 = vmax.f32 %v891, %v760
    %v893 = vrot.slane %v892, 4
    %v894 = vmax.f32 %v892, %v893
    %v895 = vrot.slane %v894, 2
    %v896 = vmax.f32 %v894, %v895
    %v897 = vrot.slane %v896, 1
    %v898 = vmax.f32 %v896, %v897
    %v899 = vmax.f32 %v748, %v752
    %v900 = vmax.f32 %v899, %v758
    %v901 = vmax.f32 %v900, %v762
    %v902 = vrot.slane %v901, 4
    %v903 = vmax.f32 %v901, %v902
    %v904 = vrot.slane %v903, 2
    %v905 = vmax.f32 %v903, %v904
    %v906 = vrot.slane %v905, 1
    %v907 = vmax.f32 %v905, %v906
    %v908 = vpack.c.bf16 %v772, %v772
    %v909 = vpack.c.bf16 %v781, %v781
    %v910 = vpack.c.bf16 %v790, %v790
    %v911 = vpack.c.bf16 %v799, %v799
    %v912 = vpack.c.bf16 %v808, %v808
    %v913 = vpack.c.bf16 %v817, %v817
    %v914 = vpack.c.bf16 %v826, %v826
    %v915 = vpack.c.bf16 %v835, %v835
    %v916 = vpack.c.bf16 %v844, %v844
    %v917 = vpack.c.bf16 %v853, %v853
    %v918 = vpack.c.bf16 %v862, %v862
    %v919 = vpack.c.bf16 %v871, %v871
    %v920 = vpack.c.bf16 %v880, %v880
    %v921 = vpack.c.bf16 %v889, %v889
    %v922 = vpack.c.bf16 %v898, %v898
    %v923 = vpack.c.bf16 %v907, %v907
    %v924 = vld [vmem:[#allocation5] sm:$0xff]
    %v925 = vld [vmem:[#allocation5 + $0x8] sm:$0xff]
    %v926 = vld [vmem:[#allocation5 + $0x10] sm:$0xff]
    %v927 = vld [vmem:[#allocation5 + $0x18] sm:$0xff]
    %v928 = vld [vmem:[#allocation5 + $0x20] sm:$0xff]
    %v929 = vld [vmem:[#allocation5 + $0x28] sm:$0xff]
    %v930 = vld [vmem:[#allocation5 + $0x30] sm:$0xff]
    %v931 = vld [vmem:[#allocation5 + $0x38] sm:$0xff]
    %v932 = vld [vmem:[#allocation5 + $0x40] sm:$0xff]
    %v933 = vld [vmem:[#allocation5 + $0x48] sm:$0xff]
    %v934 = vld [vmem:[#allocation5 + $0x50] sm:$0xff]
    %v935 = vld [vmem:[#allocation5 + $0x58] sm:$0xff]
    %v936 = vld [vmem:[#allocation5 + $0x60] sm:$0xff]
    %v937 = vld [vmem:[#allocation5 + $0x68] sm:$0xff]
    %v938 = vld [vmem:[#allocation5 + $0x70] sm:$0xff]
    %v939 = vld [vmem:[#allocation5 + $0x78] sm:$0xff]
    %v940 = vld [vmem:[#allocation5 + $0x80] sm:$0xff]
    %v941 = vld [vmem:[#allocation5 + $0x88] sm:$0xff]
    %v942 = vld [vmem:[#allocation5 + $0x90] sm:$0xff]
    %v943 = vld [vmem:[#allocation5 + $0x98] sm:$0xff]
    %v944 = vld [vmem:[#allocation5 + $0xa0] sm:$0xff]
    %v945 = vld [vmem:[#allocation5 + $0xa8] sm:$0xff]
    %v946 = vld [vmem:[#allocation5 + $0xb0] sm:$0xff]
    %v947 = vld [vmem:[#allocation5 + $0xb8] sm:$0xff]
    %v948 = vld [vmem:[#allocation5 + $0xc0] sm:$0xff]
    %v949 = vld [vmem:[#allocation5 + $0xc8] sm:$0xff]
    %v950 = vld [vmem:[#allocation5 + $0xd0] sm:$0xff]
    %v951 = vld [vmem:[#allocation5 + $0xd8] sm:$0xff]
    %v952 = vld [vmem:[#allocation5 + $0xe0] sm:$0xff]
    %v953 = vld [vmem:[#allocation5 + $0xe8] sm:$0xff]
    %v954 = vld [vmem:[#allocation5 + $0xf0] sm:$0xff]
    %v955 = vld [vmem:[#allocation5 + $0xf8] sm:$0xff]
    %v956 = vld [vmem:[#allocation5 + $0x100] sm:$0xff]
    %v957 = vld [vmem:[#allocation5 + $0x108] sm:$0xff]
    %v958 = vld [vmem:[#allocation5 + $0x110] sm:$0xff]
    %v959 = vld [vmem:[#allocation5 + $0x118] sm:$0xff]
    %v960 = vld [vmem:[#allocation5 + $0x120] sm:$0xff]
    %v961 = vld [vmem:[#allocation5 + $0x128] sm:$0xff]
    %v962 = vld [vmem:[#allocation5 + $0x130] sm:$0xff]
    %v963 = vld [vmem:[#allocation5 + $0x138] sm:$0xff]
    %v964 = vld [vmem:[#allocation5 + $0x140] sm:$0xff]
    %v965 = vld [vmem:[#allocation5 + $0x148] sm:$0xff]
    %v966 = vld [vmem:[#allocation5 + $0x150] sm:$0xff]
    %v967 = vld [vmem:[#allocation5 + $0x158] sm:$0xff]
    %v968 = vld [vmem:[#allocation5 + $0x160] sm:$0xff]
    %v969 = vld [vmem:[#allocation5 + $0x168] sm:$0xff]
    %v970 = vld [vmem:[#allocation5 + $0x170] sm:$0xff]
    %v971 = vld [vmem:[#allocation5 + $0x178] sm:$0xff]
    %v972 = vld [vmem:[#allocation5 + $0x180] sm:$0xff]
    %v973 = vld [vmem:[#allocation5 + $0x188] sm:$0xff]
    %v974 = vld [vmem:[#allocation5 + $0x190] sm:$0xff]
    %v975 = vld [vmem:[#allocation5 + $0x198] sm:$0xff]
    %v976 = vld [vmem:[#allocation5 + $0x1a0] sm:$0xff]
    %v977 = vld [vmem:[#allocation5 + $0x1a8] sm:$0xff]
    %v978 = vld [vmem:[#allocation5 + $0x1b0] sm:$0xff]
    %v979 = vld [vmem:[#allocation5 + $0x1b8] sm:$0xff]
    %v980 = vld [vmem:[#allocation5 + $0x1c0] sm:$0xff]
    %v981 = vld [vmem:[#allocation5 + $0x1c8] sm:$0xff]
    %v982 = vld [vmem:[#allocation5 + $0x1d0] sm:$0xff]
    %v983 = vld [vmem:[#allocation5 + $0x1d8] sm:$0xff]
    %v984 = vld [vmem:[#allocation5 + $0x1e0] sm:$0xff]
    %v985 = vld [vmem:[#allocation5 + $0x1e8] sm:$0xff]
    %v986 = vld [vmem:[#allocation5 + $0x1f0] sm:$0xff]
    %v987 = vld [vmem:[#allocation5 + $0x1f8] sm:$0xff]
    %v988 = vld [vmem:[%s5] sm:$0xf]
    %v990 = vlaneseq
    %v991 = vshrl.u32 %v990, 7
    %v992 = vsub.s32 0, %v991
    %v993 = vrot.slane %v988, %v992
    %v994 = vlaneseq
    %v995 = vshrl.u32 %v994, 7
    %v996 = vsub.s32 1, %v995
    %v997 = vrot.slane %v988, %v996
    %v998 = vlaneseq
    %v999 = vshrl.u32 %v998, 7
    %v1000 = vsub.s32 2, %v999
    %v1001 = vrot.slane %v988, %v1000
    %v1002 = vlaneseq
    %v1003 = vshrl.u32 %v1002, 7
    %v1004 = vsub.s32 3, %v1003
    %v1005 = vrot.slane %v988, %v1004
    %v1026 = vunpack.c.l.b16 %v908
    %v1027 = vunpack.c.l.b16 %v909
    %v1028 = vunpack.c.l.b16 %v910
    %v1029 = vunpack.c.l.b16 %v911
    %v1030 = vunpack.c.l.b16 %v912
    %v1031 = vunpack.c.l.b16 %v913
    %v1032 = vunpack.c.l.b16 %v914
    %v1033 = vunpack.c.l.b16 %v915
    %v1034 = vunpack.c.l.b16 %v916
    %v1035 = vunpack.c.l.b16 %v917
    %v1036 = vunpack.c.l.b16 %v918
    %v1037 = vunpack.c.l.b16 %v919
    %v1038 = vunpack.c.l.b16 %v920
    %v1039 = vunpack.c.l.b16 %v921
    %v1040 = vunpack.c.l.b16 %v922
    %v1041 = vunpack.c.l.b16 %v923
    %vm1042 = vcmask 1041409
    %v1043 = vsel %vm1042, %v1028, %v1026
    %vm1044 = vcmask 1042434
    %v1045 = vsel %vm1044, %v1030, %v1043
    %vm1046 = vcmask 1043459
    %v1047 = vsel %vm1046, %v1032, %v1045
    %vm1048 = vcmask 1044484
    %v1049 = vsel %vm1048, %v1034, %v1047
    %vm1050 = vcmask 1045509
    %v1051 = vsel %vm1050, %v1036, %v1049
    %vm1052 = vcmask 1046534
    %v1053 = vsel %vm1052, %v1038, %v1051
    %vm1054 = vcmask 1047559
    %v1055 = vsel %vm1054, %v1040, %v1053
    %v1056 = vsel %vm1042, %v1029, %v1027
    %v1057 = vsel %vm1044, %v1031, %v1056
    %v1058 = vsel %vm1046, %v1033, %v1057
    %v1059 = vsel %vm1048, %v1035, %v1058
    %v1060 = vsel %vm1050, %v1037, %v1059
    %v1061 = vsel %vm1052, %v1039, %v1060
    %v1062 = vsel %vm1054, %v1041, %v1061
    %v1063 = vpack.c.b16 %v1055, %v1055
    %v1064 = vpack.c.b16 %v1062, %v1062
    %v1131 = vunpack.c.l.b16 %v924
    %v1132 = vunpack.c.h.b16 %v924
    %v1133 = vunpack.c.l.b16 %v925
    %v1134 = vunpack.c.h.b16 %v925
    %v1135 = vunpack.c.l.b16 %v926
    %v1136 = vunpack.c.h.b16 %v926
    %v1137 = vunpack.c.l.b16 %v927
    %v1138 = vunpack.c.h.b16 %v927
    %v1139 = vunpack.c.l.b16 %v928
    %v1140 = vunpack.c.h.b16 %v928
    %v1141 = vunpack.c.l.b16 %v929
    %v1142 = vunpack.c.h.b16 %v929
    %v1143 = vunpack.c.l.b16 %v930
    %v1144 = vunpack.c.h.b16 %v930
    %v1145 = vunpack.c.l.b16 %v931
    %v1146 = vunpack.c.h.b16 %v931
    %v1147 = vunpack.c.l.b16 %v932
    %v1148 = vunpack.c.h.b16 %v932
    %v1149 = vunpack.c.l.b16 %v933
    %v1150 = vunpack.c.h.b16 %v933
    %v1151 = vunpack.c.l.b16 %v934
    %v1152 = vunpack.c.h.b16 %v934
    %v1153 = vunpack.c.l.b16 %v935
    %v1154 = vunpack.c.h.b16 %v935
    %v1155 = vunpack.c.l.b16 %v936
    %v1156 = vunpack.c.h.b16 %v936
    %v1157 = vunpack.c.l.b16 %v937
    %v1158 = vunpack.c.h.b16 %v937
    %v1159 = vunpack.c.l.b16 %v938
    %v1160 = vunpack.c.h.b16 %v938
    %v1161 = vunpack.c.l.b16 %v939
    %v1162 = vunpack.c.h.b16 %v939
    %v1163 = vunpack.c.l.b16 %v940
    %v1164 = vunpack.c.h.b16 %v940
    %v1165 = vunpack.c.l.b16 %v941
    %v1166 = vunpack.c.h.b16 %v941
    %v1167 = vunpack.c.l.b16 %v942
    %v1168 = vunpack.c.h.b16 %v942
    %v1169 = vunpack.c.l.b16 %v943
    %v1170 = vunpack.c.h.b16 %v943
    %v1171 = vunpack.c.l.b16 %v944
    %v1172 = vunpack.c.h.b16 %v944
    %v1173 = vunpack.c.l.b16 %v945
    %v1174 = vunpack.c.h.b16 %v945
    %v1175 = vunpack.c.l.b16 %v946
    %v1176 = vunpack.c.h.b16 %v946
    %v1177 = vunpack.c.l.b16 %v947
    %v1178 = vunpack.c.h.b16 %v947
    %v1179 = vunpack.c.l.b16 %v948
    %v1180 = vunpack.c.h.b16 %v948
    %v1181 = vunpack.c.l.b16 %v949
    %v1182 = vunpack.c.h.b16 %v949
    %v1183 = vunpack.c.l.b16 %v950
    %v1184 = vunpack.c.h.b16 %v950
    %v1185 = vunpack.c.l.b16 %v951
    %v1186 = vunpack.c.h.b16 %v951
    %v1187 = vunpack.c.l.b16 %v952
    %v1188 = vunpack.c.h.b16 %v952
    %v1189 = vunpack.c.l.b16 %v953
    %v1190 = vunpack.c.h.b16 %v953
    %v1191 = vunpack.c.l.b16 %v954
    %v1192 = vunpack.c.h.b16 %v954
    %v1193 = vunpack.c.l.b16 %v955
    %v1194 = vunpack.c.h.b16 %v955
    %v1195 = vunpack.c.l.b16 %v956
    %v1196 = vunpack.c.h.b16 %v956
    %v1197 = vunpack.c.l.b16 %v957
    %v1198 = vunpack.c.h.b16 %v957
    %v1199 = vunpack.c.l.b16 %v958
    %v1200 = vunpack.c.h.b16 %v958
    %v1201 = vunpack.c.l.b16 %v959
    %v1202 = vunpack.c.h.b16 %v959
    %v1203 = vunpack.c.l.b16 %v960
    %v1204 = vunpack.c.h.b16 %v960
    %v1205 = vunpack.c.l.b16 %v961
    %v1206 = vunpack.c.h.b16 %v961
    %v1207 = vunpack.c.l.b16 %v962
    %v1208 = vunpack.c.h.b16 %v962
    %v1209 = vunpack.c.l.b16 %v963
    %v1210 = vunpack.c.h.b16 %v963
    %v1211 = vunpack.c.l.b16 %v964
    %v1212 = vunpack.c.h.b16 %v964
    %v1213 = vunpack.c.l.b16 %v965
    %v1214 = vunpack.c.h.b16 %v965
    %v1215 = vunpack.c.l.b16 %v966
    %v1216 = vunpack.c.h.b16 %v966
    %v1217 = vunpack.c.l.b16 %v967
    %v1218 = vunpack.c.h.b16 %v967
    %v1219 = vunpack.c.l.b16 %v968
    %v1220 = vunpack.c.h.b16 %v968
    %v1221 = vunpack.c.l.b16 %v969
    %v1222 = vunpack.c.h.b16 %v969
    %v1223 = vunpack.c.l.b16 %v970
    %v1224 = vunpack.c.h.b16 %v970
    %v1225 = vunpack.c.l.b16 %v971
    %v1226 = vunpack.c.h.b16 %v971
    %v1227 = vunpack.c.l.b16 %v972
    %v1228 = vunpack.c.h.b16 %v972
    %v1229 = vunpack.c.l.b16 %v973
    %v1230 = vunpack.c.h.b16 %v973
    %v1231 = vunpack.c.l.b16 %v974
    %v1232 = vunpack.c.h.b16 %v974
    %v1233 = vunpack.c.l.b16 %v975
    %v1234 = vunpack.c.h.b16 %v975
    %v1235 = vunpack.c.l.b16 %v976
    %v1236 = vunpack.c.h.b16 %v976
    %v1237 = vunpack.c.l.b16 %v977
    %v1238 = vunpack.c.h.b16 %v977
    %v1239 = vunpack.c.l.b16 %v978
    %v1240 = vunpack.c.h.b16 %v978
    %v1241 = vunpack.c.l.b16 %v979
    %v1242 = vunpack.c.h.b16 %v979
    %v1243 = vunpack.c.l.b16 %v980
    %v1244 = vunpack.c.h.b16 %v980
    %v1245 = vunpack.c.l.b16 %v981
    %v1246 = vunpack.c.h.b16 %v981
    %v1247 = vunpack.c.l.b16 %v982
    %v1248 = vunpack.c.h.b16 %v982
    %v1249 = vunpack.c.l.b16 %v983
    %v1250 = vunpack.c.h.b16 %v983
    %v1251 = vunpack.c.l.b16 %v984
    %v1252 = vunpack.c.h.b16 %v984
    %v1253 = vunpack.c.l.b16 %v985
    %v1254 = vunpack.c.h.b16 %v985
    %v1255 = vunpack.c.l.b16 %v986
    %v1256 = vunpack.c.h.b16 %v986
    %v1257 = vunpack.c.l.b16 %v987
    %v1258 = vunpack.c.h.b16 %v987
    %v1259 = vpack.c.b16 %v1135, %v1131
    %v1260 = vpack.c.b16 %v1136, %v1132
    %v1261 = vpack.c.b16 %v1137, %v1133
    %v1262 = vpack.c.b16 %v1138, %v1134
    %v1263 = vpack.c.b16 %v1143, %v1139
    %v1264 = vpack.c.b16 %v1144, %v1140
    %v1265 = vpack.c.b16 %v1145, %v1141
    %v1266 = vpack.c.b16 %v1146, %v1142
    %v1267 = vpack.c.b16 %v1151, %v1147
    %v1268 = vpack.c.b16 %v1152, %v1148
    %v1269 = vpack.c.b16 %v1153, %v1149
    %v1270 = vpack.c.b16 %v1154, %v1150
    %v1271 = vpack.c.b16 %v1159, %v1155
    %v1272 = vpack.c.b16 %v1160, %v1156
    %v1273 = vpack.c.b16 %v1161, %v1157
    %v1274 = vpack.c.b16 %v1162, %v1158
    %v1275 = vpack.c.b16 %v1167, %v1163
    %v1276 = vpack.c.b16 %v1168, %v1164
    %v1277 = vpack.c.b16 %v1169, %v1165
    %v1278 = vpack.c.b16 %v1170, %v1166
    %v1279 = vpack.c.b16 %v1175, %v1171
    %v1280 = vpack.c.b16 %v1176, %v1172
    %v1281 = vpack.c.b16 %v1177, %v1173
    %v1282 = vpack.c.b16 %v1178, %v1174
    %v1283 = vpack.c.b16 %v1183, %v1179
    %v1284 = vpack.c.b16 %v1184, %v1180
    %v1285 = vpack.c.b16 %v1185, %v1181
    %v1286 = vpack.c.b16 %v1186, %v1182
    %v1287 = vpack.c.b16 %v1191, %v1187
    %v1288 = vpack.c.b16 %v1192, %v1188
    %v1289 = vpack.c.b16 %v1193, %v1189
    %v1290 = vpack.c.b16 %v1194, %v1190
    %v1291 = vpack.c.b16 %v1199, %v1195
    %v1292 = vpack.c.b16 %v1200, %v1196
    %v1293 = vpack.c.b16 %v1201, %v1197
    %v1294 = vpack.c.b16 %v1202, %v1198
    %v1295 = vpack.c.b16 %v1207, %v1203
    %v1296 = vpack.c.b16 %v1208, %v1204
    %v1297 = vpack.c.b16 %v1209, %v1205
    %v1298 = vpack.c.b16 %v1210, %v1206
    %v1299 = vpack.c.b16 %v1215, %v1211
    %v1300 = vpack.c.b16 %v1216, %v1212
    %v1301 = vpack.c.b16 %v1217, %v1213
    %v1302 = vpack.c.b16 %v1218, %v1214
    %v1303 = vpack.c.b16 %v1223, %v1219
    %v1304 = vpack.c.b16 %v1224, %v1220
    %v1305 = vpack.c.b16 %v1225, %v1221
    %v1306 = vpack.c.b16 %v1226, %v1222
    %v1307 = vpack.c.b16 %v1231, %v1227
    %v1308 = vpack.c.b16 %v1232, %v1228
    %v1309 = vpack.c.b16 %v1233, %v1229
    %v1310 = vpack.c.b16 %v1234, %v1230
    %v1311 = vpack.c.b16 %v1239, %v1235
    %v1312 = vpack.c.b16 %v1240, %v1236
    %v1313 = vpack.c.b16 %v1241, %v1237
    %v1314 = vpack.c.b16 %v1242, %v1238
    %v1315 = vpack.c.b16 %v1247, %v1243
    %v1316 = vpack.c.b16 %v1248, %v1244
    %v1317 = vpack.c.b16 %v1249, %v1245
    %v1318 = vpack.c.b16 %v1250, %v1246
    %v1319 = vpack.c.b16 %v1255, %v1251
    %v1320 = vpack.c.b16 %v1256, %v1252
    %v1321 = vpack.c.b16 %v1257, %v1253
    %v1322 = vpack.c.b16 %v1258, %v1254
    %1387 = vmatprep.subr.bf16.mxu0 %v1288
    %1388 = vmatpush1.bf16.msra.mxu0 %v1287
    %1389 = vmatprep.subr.bf16.mxu0 %v1284
    %1390 = vmatpush1.bf16.msra.mxu0 %v1283
    %1391 = vmatprep.subr.bf16.mxu0 %v1280
    %1392 = vmatpush1.bf16.msra.mxu0 %v1279
    %1393 = vmatprep.subr.bf16.mxu0 %v1276
    %1394 = vmatpush1.bf16.msra.mxu0 %v1275
    %1395 = vmatprep.subr.bf16.mxu0 %v1272
    %1396 = vmatpush1.bf16.msra.mxu0 %v1271
    %1397 = vmatprep.subr.bf16.mxu0 %v1268
    %1398 = vmatpush1.bf16.msra.mxu0 %v1267
    %1399 = vmatprep.subr.bf16.mxu0 %v1264
    %1400 = vmatpush1.bf16.msra.mxu0 %v1263
    %1401 = vmatprep.subr.bf16.mxu0 %v1260
    %1402 = vmatpush1.bf16.msra.mxu0 %v1259
    %1403 = vmatprep.subr.bf16.mxu0 %v1320
    %1404 = vmatpush2.bf16.msra.mxu0 %v1319
    %1405 = vmatprep.subr.bf16.mxu0 %v1316
    %1406 = vmatpush2.bf16.msra.mxu0 %v1315
    %1407 = vmatprep.subr.bf16.mxu0 %v1312
    %1408 = vmatpush2.bf16.msra.mxu0 %v1311
    %1409 = vmatprep.subr.bf16.mxu0 %v1308
    %1410 = vmatpush2.bf16.msra.mxu0 %v1307
    %1411 = vmatprep.subr.bf16.mxu0 %v1304
    %1412 = vmatpush2.bf16.msra.mxu0 %v1303
    %1413 = vmatprep.subr.bf16.mxu0 %v1300
    %1414 = vmatpush2.bf16.msra.mxu0 %v1299
    %1415 = vmatprep.subr.bf16.mxu0 %v1296
    %1416 = vmatpush2.bf16.msra.mxu0 %v1295
    %1417 = vmatprep.subr.bf16.mxu0 %v1292
    %1418 = vmatpush2.bf16.msra.mxu0 %v1291
    %1419 = vmatprep.mubr.bf16.mxu0 %v1064
    %1420 = vmatmul.mubr.bf16.gmra.mxu0 %v1063
    %v1421 = vpop.f32.mrf.mxu0
    %v1422 = vadd.f32 %v993, %v1421
    %v1423 = vpop.f32.mrf.mxu0
    %v1424 = vadd.f32 %v997, %v1423
    %v1425 = vpop.f32.mrf.mxu0
    %v1426 = vpop.f32.mrf.mxu0
    %1427 = vdwg.mxu0
    %1428 = vmatprep.subr.bf16.mxu0 %v1290
    %1429 = vmatpush1.bf16.msra.mxu0 %v1289
    %1430 = vmatprep.subr.bf16.mxu0 %v1286
    %1431 = vmatpush1.bf16.msra.mxu0 %v1285
    %1432 = vmatprep.subr.bf16.mxu0 %v1282
    %1433 = vmatpush1.bf16.msra.mxu0 %v1281
    %1434 = vmatprep.subr.bf16.mxu0 %v1278
    %1435 = vmatpush1.bf16.msra.mxu0 %v1277
    %1436 = vmatprep.subr.bf16.mxu0 %v1274
    %1437 = vmatpush1.bf16.msra.mxu0 %v1273
    %1438 = vmatprep.subr.bf16.mxu0 %v1270
    %1439 = vmatpush1.bf16.msra.mxu0 %v1269
    %1440 = vmatprep.subr.bf16.mxu0 %v1266
    %1441 = vmatpush1.bf16.msra.mxu0 %v1265
    %1442 = vmatprep.subr.bf16.mxu0 %v1262
    %1443 = vmatpush1.bf16.msra.mxu0 %v1261
    %1444 = vmatprep.subr.bf16.mxu0 %v1322
    %1445 = vmatpush2.bf16.msra.mxu0 %v1321
    %1446 = vmatprep.subr.bf16.mxu0 %v1318
    %1447 = vmatpush2.bf16.msra.mxu0 %v1317
    %1448 = vmatprep.subr.bf16.mxu0 %v1314
    %1449 = vmatpush2.bf16.msra.mxu0 %v1313
    %1450 = vmatprep.subr.bf16.mxu0 %v1310
    %1451 = vmatpush2.bf16.msra.mxu0 %v1309
    %1452 = vmatprep.subr.bf16.mxu0 %v1306
    %1453 = vmatpush2.bf16.msra.mxu0 %v1305
    %1454 = vmatprep.subr.bf16.mxu0 %v1302
    %1455 = vmatpush2.bf16.msra.mxu0 %v1301
    %1456 = vmatprep.subr.bf16.mxu0 %v1298
    %1457 = vmatpush2.bf16.msra.mxu0 %v1297
    %1458 = vmatprep.subr.bf16.mxu0 %v1294
    %1459 = vmatpush2.bf16.msra.mxu0 %v1293
    %1460 = vmatprep.mubr.bf16.mxu0 %v1064
    %1461 = vmatmul.mubr.bf16.gmra.mxu0 %v1063
    %v1462 = vpop.f32.mrf.mxu0
    %v1463 = vadd.f32 %v1001, %v1462
    %v1464 = vpop.f32.mrf.mxu0
    %v1465 = vadd.f32 %v1005, %v1464
    %v1466 = vpop.f32.mrf.mxu0
    %v1467 = vpop.f32.mrf.mxu0
    %1468 = vdwg.mxu0
    %v1469 = vpack.c.bf16 %v610, %v606
    %v1470 = vpack.c.bf16 %v612, %v608
    %v1471 = vpack.c.bf16 %v620, %v616
    %v1472 = vpack.c.bf16 %v622, %v618
    %v1473 = vpack.c.bf16 %v630, %v626
    %v1474 = vpack.c.bf16 %v632, %v628
    %v1475 = vpack.c.bf16 %v640, %v636
    %v1476 = vpack.c.bf16 %v642, %v638
    %v1477 = vpack.c.bf16 %v650, %v646
    %v1478 = vpack.c.bf16 %v652, %v648
    %v1479 = vpack.c.bf16 %v660, %v656
    %v1480 = vpack.c.bf16 %v662, %v658
    %v1481 = vpack.c.bf16 %v670, %v666
    %v1482 = vpack.c.bf16 %v672, %v668
    %v1483 = vpack.c.bf16 %v680, %v676
    %v1484 = vpack.c.bf16 %v682, %v678
    %v1485 = vpack.c.bf16 %v690, %v686
    %v1486 = vpack.c.bf16 %v692, %v688
    %v1487 = vpack.c.bf16 %v700, %v696
    %v1488 = vpack.c.bf16 %v702, %v698
    %v1489 = vpack.c.bf16 %v710, %v706
    %v1490 = vpack.c.bf16 %v712, %v708
    %v1491 = vpack.c.bf16 %v720, %v716
    %v1492 = vpack.c.bf16 %v722, %v718
    %v1493 = vpack.c.bf16 %v730, %v726
    %v1494 = vpack.c.bf16 %v732, %v728
    %v1495 = vpack.c.bf16 %v740, %v736
    %v1496 = vpack.c.bf16 %v742, %v738
    %v1497 = vpack.c.bf16 %v750, %v746
    %v1498 = vpack.c.bf16 %v752, %v748
    %v1499 = vpack.c.bf16 %v760, %v756
    %v1500 = vpack.c.bf16 %v762, %v758
    %v1501 = vld [vmem:[#allocation7] sm:$0xff]
    %v1502 = vld [vmem:[#allocation7 + $0x8] sm:$0xff]
    %v1503 = vld [vmem:[#allocation7 + $0x10] sm:$0xff]
    %v1504 = vld [vmem:[#allocation7 + $0x18] sm:$0xff]
    %v1505 = vld [vmem:[#allocation7 + $0x20] sm:$0xff]
    %v1506 = vld [vmem:[#allocation7 + $0x28] sm:$0xff]
    %v1507 = vld [vmem:[#allocation7 + $0x30] sm:$0xff]
    %v1508 = vld [vmem:[#allocation7 + $0x38] sm:$0xff]
    %v1509 = vld [vmem:[#allocation7 + $0x40] sm:$0xff]
    %v1510 = vld [vmem:[#allocation7 + $0x48] sm:$0xff]
    %v1511 = vld [vmem:[#allocation7 + $0x50] sm:$0xff]
    %v1512 = vld [vmem:[#allocation7 + $0x58] sm:$0xff]
    %v1513 = vld [vmem:[#allocation7 + $0x60] sm:$0xff]
    %v1514 = vld [vmem:[#allocation7 + $0x68] sm:$0xff]
    %v1515 = vld [vmem:[#allocation7 + $0x70] sm:$0xff]
    %v1516 = vld [vmem:[#allocation7 + $0x78] sm:$0xff]
    %v1517 = vld [vmem:[#allocation7 + $0x80] sm:$0xff]
    %v1518 = vld [vmem:[#allocation7 + $0x88] sm:$0xff]
    %v1519 = vld [vmem:[#allocation7 + $0x90] sm:$0xff]
    %v1520 = vld [vmem:[#allocation7 + $0x98] sm:$0xff]
    %v1521 = vld [vmem:[#allocation7 + $0xa0] sm:$0xff]
    %v1522 = vld [vmem:[#allocation7 + $0xa8] sm:$0xff]
    %v1523 = vld [vmem:[#allocation7 + $0xb0] sm:$0xff]
    %v1524 = vld [vmem:[#allocation7 + $0xb8] sm:$0xff]
    %v1525 = vld [vmem:[#allocation7 + $0xc0] sm:$0xff]
    %v1526 = vld [vmem:[#allocation7 + $0xc8] sm:$0xff]
    %v1527 = vld [vmem:[#allocation7 + $0xd0] sm:$0xff]
    %v1528 = vld [vmem:[#allocation7 + $0xd8] sm:$0xff]
    %v1529 = vld [vmem:[#allocation7 + $0xe0] sm:$0xff]
    %v1530 = vld [vmem:[#allocation7 + $0xe8] sm:$0xff]
    %v1531 = vld [vmem:[#allocation7 + $0xf0] sm:$0xff]
    %v1532 = vld [vmem:[#allocation7 + $0xf8] sm:$0xff]
    %v1533 = vld [vmem:[#allocation7 + $0x100] sm:$0xff]
    %v1534 = vld [vmem:[#allocation7 + $0x108] sm:$0xff]
    %v1535 = vld [vmem:[#allocation7 + $0x110] sm:$0xff]
    %v1536 = vld [vmem:[#allocation7 + $0x118] sm:$0xff]
    %v1537 = vld [vmem:[#allocation7 + $0x120] sm:$0xff]
    %v1538 = vld [vmem:[#allocation7 + $0x128] sm:$0xff]
    %v1539 = vld [vmem:[#allocation7 + $0x130] sm:$0xff]
    %v1540 = vld [vmem:[#allocation7 + $0x138] sm:$0xff]
    %v1541 = vld [vmem:[#allocation7 + $0x140] sm:$0xff]
    %v1542 = vld [vmem:[#allocation7 + $0x148] sm:$0xff]
    %v1543 = vld [vmem:[#allocation7 + $0x150] sm:$0xff]
    %v1544 = vld [vmem:[#allocation7 + $0x158] sm:$0xff]
    %v1545 = vld [vmem:[#allocation7 + $0x160] sm:$0xff]
    %v1546 = vld [vmem:[#allocation7 + $0x168] sm:$0xff]
    %v1547 = vld [vmem:[#allocation7 + $0x170] sm:$0xff]
    %v1548 = vld [vmem:[#allocation7 + $0x178] sm:$0xff]
    %v1549 = vld [vmem:[#allocation7 + $0x180] sm:$0xff]
    %v1550 = vld [vmem:[#allocation7 + $0x188] sm:$0xff]
    %v1551 = vld [vmem:[#allocation7 + $0x190] sm:$0xff]
    %v1552 = vld [vmem:[#allocation7 + $0x198] sm:$0xff]
    %v1553 = vld [vmem:[#allocation7 + $0x1a0] sm:$0xff]
    %v1554 = vld [vmem:[#allocation7 + $0x1a8] sm:$0xff]
    %v1555 = vld [vmem:[#allocation7 + $0x1b0] sm:$0xff]
    %v1556 = vld [vmem:[#allocation7 + $0x1b8] sm:$0xff]
    %v1557 = vld [vmem:[#allocation7 + $0x1c0] sm:$0xff]
    %v1558 = vld [vmem:[#allocation7 + $0x1c8] sm:$0xff]
    %v1559 = vld [vmem:[#allocation7 + $0x1d0] sm:$0xff]
    %v1560 = vld [vmem:[#allocation7 + $0x1d8] sm:$0xff]
    %v1561 = vld [vmem:[#allocation7 + $0x1e0] sm:$0xff]
    %v1562 = vld [vmem:[#allocation7 + $0x1e8] sm:$0xff]
    %v1563 = vld [vmem:[#allocation7 + $0x1f0] sm:$0xff]
    %v1564 = vld [vmem:[#allocation7 + $0x1f8] sm:$0xff]
    %v1629 = vunpack.c.l.b16 %v1501
    %v1630 = vunpack.c.h.b16 %v1501
    %v1631 = vunpack.c.l.b16 %v1502
    %v1632 = vunpack.c.h.b16 %v1502
    %v1633 = vunpack.c.l.b16 %v1503
    %v1634 = vunpack.c.h.b16 %v1503
    %v1635 = vunpack.c.l.b16 %v1504
    %v1636 = vunpack.c.h.b16 %v1504
    %v1637 = vunpack.c.l.b16 %v1505
    %v1638 = vunpack.c.h.b16 %v1505
    %v1639 = vunpack.c.l.b16 %v1506
    %v1640 = vunpack.c.h.b16 %v1506
    %v1641 = vunpack.c.l.b16 %v1507
    %v1642 = vunpack.c.h.b16 %v1507
    %v1643 = vunpack.c.l.b16 %v1508
    %v1644 = vunpack.c.h.b16 %v1508
    %v1645 = vunpack.c.l.b16 %v1509
    %v1646 = vunpack.c.h.b16 %v1509
    %v1647 = vunpack.c.l.b16 %v1510
    %v1648 = vunpack.c.h.b16 %v1510
    %v1649 = vunpack.c.l.b16 %v1511
    %v1650 = vunpack.c.h.b16 %v1511
    %v1651 = vunpack.c.l.b16 %v1512
    %v1652 = vunpack.c.h.b16 %v1512
    %v1653 = vunpack.c.l.b16 %v1513
    %v1654 = vunpack.c.h.b16 %v1513
    %v1655 = vunpack.c.l.b16 %v1514
    %v1656 = vunpack.c.h.b16 %v1514
    %v1657 = vunpack.c.l.b16 %v1515
    %v1658 = vunpack.c.h.b16 %v1515
    %v1659 = vunpack.c.l.b16 %v1516
    %v1660 = vunpack.c.h.b16 %v1516
    %v1661 = vunpack.c.l.b16 %v1517
    %v1662 = vunpack.c.h.b16 %v1517
    %v1663 = vunpack.c.l.b16 %v1518
    %v1664 = vunpack.c.h.b16 %v1518
    %v1665 = vunpack.c.l.b16 %v1519
    %v1666 = vunpack.c.h.b16 %v1519
    %v1667 = vunpack.c.l.b16 %v1520
    %v1668 = vunpack.c.h.b16 %v1520
    %v1669 = vunpack.c.l.b16 %v1521
    %v1670 = vunpack.c.h.b16 %v1521
    %v1671 = vunpack.c.l.b16 %v1522
    %v1672 = vunpack.c.h.b16 %v1522
    %v1673 = vunpack.c.l.b16 %v1523
    %v1674 = vunpack.c.h.b16 %v1523
    %v1675 = vunpack.c.l.b16 %v1524
    %v1676 = vunpack.c.h.b16 %v1524
    %v1677 = vunpack.c.l.b16 %v1525
    %v1678 = vunpack.c.h.b16 %v1525
    %v1679 = vunpack.c.l.b16 %v1526
    %v1680 = vunpack.c.h.b16 %v1526
    %v1681 = vunpack.c.l.b16 %v1527
    %v1682 = vunpack.c.h.b16 %v1527
    %v1683 = vunpack.c.l.b16 %v1528
    %v1684 = vunpack.c.h.b16 %v1528
    %v1685 = vunpack.c.l.b16 %v1529
    %v1686 = vunpack.c.h.b16 %v1529
    %v1687 = vunpack.c.l.b16 %v1530
    %v1688 = vunpack.c.h.b16 %v1530
    %v1689 = vunpack.c.l.b16 %v1531
    %v1690 = vunpack.c.h.b16 %v1531
    %v1691 = vunpack.c.l.b16 %v1532
    %v1692 = vunpack.c.h.b16 %v1532
    %v1693 = vunpack.c.l.b16 %v1533
    %v1694 = vunpack.c.h.b16 %v1533
    %v1695 = vunpack.c.l.b16 %v1534
    %v1696 = vunpack.c.h.b16 %v1534
    %v1697 = vunpack.c.l.b16 %v1535
    %v1698 = vunpack.c.h.b16 %v1535
    %v1699 = vunpack.c.l.b16 %v1536
    %v1700 = vunpack.c.h.b16 %v1536
    %v1701 = vunpack.c.l.b16 %v1537
    %v1702 = vunpack.c.h.b16 %v1537
    %v1703 = vunpack.c.l.b16 %v1538
    %v1704 = vunpack.c.h.b16 %v1538
    %v1705 = vunpack.c.l.b16 %v1539
    %v1706 = vunpack.c.h.b16 %v1539
    %v1707 = vunpack.c.l.b16 %v1540
    %v1708 = vunpack.c.h.b16 %v1540
    %v1709 = vunpack.c.l.b16 %v1541
    %v1710 = vunpack.c.h.b16 %v1541
    %v1711 = vunpack.c.l.b16 %v1542
    %v1712 = vunpack.c.h.b16 %v1542
    %v1713 = vunpack.c.l.b16 %v1543
    %v1714 = vunpack.c.h.b16 %v1543
    %v1715 = vunpack.c.l.b16 %v1544
    %v1716 = vunpack.c.h.b16 %v1544
    %v1717 = vunpack.c.l.b16 %v1545
    %v1718 = vunpack.c.h.b16 %v1545
    %v1719 = vunpack.c.l.b16 %v1546
    %v1720 = vunpack.c.h.b16 %v1546
    %v1721 = vunpack.c.l.b16 %v1547
    %v1722 = vunpack.c.h.b16 %v1547
    %v1723 = vunpack.c.l.b16 %v1548
    %v1724 = vunpack.c.h.b16 %v1548
    %v1725 = vunpack.c.l.b16 %v1549
    %v1726 = vunpack.c.h.b16 %v1549
    %v1727 = vunpack.c.l.b16 %v1550
    %v1728 = vunpack.c.h.b16 %v1550
    %v1729 = vunpack.c.l.b16 %v1551
    %v1730 = vunpack.c.h.b16 %v1551
    %v1731 = vunpack.c.l.b16 %v1552
    %v1732 = vunpack.c.h.b16 %v1552
    %v1733 = vunpack.c.l.b16 %v1553
    %v1734 = vunpack.c.h.b16 %v1553
    %v1735 = vunpack.c.l.b16 %v1554
    %v1736 = vunpack.c.h.b16 %v1554
    %v1737 = vunpack.c.l.b16 %v1555
    %v1738 = vunpack.c.h.b16 %v1555
    %v1739 = vunpack.c.l.b16 %v1556
    %v1740 = vunpack.c.h.b16 %v1556
    %v1741 = vunpack.c.l.b16 %v1557
    %v1742 = vunpack.c.h.b16 %v1557
    %v1743 = vunpack.c.l.b16 %v1558
    %v1744 = vunpack.c.h.b16 %v1558
    %v1745 = vunpack.c.l.b16 %v1559
    %v1746 = vunpack.c.h.b16 %v1559
    %v1747 = vunpack.c.l.b16 %v1560
    %v1748 = vunpack.c.h.b16 %v1560
    %v1749 = vunpack.c.l.b16 %v1561
    %v1750 = vunpack.c.h.b16 %v1561
    %v1751 = vunpack.c.l.b16 %v1562
    %v1752 = vunpack.c.h.b16 %v1562
    %v1753 = vunpack.c.l.b16 %v1563
    %v1754 = vunpack.c.h.b16 %v1563
    %v1755 = vunpack.c.l.b16 %v1564
    %v1756 = vunpack.c.h.b16 %v1564
    %v1757 = vpack.c.b16 %v1633, %v1629
    %v1758 = vpack.c.b16 %v1634, %v1630
    %v1759 = vpack.c.b16 %v1635, %v1631
    %v1760 = vpack.c.b16 %v1636, %v1632
    %v1761 = vpack.c.b16 %v1641, %v1637
    %v1762 = vpack.c.b16 %v1642, %v1638
    %v1763 = vpack.c.b16 %v1643, %v1639
    %v1764 = vpack.c.b16 %v1644, %v1640
    %v1765 = vpack.c.b16 %v1649, %v1645
    %v1766 = vpack.c.b16 %v1650, %v1646
    %v1767 = vpack.c.b16 %v1651, %v1647
    %v1768 = vpack.c.b16 %v1652, %v1648
    %v1769 = vpack.c.b16 %v1657, %v1653
    %v1770 = vpack.c.b16 %v1658, %v1654
    %v1771 = vpack.c.b16 %v1659, %v1655
    %v1772 = vpack.c.b16 %v1660, %v1656
    %v1773 = vpack.c.b16 %v1665, %v1661
    %v1774 = vpack.c.b16 %v1666, %v1662
    %v1775 = vpack.c.b16 %v1667, %v1663
    %v1776 = vpack.c.b16 %v1668, %v1664
    %v1777 = vpack.c.b16 %v1673, %v1669
    %v1778 = vpack.c.b16 %v1674, %v1670
    %v1779 = vpack.c.b16 %v1675, %v1671
    %v1780 = vpack.c.b16 %v1676, %v1672
    %v1781 = vpack.c.b16 %v1681, %v1677
    %v1782 = vpack.c.b16 %v1682, %v1678
    %v1783 = vpack.c.b16 %v1683, %v1679
    %v1784 = vpack.c.b16 %v1684, %v1680
    %v1785 = vpack.c.b16 %v1689, %v1685
    %v1786 = vpack.c.b16 %v1690, %v1686
    %v1787 = vpack.c.b16 %v1691, %v1687
    %v1788 = vpack.c.b16 %v1692, %v1688
    %v1789 = vpack.c.b16 %v1697, %v1693
    %v1790 = vpack.c.b16 %v1698, %v1694
    %v1791 = vpack.c.b16 %v1699, %v1695
    %v1792 = vpack.c.b16 %v1700, %v1696
    %v1793 = vpack.c.b16 %v1705, %v1701
    %v1794 = vpack.c.b16 %v1706, %v1702
    %v1795 = vpack.c.b16 %v1707, %v1703
    %v1796 = vpack.c.b16 %v1708, %v1704
    %v1797 = vpack.c.b16 %v1713, %v1709
    %v1798 = vpack.c.b16 %v1714, %v1710
    %v1799 = vpack.c.b16 %v1715, %v1711
    %v1800 = vpack.c.b16 %v1716, %v1712
    %v1801 = vpack.c.b16 %v1721, %v1717
    %v1802 = vpack.c.b16 %v1722, %v1718
    %v1803 = vpack.c.b16 %v1723, %v1719
    %v1804 = vpack.c.b16 %v1724, %v1720
    %v1805 = vpack.c.b16 %v1729, %v1725
    %v1806 = vpack.c.b16 %v1730, %v1726
    %v1807 = vpack.c.b16 %v1731, %v1727
    %v1808 = vpack.c.b16 %v1732, %v1728
    %v1809 = vpack.c.b16 %v1737, %v1733
    %v1810 = vpack.c.b16 %v1738, %v1734
    %v1811 = vpack.c.b16 %v1739, %v1735
    %v1812 = vpack.c.b16 %v1740, %v1736
    %v1813 = vpack.c.b16 %v1745, %v1741
    %v1814 = vpack.c.b16 %v1746, %v1742
    %v1815 = vpack.c.b16 %v1747, %v1743
    %v1816 = vpack.c.b16 %v1748, %v1744
    %v1817 = vpack.c.b16 %v1753, %v1749
    %v1818 = vpack.c.b16 %v1754, %v1750
    %v1819 = vpack.c.b16 %v1755, %v1751
    %v1820 = vpack.c.b16 %v1756, %v1752
    %1885 = vmatprep.subr.bf16.mxu0 %v1786
    %1886 = vmatpush1.bf16.msra.mxu0 %v1785
    %1887 = vmatprep.subr.bf16.mxu0 %v1782
    %1888 = vmatpush1.bf16.msra.mxu0 %v1781
    %1889 = vmatprep.subr.bf16.mxu0 %v1778
    %1890 = vmatpush1.bf16.msra.mxu0 %v1777
    %1891 = vmatprep.subr.bf16.mxu0 %v1774
    %1892 = vmatpush1.bf16.msra.mxu0 %v1773
    %1893 = vmatprep.subr.bf16.mxu0 %v1770
    %1894 = vmatpush1.bf16.msra.mxu0 %v1769
    %1895 = vmatprep.subr.bf16.mxu0 %v1766
    %1896 = vmatpush1.bf16.msra.mxu0 %v1765
    %1897 = vmatprep.subr.bf16.mxu0 %v1762
    %1898 = vmatpush1.bf16.msra.mxu0 %v1761
    %1899 = vmatprep.subr.bf16.mxu0 %v1758
    %1900 = vmatpush1.bf16.msra.mxu0 %v1757
    %1901 = vmatprep.subr.bf16.mxu0 %v1818
    %1902 = vmatpush2.bf16.msra.mxu0 %v1817
    %1903 = vmatprep.subr.bf16.mxu0 %v1814
    %1904 = vmatpush2.bf16.msra.mxu0 %v1813
    %1905 = vmatprep.subr.bf16.mxu0 %v1810
    %1906 = vmatpush2.bf16.msra.mxu0 %v1809
    %1907 = vmatprep.subr.bf16.mxu0 %v1806
    %1908 = vmatpush2.bf16.msra.mxu0 %v1805
    %1909 = vmatprep.subr.bf16.mxu0 %v1802
    %1910 = vmatpush2.bf16.msra.mxu0 %v1801
    %1911 = vmatprep.subr.bf16.mxu0 %v1798
    %1912 = vmatpush2.bf16.msra.mxu0 %v1797
    %1913 = vmatprep.subr.bf16.mxu0 %v1794
    %1914 = vmatpush2.bf16.msra.mxu0 %v1793
    %1915 = vmatprep.subr.bf16.mxu0 %v1790
    %1916 = vmatpush2.bf16.msra.mxu0 %v1789
    %1917 = vmatprep.mubr.bf16.mxu0 %v1470
    %1918 = vmatmul.mubr.bf16.gmra.mxu0 %v1469
    %v1919 = vpop.f32.mrf.mxu0
    %v1920 = vadd.f32 0.0, %v1919
    %v1921 = vpop.f32.mrf.mxu0
    %v1922 = vadd.f32 0.0, %v1921
    %v1923 = vpop.f32.mrf.mxu0
    %v1924 = vadd.f32 0.0, %v1923
    %v1925 = vpop.f32.mrf.mxu0
    %v1926 = vadd.f32 0.0, %v1925
    %1927 = vmatprep.mubr.bf16.mxu0 %v1472
    %1928 = vmatmul.mubr.bf16.gmra.mxu0 %v1471
    %v1929 = vpop.f32.mrf.mxu0
    %v1930 = vadd.f32 0.0, %v1929
    %v1931 = vpop.f32.mrf.mxu0
    %v1932 = vadd.f32 0.0, %v1931
    %v1933 = vpop.f32.mrf.mxu0
    %v1934 = vadd.f32 0.0, %v1933
    %v1935 = vpop.f32.mrf.mxu0
    %v1936 = vadd.f32 0.0, %v1935
    %1937 = vmatprep.mubr.bf16.mxu0 %v1474
    %1938 = vmatmul.mubr.bf16.gmra.mxu0 %v1473
    %v1939 = vpop.f32.mrf.mxu0
    %v1940 = vadd.f32 0.0, %v1939
    %v1941 = vpop.f32.mrf.mxu0
    %v1942 = vadd.f32 0.0, %v1941
    %v1943 = vpop.f32.mrf.mxu0
    %v1944 = vadd.f32 0.0, %v1943
    %v1945 = vpop.f32.mrf.mxu0
    %v1946 = vadd.f32 0.0, %v1945
    %1947 = vmatprep.mubr.bf16.mxu0 %v1476
    %1948 = vmatmul.mubr.bf16.gmra.mxu0 %v1475
    %v1949 = vpop.f32.mrf.mxu0
    %v1950 = vadd.f32 0.0, %v1949
    %v1951 = vpop.f32.mrf.mxu0
    %v1952 = vadd.f32 0.0, %v1951
    %v1953 = vpop.f32.mrf.mxu0
    %v1954 = vadd.f32 0.0, %v1953
    %v1955 = vpop.f32.mrf.mxu0
    %v1956 = vadd.f32 0.0, %v1955
    %1957 = vmatprep.mubr.bf16.mxu0 %v1478
    %1958 = vmatmul.mubr.bf16.gmra.mxu0 %v1477
    %v1959 = vpop.f32.mrf.mxu0
    %v1960 = vadd.f32 0.0, %v1959
    %v1961 = vpop.f32.mrf.mxu0
    %v1962 = vadd.f32 0.0, %v1961
    %v1963 = vpop.f32.mrf.mxu0
    %v1964 = vadd.f32 0.0, %v1963
    %v1965 = vpop.f32.mrf.mxu0
    %v1966 = vadd.f32 0.0, %v1965
    %1967 = vmatprep.mubr.bf16.mxu0 %v1480
    %1968 = vmatmul.mubr.bf16.gmra.mxu0 %v1479
    %v1969 = vpop.f32.mrf.mxu0
    %v1970 = vadd.f32 0.0, %v1969
    %v1971 = vpop.f32.mrf.mxu0
    %v1972 = vadd.f32 0.0, %v1971
    %v1973 = vpop.f32.mrf.mxu0
    %v1974 = vadd.f32 0.0, %v1973
    %v1975 = vpop.f32.mrf.mxu0
    %v1976 = vadd.f32 0.0, %v1975
    %1977 = vmatprep.mubr.bf16.mxu0 %v1482
    %1978 = vmatmul.mubr.bf16.gmra.mxu0 %v1481
    %v1979 = vpop.f32.mrf.mxu0
    %v1980 = vadd.f32 0.0, %v1979
    %v1981 = vpop.f32.mrf.mxu0
    %v1982 = vadd.f32 0.0, %v1981
    %v1983 = vpop.f32.mrf.mxu0
    %v1984 = vadd.f32 0.0, %v1983
    %v1985 = vpop.f32.mrf.mxu0
    %v1986 = vadd.f32 0.0, %v1985
    %1987 = vmatprep.mubr.bf16.mxu0 %v1484
    %1988 = vmatmul.mubr.bf16.gmra.mxu0 %v1483
    %v1989 = vpop.f32.mrf.mxu0
    %v1990 = vadd.f32 0.0, %v1989
    %v1991 = vpop.f32.mrf.mxu0
    %v1992 = vadd.f32 0.0, %v1991
    %v1993 = vpop.f32.mrf.mxu0
    %v1994 = vadd.f32 0.0, %v1993
    %v1995 = vpop.f32.mrf.mxu0
    %v1996 = vadd.f32 0.0, %v1995
    %1997 = vmatprep.mubr.bf16.mxu0 %v1486
    %1998 = vmatmul.mubr.bf16.gmra.mxu0 %v1485
    %v1999 = vpop.f32.mrf.mxu0
    %v2000 = vadd.f32 0.0, %v1999
    %v2001 = vpop.f32.mrf.mxu0
    %v2002 = vadd.f32 0.0, %v2001
    %v2003 = vpop.f32.mrf.mxu0
    %v2004 = vadd.f32 0.0, %v2003
    %v2005 = vpop.f32.mrf.mxu0
    %v2006 = vadd.f32 0.0, %v2005
    %2007 = vmatprep.mubr.bf16.mxu0 %v1488
    %2008 = vmatmul.mubr.bf16.gmra.mxu0 %v1487
    %v2009 = vpop.f32.mrf.mxu0
    %v2010 = vadd.f32 0.0, %v2009
    %v2011 = vpop.f32.mrf.mxu0
    %v2012 = vadd.f32 0.0, %v2011
    %v2013 = vpop.f32.mrf.mxu0
    %v2014 = vadd.f32 0.0, %v2013
    %v2015 = vpop.f32.mrf.mxu0
    %v2016 = vadd.f32 0.0, %v2015
    %2017 = vmatprep.mubr.bf16.mxu0 %v1490
    %2018 = vmatmul.mubr.bf16.gmra.mxu0 %v1489
    %v2019 = vpop.f32.mrf.mxu0
    %v2020 = vadd.f32 0.0, %v2019
    %v2021 = vpop.f32.mrf.mxu0
    %v2022 = vadd.f32 0.0, %v2021
    %v2023 = vpop.f32.mrf.mxu0
    %v2024 = vadd.f32 0.0, %v2023
    %v2025 = vpop.f32.mrf.mxu0
    %v2026 = vadd.f32 0.0, %v2025
    %2027 = vmatprep.mubr.bf16.mxu0 %v1492
    %2028 = vmatmul.mubr.bf16.gmra.mxu0 %v1491
    %v2029 = vpop.f32.mrf.mxu0
    %v2030 = vadd.f32 0.0, %v2029
    %v2031 = vpop.f32.mrf.mxu0
    %v2032 = vadd.f32 0.0, %v2031
    %v2033 = vpop.f32.mrf.mxu0
    %v2034 = vadd.f32 0.0, %v2033
    %v2035 = vpop.f32.mrf.mxu0
    %v2036 = vadd.f32 0.0, %v2035
    %2037 = vmatprep.mubr.bf16.mxu0 %v1494
    %2038 = vmatmul.mubr.bf16.gmra.mxu0 %v1493
    %v2039 = vpop.f32.mrf.mxu0
    %v2040 = vadd.f32 0.0, %v2039
    %v2041 = vpop.f32.mrf.mxu0
    %v2042 = vadd.f32 0.0, %v2041
    %v2043 = vpop.f32.mrf.mxu0
    %v2044 = vadd.f32 0.0, %v2043
    %v2045 = vpop.f32.mrf.mxu0
    %v2046 = vadd.f32 0.0, %v2045
    %2047 = vmatprep.mubr.bf16.mxu0 %v1496
    %2048 = vmatmul.mubr.bf16.gmra.mxu0 %v1495
    %v2049 = vpop.f32.mrf.mxu0
    %v2050 = vadd.f32 0.0, %v2049
    %v2051 = vpop.f32.mrf.mxu0
    %v2052 = vadd.f32 0.0, %v2051
    %v2053 = vpop.f32.mrf.mxu0
    %v2054 = vadd.f32 0.0, %v2053
    %v2055 = vpop.f32.mrf.mxu0
    %v2056 = vadd.f32 0.0, %v2055
    %2057 = vmatprep.mubr.bf16.mxu0 %v1498
    %2058 = vmatmul.mubr.bf16.gmra.mxu0 %v1497
    %v2059 = vpop.f32.mrf.mxu0
    %v2060 = vadd.f32 0.0, %v2059
    %v2061 = vpop.f32.mrf.mxu0
    %v2062 = vadd.f32 0.0, %v2061
    %v2063 = vpop.f32.mrf.mxu0
    %v2064 = vadd.f32 0.0, %v2063
    %v2065 = vpop.f32.mrf.mxu0
    %v2066 = vadd.f32 0.0, %v2065
    %2067 = vmatprep.mubr.bf16.mxu0 %v1500
    %2068 = vmatmul.mubr.bf16.gmra.mxu0 %v1499
    %v2069 = vpop.f32.mrf.mxu0
    %v2070 = vadd.f32 0.0, %v2069
    %v2071 = vpop.f32.mrf.mxu0
    %v2072 = vadd.f32 0.0, %v2071
    %v2073 = vpop.f32.mrf.mxu0
    %v2074 = vadd.f32 0.0, %v2073
    %v2075 = vpop.f32.mrf.mxu0
    %v2076 = vadd.f32 0.0, %v2075
    %2077 = vdwg.mxu0
    %2078 = vmatprep.subr.bf16.mxu0 %v1788
    %2079 = vmatpush1.bf16.msra.mxu0 %v1787
    %2080 = vmatprep.subr.bf16.mxu0 %v1784
    %2081 = vmatpush1.bf16.msra.mxu0 %v1783
    %2082 = vmatprep.subr.bf16.mxu0 %v1780
    %2083 = vmatpush1.bf16.msra.mxu0 %v1779
    %2084 = vmatprep.subr.bf16.mxu0 %v1776
    %2085 = vmatpush1.bf16.msra.mxu0 %v1775
    %2086 = vmatprep.subr.bf16.mxu0 %v1772
    %2087 = vmatpush1.bf16.msra.mxu0 %v1771
    %2088 = vmatprep.subr.bf16.mxu0 %v1768
    %2089 = vmatpush1.bf16.msra.mxu0 %v1767
    %2090 = vmatprep.subr.bf16.mxu0 %v1764
    %2091 = vmatpush1.bf16.msra.mxu0 %v1763
    %2092 = vmatprep.subr.bf16.mxu0 %v1760
    %2093 = vmatpush1.bf16.msra.mxu0 %v1759
    %2094 = vmatprep.subr.bf16.mxu0 %v1820
    %2095 = vmatpush2.bf16.msra.mxu0 %v1819
    %2096 = vmatprep.subr.bf16.mxu0 %v1816
    %2097 = vmatpush2.bf16.msra.mxu0 %v1815
    %2098 = vmatprep.subr.bf16.mxu0 %v1812
    %2099 = vmatpush2.bf16.msra.mxu0 %v1811
    %2100 = vmatprep.subr.bf16.mxu0 %v1808
    %2101 = vmatpush2.bf16.msra.mxu0 %v1807
    %2102 = vmatprep.subr.bf16.mxu0 %v1804
    %2103 = vmatpush2.bf16.msra.mxu0 %v1803
    %2104 = vmatprep.subr.bf16.mxu0 %v1800
    %2105 = vmatpush2.bf16.msra.mxu0 %v1799
    %2106 = vmatprep.subr.bf16.mxu0 %v1796
    %2107 = vmatpush2.bf16.msra.mxu0 %v1795
    %2108 = vmatprep.subr.bf16.mxu0 %v1792
    %2109 = vmatpush2.bf16.msra.mxu0 %v1791
    %2110 = vmatprep.mubr.bf16.mxu0 %v1470
    %2111 = vmatmul.mubr.bf16.gmra.mxu0 %v1469
    %v2112 = vpop.f32.mrf.mxu0
    %v2113 = vadd.f32 0.0, %v2112
    %v2114 = vpop.f32.mrf.mxu0
    %v2115 = vadd.f32 0.0, %v2114
    %v2116 = vpop.f32.mrf.mxu0
    %v2117 = vadd.f32 0.0, %v2116
    %v2118 = vpop.f32.mrf.mxu0
    %v2119 = vadd.f32 0.0, %v2118
    %2120 = vmatprep.mubr.bf16.mxu0 %v1472
    %2121 = vmatmul.mubr.bf16.gmra.mxu0 %v1471
    %v2122 = vpop.f32.mrf.mxu0
    %v2123 = vadd.f32 0.0, %v2122
    %v2124 = vpop.f32.mrf.mxu0
    %v2125 = vadd.f32 0.0, %v2124
    %v2126 = vpop.f32.mrf.mxu0
    %v2127 = vadd.f32 0.0, %v2126
    %v2128 = vpop.f32.mrf.mxu0
    %v2129 = vadd.f32 0.0, %v2128
    %2130 = vmatprep.mubr.bf16.mxu0 %v1474
    %2131 = vmatmul.mubr.bf16.gmra.mxu0 %v1473
    %v2132 = vpop.f32.mrf.mxu0
    %v2133 = vadd.f32 0.0, %v2132
    %v2134 = vpop.f32.mrf.mxu0
    %v2135 = vadd.f32 0.0, %v2134
    %v2136 = vpop.f32.mrf.mxu0
    %v2137 = vadd.f32 0.0, %v2136
    %v2138 = vpop.f32.mrf.mxu0
    %v2139 = vadd.f32 0.0, %v2138
    %2140 = vmatprep.mubr.bf16.mxu0 %v1476
    %2141 = vmatmul.mubr.bf16.gmra.mxu0 %v1475
    %v2142 = vpop.f32.mrf.mxu0
    %v2143 = vadd.f32 0.0, %v2142
    %v2144 = vpop.f32.mrf.mxu0
    %v2145 = vadd.f32 0.0, %v2144
    %v2146 = vpop.f32.mrf.mxu0
    %v2147 = vadd.f32 0.0, %v2146
    %v2148 = vpop.f32.mrf.mxu0
    %v2149 = vadd.f32 0.0, %v2148
    %2150 = vmatprep.mubr.bf16.mxu0 %v1478
    %2151 = vmatmul.mubr.bf16.gmra.mxu0 %v1477
    %v2152 = vpop.f32.mrf.mxu0
    %v2153 = vadd.f32 0.0, %v2152
    %v2154 = vpop.f32.mrf.mxu0
    %v2155 = vadd.f32 0.0, %v2154
    %v2156 = vpop.f32.mrf.mxu0
    %v2157 = vadd.f32 0.0, %v2156
    %v2158 = vpop.f32.mrf.mxu0
    %v2159 = vadd.f32 0.0, %v2158
    %2160 = vmatprep.mubr.bf16.mxu0 %v1480
    %2161 = vmatmul.mubr.bf16.gmra.mxu0 %v1479
    %v2162 = vpop.f32.mrf.mxu0
    %v2163 = vadd.f32 0.0, %v2162
    %v2164 = vpop.f32.mrf.mxu0
    %v2165 = vadd.f32 0.0, %v2164
    %v2166 = vpop.f32.mrf.mxu0
    %v2167 = vadd.f32 0.0, %v2166
    %v2168 = vpop.f32.mrf.mxu0
    %v2169 = vadd.f32 0.0, %v2168
    %2170 = vmatprep.mubr.bf16.mxu0 %v1482
    %2171 = vmatmul.mubr.bf16.gmra.mxu0 %v1481
    %v2172 = vpop.f32.mrf.mxu0
    %v2173 = vadd.f32 0.0, %v2172
    %v2174 = vpop.f32.mrf.mxu0
    %v2175 = vadd.f32 0.0, %v2174
    %v2176 = vpop.f32.mrf.mxu0
    %v2177 = vadd.f32 0.0, %v2176
    %v2178 = vpop.f32.mrf.mxu0
    %v2179 = vadd.f32 0.0, %v2178
    %2180 = vmatprep.mubr.bf16.mxu0 %v1484
    %2181 = vmatmul.mubr.bf16.gmra.mxu0 %v1483
    %v2182 = vpop.f32.mrf.mxu0
    %v2183 = vadd.f32 0.0, %v2182
    %v2184 = vpop.f32.mrf.mxu0
    %v2185 = vadd.f32 0.0, %v2184
    %v2186 = vpop.f32.mrf.mxu0
    %v2187 = vadd.f32 0.0, %v2186
    %v2188 = vpop.f32.mrf.mxu0
    %v2189 = vadd.f32 0.0, %v2188
    %2190 = vmatprep.mubr.bf16.mxu0 %v1486
    %2191 = vmatmul.mubr.bf16.gmra.mxu0 %v1485
    %v2192 = vpop.f32.mrf.mxu0
    %v2193 = vadd.f32 0.0, %v2192
    %v2194 = vpop.f32.mrf.mxu0
    %v2195 = vadd.f32 0.0, %v2194
    %v2196 = vpop.f32.mrf.mxu0
    %v2197 = vadd.f32 0.0, %v2196
    %v2198 = vpop.f32.mrf.mxu0
    %v2199 = vadd.f32 0.0, %v2198
    %2200 = vmatprep.mubr.bf16.mxu0 %v1488
    %2201 = vmatmul.mubr.bf16.gmra.mxu0 %v1487
    %v2202 = vpop.f32.mrf.mxu0
    %v2203 = vadd.f32 0.0, %v2202
    %v2204 = vpop.f32.mrf.mxu0
    %v2205 = vadd.f32 0.0, %v2204
    %v2206 = vpop.f32.mrf.mxu0
    %v2207 = vadd.f32 0.0, %v2206
    %v2208 = vpop.f32.mrf.mxu0
    %v2209 = vadd.f32 0.0, %v2208
    %2210 = vmatprep.mubr.bf16.mxu0 %v1490
    %2211 = vmatmul.mubr.bf16.gmra.mxu0 %v1489
    %v2212 = vpop.f32.mrf.mxu0
    %v2213 = vadd.f32 0.0, %v2212
    %v2214 = vpop.f32.mrf.mxu0
    %v2215 = vadd.f32 0.0, %v2214
    %v2216 = vpop.f32.mrf.mxu0
    %v2217 = vadd.f32 0.0, %v2216
    %v2218 = vpop.f32.mrf.mxu0
    %v2219 = vadd.f32 0.0, %v2218
    %2220 = vmatprep.mubr.bf16.mxu0 %v1492
    %2221 = vmatmul.mubr.bf16.gmra.mxu0 %v1491
    %v2222 = vpop.f32.mrf.mxu0
    %v2223 = vadd.f32 0.0, %v2222
    %v2224 = vpop.f32.mrf.mxu0
    %v2225 = vadd.f32 0.0, %v2224
    %v2226 = vpop.f32.mrf.mxu0
    %v2227 = vadd.f32 0.0, %v2226
    %v2228 = vpop.f32.mrf.mxu0
    %v2229 = vadd.f32 0.0, %v2228
    %2230 = vmatprep.mubr.bf16.mxu0 %v1494
    %2231 = vmatmul.mubr.bf16.gmra.mxu0 %v1493
    %v2232 = vpop.f32.mrf.mxu0
    %v2233 = vadd.f32 0.0, %v2232
    %v2234 = vpop.f32.mrf.mxu0
    %v2235 = vadd.f32 0.0, %v2234
    %v2236 = vpop.f32.mrf.mxu0
    %v2237 = vadd.f32 0.0, %v2236
    %v2238 = vpop.f32.mrf.mxu0
    %v2239 = vadd.f32 0.0, %v2238
    %2240 = vmatprep.mubr.bf16.mxu0 %v1496
    %2241 = vmatmul.mubr.bf16.gmra.mxu0 %v1495
    %v2242 = vpop.f32.mrf.mxu0
    %v2243 = vadd.f32 0.0, %v2242
    %v2244 = vpop.f32.mrf.mxu0
    %v2245 = vadd.f32 0.0, %v2244
    %v2246 = vpop.f32.mrf.mxu0
    %v2247 = vadd.f32 0.0, %v2246
    %v2248 = vpop.f32.mrf.mxu0
    %v2249 = vadd.f32 0.0, %v2248
    %2250 = vmatprep.mubr.bf16.mxu0 %v1498
    %2251 = vmatmul.mubr.bf16.gmra.mxu0 %v1497
    %v2252 = vpop.f32.mrf.mxu0
    %v2253 = vadd.f32 0.0, %v2252
    %v2254 = vpop.f32.mrf.mxu0
    %v2255 = vadd.f32 0.0, %v2254
    %v2256 = vpop.f32.mrf.mxu0
    %v2257 = vadd.f32 0.0, %v2256
    %v2258 = vpop.f32.mrf.mxu0
    %v2259 = vadd.f32 0.0, %v2258
    %2260 = vmatprep.mubr.bf16.mxu0 %v1500
    %2261 = vmatmul.mubr.bf16.gmra.mxu0 %v1499
    %v2262 = vpop.f32.mrf.mxu0
    %v2263 = vadd.f32 0.0, %v2262
    %v2264 = vpop.f32.mrf.mxu0
    %v2265 = vadd.f32 0.0, %v2264
    %v2266 = vpop.f32.mrf.mxu0
    %v2267 = vadd.f32 0.0, %v2266
    %v2268 = vpop.f32.mrf.mxu0
    %v2269 = vadd.f32 0.0, %v2268
    %2270 = vdwg.mxu0
    %v2275 = vcombine.low %v1422, %v1424
    %v2276 = vcombine.high %v1422, %v1424
    %v2277 = vcombine.low %v1463, %v1465
    %v2278 = vcombine.high %v1463, %v1465
    %v2280 = vunpack.c.l.s4 1966171168
    %v2281 = vunpack.c.0.s8 %v2280
    %v2282 = vlaneseq
    %v2283 = vshrl.u32 %v2282, 7
    %v2284 = vsub.s32 %v2281, %v2283
    %v2285 = vrot.slane %v2275, %v2284
    %v2287 = vunpack.c.l.s4 1966171168
    %v2288 = vunpack.c.0.s8 %v2287
    %v2289 = vlaneseq
    %v2290 = vshrl.u32 %v2289, 7
    %v2291 = vsub.s32 %v2288, %v2290
    %v2292 = vrot.slane %v2276, %v2291
    %v2294 = vunpack.c.l.s4 1966171168
    %v2295 = vunpack.c.0.s8 %v2294
    %v2296 = vlaneseq
    %v2297 = vshrl.u32 %v2296, 7
    %v2298 = vsub.s32 %v2295, %v2297
    %v2299 = vrot.slane %v2277, %v2298
    %v2301 = vunpack.c.l.s4 1966171168
    %v2302 = vunpack.c.0.s8 %v2301
    %v2303 = vlaneseq
    %v2304 = vshrl.u32 %v2303, 7
    %v2305 = vsub.s32 %v2302, %v2304
    %v2306 = vrot.slane %v2278, %v2305
    %v2307 = vcombine.low %v2285, %v2299
    %v2308 = vcombine.high %v2285, %v2299
    %v2309 = vcombine.low %v2292, %v2306
    %v2310 = vcombine.high %v2292, %v2306
    %v2312 = vunpack.c.l.s4 1966171168
    %v2313 = vunpack.c.0.s8 %v2312
    %v2314 = vlaneseq
    %v2315 = vshrl.u32 %v2314, 7
    %v2316 = vsub.s32 %v2313, %v2315
    %v2317 = vrot.slane %v2307, %v2316
    %v2319 = vunpack.c.l.s4 1966171168
    %v2320 = vunpack.c.0.s8 %v2319
    %v2321 = vlaneseq
    %v2322 = vshrl.u32 %v2321, 7
    %v2323 = vsub.s32 %v2320, %v2322
    %v2324 = vrot.slane %v2309, %v2323
    %v2326 = vunpack.c.l.s4 1966171168
    %v2327 = vunpack.c.0.s8 %v2326
    %v2328 = vlaneseq
    %v2329 = vshrl.u32 %v2328, 7
    %v2330 = vsub.s32 %v2327, %v2329
    %v2331 = vrot.slane %v2308, %v2330
    %v2333 = vunpack.c.l.s4 1966171168
    %v2334 = vunpack.c.0.s8 %v2333
    %v2335 = vlaneseq
    %v2336 = vshrl.u32 %v2335, 7
    %v2337 = vsub.s32 %v2334, %v2336
    %v2338 = vrot.slane %v2310, %v2337
    %v2339 = vcombine.high %v2317, %v2317
    %v2340 = vcombine.high %v2324, %v2324
    %v2341 = vcombine.high %v2331, %v2331
    %v2342 = vcombine.high %v2338, %v2338
    %v2343 = vlaneseq
    %v2344 = vshrl.u32 %v2343, 7
    %v2345 = vsub.s32 0, %v2344
    %v2346 = vrot.slane %v2317, %v2345
    %v2347 = vlaneseq
    %v2348 = vshrl.u32 %v2347, 7
    %v2349 = vsub.s32 1, %v2348
    %v2350 = vrot.slane %v2317, %v2349
    %v2351 = vlaneseq
    %v2352 = vshrl.u32 %v2351, 7
    %v2353 = vsub.s32 2, %v2352
    %v2354 = vrot.slane %v2317, %v2353
    %v2355 = vlaneseq
    %v2356 = vshrl.u32 %v2355, 7
    %v2357 = vsub.s32 3, %v2356
    %v2358 = vrot.slane %v2317, %v2357
    %v2359 = vlaneseq
    %v2360 = vshrl.u32 %v2359, 7
    %v2361 = vsub.s32 0, %v2360
    %v2362 = vrot.slane %v2331, %v2361
    %v2363 = vlaneseq
    %v2364 = vshrl.u32 %v2363, 7
    %v2365 = vsub.s32 1, %v2364
    %v2366 = vrot.slane %v2331, %v2365
    %v2367 = vlaneseq
    %v2368 = vshrl.u32 %v2367, 7
    %v2369 = vsub.s32 2, %v2368
    %v2370 = vrot.slane %v2331, %v2369
    %v2371 = vlaneseq
    %v2372 = vshrl.u32 %v2371, 7
    %v2373 = vsub.s32 3, %v2372
    %v2374 = vrot.slane %v2331, %v2373
    %v2375 = vlaneseq
    %v2376 = vshrl.u32 %v2375, 7
    %v2377 = vsub.s32 0, %v2376
    %v2378 = vrot.slane %v2339, %v2377
    %v2379 = vlaneseq
    %v2380 = vshrl.u32 %v2379, 7
    %v2381 = vsub.s32 1, %v2380
    %v2382 = vrot.slane %v2339, %v2381
    %v2383 = vlaneseq
    %v2384 = vshrl.u32 %v2383, 7
    %v2385 = vsub.s32 2, %v2384
    %v2386 = vrot.slane %v2339, %v2385
    %v2387 = vlaneseq
    %v2388 = vshrl.u32 %v2387, 7
    %v2389 = vsub.s32 3, %v2388
    %v2390 = vrot.slane %v2339, %v2389
    %v2391 = vlaneseq
    %v2392 = vshrl.u32 %v2391, 7
    %v2393 = vsub.s32 0, %v2392
    %v2394 = vrot.slane %v2341, %v2393
    %v2395 = vlaneseq
    %v2396 = vshrl.u32 %v2395, 7
    %v2397 = vsub.s32 1, %v2396
    %v2398 = vrot.slane %v2341, %v2397
    %v2399 = vlaneseq
    %v2400 = vshrl.u32 %v2399, 7
    %v2401 = vsub.s32 2, %v2400
    %v2402 = vrot.slane %v2341, %v2401
    %v2403 = vlaneseq
    %v2404 = vshrl.u32 %v2403, 7
    %v2405 = vsub.s32 3, %v2404
    %v2406 = vrot.slane %v2341, %v2405
    %v2407 = vlaneseq
    %v2408 = vshrl.u32 %v2407, 7
    %v2409 = vsub.s32 0, %v2408
    %v2410 = vrot.slane %v2324, %v2409
    %v2411 = vlaneseq
    %v2412 = vshrl.u32 %v2411, 7
    %v2413 = vsub.s32 1, %v2412
    %v2414 = vrot.slane %v2324, %v2413
    %v2415 = vlaneseq
    %v2416 = vshrl.u32 %v2415, 7
    %v2417 = vsub.s32 2, %v2416
    %v2418 = vrot.slane %v2324, %v2417
    %v2419 = vlaneseq
    %v2420 = vshrl.u32 %v2419, 7
    %v2421 = vsub.s32 3, %v2420
    %v2422 = vrot.slane %v2324, %v2421
    %v2423 = vlaneseq
    %v2424 = vshrl.u32 %v2423, 7
    %v2425 = vsub.s32 0, %v2424
    %v2426 = vrot.slane %v2338, %v2425
    %v2427 = vlaneseq
    %v2428 = vshrl.u32 %v2427, 7
    %v2429 = vsub.s32 1, %v2428
    %v2430 = vrot.slane %v2338, %v2429
    %v2431 = vlaneseq
    %v2432 = vshrl.u32 %v2431, 7
    %v2433 = vsub.s32 2, %v2432
    %v2434 = vrot.slane %v2338, %v2433
    %v2435 = vlaneseq
    %v2436 = vshrl.u32 %v2435, 7
    %v2437 = vsub.s32 3, %v2436
    %v2438 = vrot.slane %v2338, %v2437
    %v2439 = vlaneseq
    %v2440 = vshrl.u32 %v2439, 7
    %v2441 = vsub.s32 0, %v2440
    %v2442 = vrot.slane %v2340, %v2441
    %v2443 = vlaneseq
    %v2444 = vshrl.u32 %v2443, 7
    %v2445 = vsub.s32 1, %v2444
    %v2446 = vrot.slane %v2340, %v2445
    %v2447 = vlaneseq
    %v2448 = vshrl.u32 %v2447, 7
    %v2449 = vsub.s32 2, %v2448
    %v2450 = vrot.slane %v2340, %v2449
    %v2451 = vlaneseq
    %v2452 = vshrl.u32 %v2451, 7
    %v2453 = vsub.s32 3, %v2452
    %v2454 = vrot.slane %v2340, %v2453
    %v2455 = vlaneseq
    %v2456 = vshrl.u32 %v2455, 7
    %v2457 = vsub.s32 0, %v2456
    %v2458 = vrot.slane %v2342, %v2457
    %v2459 = vlaneseq
    %v2460 = vshrl.u32 %v2459, 7
    %v2461 = vsub.s32 1, %v2460
    %v2462 = vrot.slane %v2342, %v2461
    %v2463 = vlaneseq
    %v2464 = vshrl.u32 %v2463, 7
    %v2465 = vsub.s32 2, %v2464
    %v2466 = vrot.slane %v2342, %v2465
    %v2467 = vlaneseq
    %v2468 = vshrl.u32 %v2467, 7
    %v2469 = vsub.s32 3, %v2468
    %v2470 = vrot.slane %v2342, %v2469
    %v2503 = vadd.f32 %v1920, %v2346
    %v2504 = vadd.f32 %v1922, %v2350
    %v2505 = vadd.f32 %v2113, %v2354
    %v2506 = vadd.f32 %v2115, %v2358
    %v2507 = vadd.f32 %v1924, %v2346
    %v2508 = vadd.f32 %v1926, %v2350
    %v2509 = vadd.f32 %v2117, %v2354
    %v2510 = vadd.f32 %v2119, %v2358
    %v2511 = vadd.f32 %v1930, %v2346
    %v2512 = vadd.f32 %v1932, %v2350
    %v2513 = vadd.f32 %v2123, %v2354
    %v2514 = vadd.f32 %v2125, %v2358
    %v2515 = vadd.f32 %v1934, %v2346
    %v2516 = vadd.f32 %v1936, %v2350
    %v2517 = vadd.f32 %v2127, %v2354
    %v2518 = vadd.f32 %v2129, %v2358
    %v2519 = vadd.f32 %v1940, %v2362
    %v2520 = vadd.f32 %v1942, %v2366
    %v2521 = vadd.f32 %v2133, %v2370
    %v2522 = vadd.f32 %v2135, %v2374
    %v2523 = vadd.f32 %v1944, %v2362
    %v2524 = vadd.f32 %v1946, %v2366
    %v2525 = vadd.f32 %v2137, %v2370
    %v2526 = vadd.f32 %v2139, %v2374
    %v2527 = vadd.f32 %v1950, %v2362
    %v2528 = vadd.f32 %v1952, %v2366
    %v2529 = vadd.f32 %v2143, %v2370
    %v2530 = vadd.f32 %v2145, %v2374
    %v2531 = vadd.f32 %v1954, %v2362
    %v2532 = vadd.f32 %v1956, %v2366
    %v2533 = vadd.f32 %v2147, %v2370
    %v2534 = vadd.f32 %v2149, %v2374
    %v2535 = vadd.f32 %v1960, %v2378
    %v2536 = vadd.f32 %v1962, %v2382
    %v2537 = vadd.f32 %v2153, %v2386
    %v2538 = vadd.f32 %v2155, %v2390
    %v2539 = vadd.f32 %v1964, %v2378
    %v2540 = vadd.f32 %v1966, %v2382
    %v2541 = vadd.f32 %v2157, %v2386
    %v2542 = vadd.f32 %v2159, %v2390
    %v2543 = vadd.f32 %v1970, %v2378
    %v2544 = vadd.f32 %v1972, %v2382
    %v2545 = vadd.f32 %v2163, %v2386
    %v2546 = vadd.f32 %v2165, %v2390
    %v2547 = vadd.f32 %v1974, %v2378
    %v2548 = vadd.f32 %v1976, %v2382
    %v2549 = vadd.f32 %v2167, %v2386
    %v2550 = vadd.f32 %v2169, %v2390
    %v2551 = vadd.f32 %v1980, %v2394
    %v2552 = vadd.f32 %v1982, %v2398
    %v2553 = vadd.f32 %v2173, %v2402
    %v2554 = vadd.f32 %v2175, %v2406
    %v2555 = vadd.f32 %v1984, %v2394
    %v2556 = vadd.f32 %v1986, %v2398
    %v2557 = vadd.f32 %v2177, %v2402
    %v2558 = vadd.f32 %v2179, %v2406
    %v2559 = vadd.f32 %v1990, %v2394
    %v2560 = vadd.f32 %v1992, %v2398
    %v2561 = vadd.f32 %v2183, %v2402
    %v2562 = vadd.f32 %v2185, %v2406
    %v2563 = vadd.f32 %v1994, %v2394
    %v2564 = vadd.f32 %v1996, %v2398
    %v2565 = vadd.f32 %v2187, %v2402
    %v2566 = vadd.f32 %v2189, %v2406
    %v2567 = vadd.f32 %v2000, %v2410
    %v2568 = vadd.f32 %v2002, %v2414
    %v2569 = vadd.f32 %v2193, %v2418
    %v2570 = vadd.f32 %v2195, %v2422
    %v2571 = vadd.f32 %v2004, %v2410
    %v2572 = vadd.f32 %v2006, %v2414
    %v2573 = vadd.f32 %v2197, %v2418
    %v2574 = vadd.f32 %v2199, %v2422
    %v2575 = vadd.f32 %v2010, %v2410
    %v2576 = vadd.f32 %v2012, %v2414
    %v2577 = vadd.f32 %v2203, %v2418
    %v2578 = vadd.f32 %v2205, %v2422
    %v2579 = vadd.f32 %v2014, %v2410
    %v2580 = vadd.f32 %v2016, %v2414
    %v2581 = vadd.f32 %v2207, %v2418
    %v2582 = vadd.f32 %v2209, %v2422
    %v2583 = vadd.f32 %v2020, %v2426
    %v2584 = vadd.f32 %v2022, %v2430
    %v2585 = vadd.f32 %v2213, %v2434
    %v2586 = vadd.f32 %v2215, %v2438
    %v2587 = vadd.f32 %v2024, %v2426
    %v2588 = vadd.f32 %v2026, %v2430
    %v2589 = vadd.f32 %v2217, %v2434
    %v2590 = vadd.f32 %v2219, %v2438
    %v2591 = vadd.f32 %v2030, %v2426
    %v2592 = vadd.f32 %v2032, %v2430
    %v2593 = vadd.f32 %v2223, %v2434
    %v2594 = vadd.f32 %v2225, %v2438
    %v2595 = vadd.f32 %v2034, %v2426
    %v2596 = vadd.f32 %v2036, %v2430
    %v2597 = vadd.f32 %v2227, %v2434
    %v2598 = vadd.f32 %v2229, %v2438
    %v2599 = vadd.f32 %v2040, %v2442
    %v2600 = vadd.f32 %v2042, %v2446
    %v2601 = vadd.f32 %v2233, %v2450
    %v2602 = vadd.f32 %v2235, %v2454
    %v2603 = vadd.f32 %v2044, %v2442
    %v2604 = vadd.f32 %v2046, %v2446
    %v2605 = vadd.f32 %v2237, %v2450
    %v2606 = vadd.f32 %v2239, %v2454
    %v2607 = vadd.f32 %v2050, %v2442
    %v2608 = vadd.f32 %v2052, %v2446
    %v2609 = vadd.f32 %v2243, %v2450
    %v2610 = vadd.f32 %v2245, %v2454
    %v2611 = vadd.f32 %v2054, %v2442
    %v2612 = vadd.f32 %v2056, %v2446
    %v2613 = vadd.f32 %v2247, %v2450
    %v2614 = vadd.f32 %v2249, %v2454
    %v2615 = vadd.f32 %v2060, %v2458
    %v2616 = vadd.f32 %v2062, %v2462
    %v2617 = vadd.f32 %v2253, %v2466
    %v2618 = vadd.f32 %v2255, %v2470
    %v2619 = vadd.f32 %v2064, %v2458
    %v2620 = vadd.f32 %v2066, %v2462
    %v2621 = vadd.f32 %v2257, %v2466
    %v2622 = vadd.f32 %v2259, %v2470
    %v2623 = vadd.f32 %v2070, %v2458
    %v2624 = vadd.f32 %v2072, %v2462
    %v2625 = vadd.f32 %v2263, %v2466
    %v2626 = vadd.f32 %v2265, %v2470
    %v2627 = vadd.f32 %v2074, %v2458
    %v2628 = vadd.f32 %v2076, %v2462
    %v2629 = vadd.f32 %v2267, %v2466
    %v2630 = vadd.f32 %v2269, %v2470
    %v2631 = vmax.f32 %v2503, 0.0
    %v2632 = vmax.f32 %v2504, 0.0
    %v2633 = vmax.f32 %v2505, 0.0
    %v2634 = vmax.f32 %v2506, 0.0
    %v2635 = vmax.f32 %v2507, 0.0
    %v2636 = vmax.f32 %v2508, 0.0
    %v2637 = vmax.f32 %v2509, 0.0
    %v2638 = vmax.f32 %v2510, 0.0
    %v2639 = vmax.f32 %v2511, 0.0
    %v2640 = vmax.f32 %v2512, 0.0
    %v2641 = vmax.f32 %v2513, 0.0
    %v2642 = vmax.f32 %v2514, 0.0
    %v2643 = vmax.f32 %v2515, 0.0
    %v2644 = vmax.f32 %v2516, 0.0
    %v2645 = vmax.f32 %v2517, 0.0
    %v2646 = vmax.f32 %v2518, 0.0
    %v2647 = vmax.f32 %v2519, 0.0
    %v2648 = vmax.f32 %v2520, 0.0
    %v2649 = vmax.f32 %v2521, 0.0
    %v2650 = vmax.f32 %v2522, 0.0
    %v2651 = vmax.f32 %v2523, 0.0
    %v2652 = vmax.f32 %v2524, 0.0
    %v2653 = vmax.f32 %v2525, 0.0
    %v2654 = vmax.f32 %v2526, 0.0
    %v2655 = vmax.f32 %v2527, 0.0
    %v2656 = vmax.f32 %v2528, 0.0
    %v2657 = vmax.f32 %v2529, 0.0
    %v2658 = vmax.f32 %v2530, 0.0
    %v2659 = vmax.f32 %v2531, 0.0
    %v2660 = vmax.f32 %v2532, 0.0
    %v2661 = vmax.f32 %v2533, 0.0
    %v2662 = vmax.f32 %v2534, 0.0
    %v2663 = vmax.f32 %v2535, 0.0
    %v2664 = vmax.f32 %v2536, 0.0
    %v2665 = vmax.f32 %v2537, 0.0
    %v2666 = vmax.f32 %v2538, 0.0
    %v2667 = vmax.f32 %v2539, 0.0
    %v2668 = vmax.f32 %v2540, 0.0
    %v2669 = vmax.f32 %v2541, 0.0
    %v2670 = vmax.f32 %v2542, 0.0
    %v2671 = vmax.f32 %v2543, 0.0
    %v2672 = vmax.f32 %v2544, 0.0
    %v2673 = vmax.f32 %v2545, 0.0
    %v2674 = vmax.f32 %v2546, 0.0
    %v2675 = vmax.f32 %v2547, 0.0
    %v2676 = vmax.f32 %v2548, 0.0
    %v2677 = vmax.f32 %v2549, 0.0
    %v2678 = vmax.f32 %v2550, 0.0
    %v2679 = vmax.f32 %v2551, 0.0
    %v2680 = vmax.f32 %v2552, 0.0
    %v2681 = vmax.f32 %v2553, 0.0
    %v2682 = vmax.f32 %v2554, 0.0
    %v2683 = vmax.f32 %v2555, 0.0
    %v2684 = vmax.f32 %v2556, 0.0
    %v2685 = vmax.f32 %v2557, 0.0
    %v2686 = vmax.f32 %v2558, 0.0
    %v2687 = vmax.f32 %v2559, 0.0
    %v2688 = vmax.f32 %v2560, 0.0
    %v2689 = vmax.f32 %v2561, 0.0
    %v2690 = vmax.f32 %v2562, 0.0
    %v2691 = vmax.f32 %v2563, 0.0
    %v2692 = vmax.f32 %v2564, 0.0
    %v2693 = vmax.f32 %v2565, 0.0
    %v2694 = vmax.f32 %v2566, 0.0
    %v2695 = vmax.f32 %v2567, 0.0
    %v2696 = vmax.f32 %v2568, 0.0
    %v2697 = vmax.f32 %v2569, 0.0
    %v2698 = vmax.f32 %v2570, 0.0
    %v2699 = vmax.f32 %v2571, 0.0
    %v2700 = vmax.f32 %v2572, 0.0
    %v2701 = vmax.f32 %v2573, 0.0
    %v2702 = vmax.f32 %v2574, 0.0
    %v2703 = vmax.f32 %v2575, 0.0
    %v2704 = vmax.f32 %v2576, 0.0
    %v2705 = vmax.f32 %v2577, 0.0
    %v2706 = vmax.f32 %v2578, 0.0
    %v2707 = vmax.f32 %v2579, 0.0
    %v2708 = vmax.f32 %v2580, 0.0
    %v2709 = vmax.f32 %v2581, 0.0
    %v2710 = vmax.f32 %v2582, 0.0
    %v2711 = vmax.f32 %v2583, 0.0
    %v2712 = vmax.f32 %v2584, 0.0
    %v2713 = vmax.f32 %v2585, 0.0
    %v2714 = vmax.f32 %v2586, 0.0
    %v2715 = vmax.f32 %v2587, 0.0
    %v2716 = vmax.f32 %v2588, 0.0
    %v2717 = vmax.f32 %v2589, 0.0
    %v2718 = vmax.f32 %v2590, 0.0
    %v2719 = vmax.f32 %v2591, 0.0
    %v2720 = vmax.f32 %v2592, 0.0
    %v2721 = vmax.f32 %v2593, 0.0
    %v2722 = vmax.f32 %v2594, 0.0
    %v2723 = vmax.f32 %v2595, 0.0
    %v2724 = vmax.f32 %v2596, 0.0
    %v2725 = vmax.f32 %v2597, 0.0
    %v2726 = vmax.f32 %v2598, 0.0
    %v2727 = vmax.f32 %v2599, 0.0
    %v2728 = vmax.f32 %v2600, 0.0
    %v2729 = vmax.f32 %v2601, 0.0
    %v2730 = vmax.f32 %v2602, 0.0
    %v2731 = vmax.f32 %v2603, 0.0
    %v2732 = vmax.f32 %v2604, 0.0
    %v2733 = vmax.f32 %v2605, 0.0
    %v2734 = vmax.f32 %v2606, 0.0
    %v2735 = vmax.f32 %v2607, 0.0
    %v2736 = vmax.f32 %v2608, 0.0
    %v2737 = vmax.f32 %v2609, 0.0
    %v2738 = vmax.f32 %v2610, 0.0
    %v2739 = vmax.f32 %v2611, 0.0
    %v2740 = vmax.f32 %v2612, 0.0
    %v2741 = vmax.f32 %v2613, 0.0
    %v2742 = vmax.f32 %v2614, 0.0
    %v2743 = vmax.f32 %v2615, 0.0
    %v2744 = vmax.f32 %v2616, 0.0
    %v2745 = vmax.f32 %v2617, 0.0
    %v2746 = vmax.f32 %v2618, 0.0
    %v2747 = vmax.f32 %v2619, 0.0
    %v2748 = vmax.f32 %v2620, 0.0
    %v2749 = vmax.f32 %v2621, 0.0
    %v2750 = vmax.f32 %v2622, 0.0
    %v2751 = vmax.f32 %v2623, 0.0
    %v2752 = vmax.f32 %v2624, 0.0
    %v2753 = vmax.f32 %v2625, 0.0
    %v2754 = vmax.f32 %v2626, 0.0
    %v2755 = vmax.f32 %v2627, 0.0
    %v2756 = vmax.f32 %v2628, 0.0
    %v2757 = vmax.f32 %v2629, 0.0
    %v2758 = vmax.f32 %v2630, 0.0
    %v2759 = vpack.c.bf16 %v2635, %v2631
    %v2760 = vpack.c.bf16 %v2636, %v2632
    %v2761 = vpack.c.bf16 %v2637, %v2633
    %v2762 = vpack.c.bf16 %v2638, %v2634
    %v2763 = vpack.c.bf16 %v2643, %v2639
    %v2764 = vpack.c.bf16 %v2644, %v2640
    %v2765 = vpack.c.bf16 %v2645, %v2641
    %v2766 = vpack.c.bf16 %v2646, %v2642
    %v2767 = vpack.c.bf16 %v2651, %v2647
    %v2768 = vpack.c.bf16 %v2652, %v2648
    %v2769 = vpack.c.bf16 %v2653, %v2649
    %v2770 = vpack.c.bf16 %v2654, %v2650
    %v2771 = vpack.c.bf16 %v2659, %v2655
    %v2772 = vpack.c.bf16 %v2660, %v2656
    %v2773 = vpack.c.bf16 %v2661, %v2657
    %v2774 = vpack.c.bf16 %v2662, %v2658
    %v2775 = vpack.c.bf16 %v2667, %v2663
    %v2776 = vpack.c.bf16 %v2668, %v2664
    %v2777 = vpack.c.bf16 %v2669, %v2665
    %v2778 = vpack.c.bf16 %v2670, %v2666
    %v2779 = vpack.c.bf16 %v2675, %v2671
    %v2780 = vpack.c.bf16 %v2676, %v2672
    %v2781 = vpack.c.bf16 %v2677, %v2673
    %v2782 = vpack.c.bf16 %v2678, %v2674
    %v2783 = vpack.c.bf16 %v2683, %v2679
    %v2784 = vpack.c.bf16 %v2684, %v2680
    %v2785 = vpack.c.bf16 %v2685, %v2681
    %v2786 = vpack.c.bf16 %v2686, %v2682
    %v2787 = vpack.c.bf16 %v2691, %v2687
    %v2788 = vpack.c.bf16 %v2692, %v2688
    %v2789 = vpack.c.bf16 %v2693, %v2689
    %v2790 = vpack.c.bf16 %v2694, %v2690
    %v2791 = vpack.c.bf16 %v2699, %v2695
    %v2792 = vpack.c.bf16 %v2700, %v2696
    %v2793 = vpack.c.bf16 %v2701, %v2697
    %v2794 = vpack.c.bf16 %v2702, %v2698
    %v2795 = vpack.c.bf16 %v2707, %v2703
    %v2796 = vpack.c.bf16 %v2708, %v2704
    %v2797 = vpack.c.bf16 %v2709, %v2705
    %v2798 = vpack.c.bf16 %v2710, %v2706
    %v2799 = vpack.c.bf16 %v2715, %v2711
    %v2800 = vpack.c.bf16 %v2716, %v2712
    %v2801 = vpack.c.bf16 %v2717, %v2713
    %v2802 = vpack.c.bf16 %v2718, %v2714
    %v2803 = vpack.c.bf16 %v2723, %v2719
    %v2804 = vpack.c.bf16 %v2724, %v2720
    %v2805 = vpack.c.bf16 %v2725, %v2721
    %v2806 = vpack.c.bf16 %v2726, %v2722
    %v2807 = vpack.c.bf16 %v2731, %v2727
    %v2808 = vpack.c.bf16 %v2732, %v2728
    %v2809 = vpack.c.bf16 %v2733, %v2729
    %v2810 = vpack.c.bf16 %v2734, %v2730
    %v2811 = vpack.c.bf16 %v2739, %v2735
    %v2812 = vpack.c.bf16 %v2740, %v2736
    %v2813 = vpack.c.bf16 %v2741, %v2737
    %v2814 = vpack.c.bf16 %v2742, %v2738
    %v2815 = vpack.c.bf16 %v2747, %v2743
    %v2816 = vpack.c.bf16 %v2748, %v2744
    %v2817 = vpack.c.bf16 %v2749, %v2745
    %v2818 = vpack.c.bf16 %v2750, %v2746
    %v2819 = vpack.c.bf16 %v2755, %v2751
    %v2820 = vpack.c.bf16 %v2756, %v2752
    %v2821 = vpack.c.bf16 %v2757, %v2753
    %v2822 = vpack.c.bf16 %v2758, %v2754
    %v2823 = vld [vmem:[%s6] sm:$0xf]
    %v2824 = vld [vmem:[%s6 + $0x4] sm:$0xf]
    %v2825 = vld [vmem:[%s6 + $0x8] sm:$0xf]
    %v2826 = vld [vmem:[%s6 + $0xc] sm:$0xf]
    %v2827 = vld [vmem:[%s6 + $0x10] sm:$0xf]
    %v2828 = vld [vmem:[%s6 + $0x14] sm:$0xf]
    %v2829 = vld [vmem:[%s6 + $0x18] sm:$0xf]
    %v2830 = vld [vmem:[%s6 + $0x1c] sm:$0xf]
    %v2831 = vld [vmem:[%s6 + $0x20] sm:$0xf]
    %v2832 = vld [vmem:[%s6 + $0x24] sm:$0xf]
    %v2833 = vld [vmem:[%s6 + $0x28] sm:$0xf]
    %v2834 = vld [vmem:[%s6 + $0x2c] sm:$0xf]
    %v2835 = vld [vmem:[%s6 + $0x30] sm:$0xf]
    %v2836 = vld [vmem:[%s6 + $0x34] sm:$0xf]
    %v2837 = vld [vmem:[%s6 + $0x38] sm:$0xf]
    %v2838 = vld [vmem:[%s6 + $0x3c] sm:$0xf]
    %v2839 = vld [vmem:[%s6 + $0x40] sm:$0xf]
    %v2840 = vld [vmem:[%s6 + $0x44] sm:$0xf]
    %v2841 = vld [vmem:[%s6 + $0x48] sm:$0xf]
    %v2842 = vld [vmem:[%s6 + $0x4c] sm:$0xf]
    %v2843 = vld [vmem:[%s6 + $0x50] sm:$0xf]
    %v2844 = vld [vmem:[%s6 + $0x54] sm:$0xf]
    %v2845 = vld [vmem:[%s6 + $0x58] sm:$0xf]
    %v2846 = vld [vmem:[%s6 + $0x5c] sm:$0xf]
    %v2847 = vld [vmem:[%s6 + $0x60] sm:$0xf]
    %v2848 = vld [vmem:[%s6 + $0x64] sm:$0xf]
    %v2849 = vld [vmem:[%s6 + $0x68] sm:$0xf]
    %v2850 = vld [vmem:[%s6 + $0x6c] sm:$0xf]
    %v2851 = vld [vmem:[%s6 + $0x70] sm:$0xf]
    %v2852 = vld [vmem:[%s6 + $0x74] sm:$0xf]
    %v2853 = vld [vmem:[%s6 + $0x78] sm:$0xf]
    %v2854 = vld [vmem:[%s6 + $0x7c] sm:$0xf]
    %v2855 = vld [vmem:[%s6 + $0x80] sm:$0xf]
    %v2856 = vld [vmem:[%s6 + $0x84] sm:$0xf]
    %v2857 = vld [vmem:[%s6 + $0x88] sm:$0xf]
    %v2858 = vld [vmem:[%s6 + $0x8c] sm:$0xf]
    %v2859 = vld [vmem:[%s6 + $0x90] sm:$0xf]
    %v2860 = vld [vmem:[%s6 + $0x94] sm:$0xf]
    %v2861 = vld [vmem:[%s6 + $0x98] sm:$0xf]
    %v2862 = vld [vmem:[%s6 + $0x9c] sm:$0xf]
    %v2863 = vld [vmem:[%s6 + $0xa0] sm:$0xf]
    %v2864 = vld [vmem:[%s6 + $0xa4] sm:$0xf]
    %v2865 = vld [vmem:[%s6 + $0xa8] sm:$0xf]
    %v2866 = vld [vmem:[%s6 + $0xac] sm:$0xf]
    %v2867 = vld [vmem:[%s6 + $0xb0] sm:$0xf]
    %v2868 = vld [vmem:[%s6 + $0xb4] sm:$0xf]
    %v2869 = vld [vmem:[%s6 + $0xb8] sm:$0xf]
    %v2870 = vld [vmem:[%s6 + $0xbc] sm:$0xf]
    %v2871 = vld [vmem:[%s6 + $0xc0] sm:$0xf]
    %v2872 = vld [vmem:[%s6 + $0xc4] sm:$0xf]
    %v2873 = vld [vmem:[%s6 + $0xc8] sm:$0xf]
    %v2874 = vld [vmem:[%s6 + $0xcc] sm:$0xf]
    %v2875 = vld [vmem:[%s6 + $0xd0] sm:$0xf]
    %v2876 = vld [vmem:[%s6 + $0xd4] sm:$0xf]
    %v2877 = vld [vmem:[%s6 + $0xd8] sm:$0xf]
    %v2878 = vld [vmem:[%s6 + $0xdc] sm:$0xf]
    %v2879 = vld [vmem:[%s6 + $0xe0] sm:$0xf]
    %v2880 = vld [vmem:[%s6 + $0xe4] sm:$0xf]
    %v2881 = vld [vmem:[%s6 + $0xe8] sm:$0xf]
    %v2882 = vld [vmem:[%s6 + $0xec] sm:$0xf]
    %v2883 = vld [vmem:[%s6 + $0xf0] sm:$0xf]
    %v2884 = vld [vmem:[%s6 + $0xf4] sm:$0xf]
    %v2885 = vld [vmem:[%s6 + $0xf8] sm:$0xf]
    %v2886 = vld [vmem:[%s6 + $0xfc] sm:$0xf]
    %v2951 = vunpack.c.l.b16 %v2823
    %v2952 = vunpack.c.l.b16 %v2824
    %v2953 = vunpack.c.l.b16 %v2825
    %v2954 = vunpack.c.l.b16 %v2826
    %v2955 = vunpack.c.l.b16 %v2827
    %v2956 = vunpack.c.l.b16 %v2828
    %v2957 = vunpack.c.l.b16 %v2829
    %v2958 = vunpack.c.l.b16 %v2830
    %v2959 = vunpack.c.l.b16 %v2831
    %v2960 = vunpack.c.l.b16 %v2832
    %v2961 = vunpack.c.l.b16 %v2833
    %v2962 = vunpack.c.l.b16 %v2834
    %v2963 = vunpack.c.l.b16 %v2835
    %v2964 = vunpack.c.l.b16 %v2836
    %v2965 = vunpack.c.l.b16 %v2837
    %v2966 = vunpack.c.l.b16 %v2838
    %v2967 = vunpack.c.l.b16 %v2839
    %v2968 = vunpack.c.l.b16 %v2840
    %v2969 = vunpack.c.l.b16 %v2841
    %v2970 = vunpack.c.l.b16 %v2842
    %v2971 = vunpack.c.l.b16 %v2843
    %v2972 = vunpack.c.l.b16 %v2844
    %v2973 = vunpack.c.l.b16 %v2845
    %v2974 = vunpack.c.l.b16 %v2846
    %v2975 = vunpack.c.l.b16 %v2847
    %v2976 = vunpack.c.l.b16 %v2848
    %v2977 = vunpack.c.l.b16 %v2849
    %v2978 = vunpack.c.l.b16 %v2850
    %v2979 = vunpack.c.l.b16 %v2851
    %v2980 = vunpack.c.l.b16 %v2852
    %v2981 = vunpack.c.l.b16 %v2853
    %v2982 = vunpack.c.l.b16 %v2854
    %v2983 = vunpack.c.l.b16 %v2855
    %v2984 = vunpack.c.l.b16 %v2856
    %v2985 = vunpack.c.l.b16 %v2857
    %v2986 = vunpack.c.l.b16 %v2858
    %v2987 = vunpack.c.l.b16 %v2859
    %v2988 = vunpack.c.l.b16 %v2860
    %v2989 = vunpack.c.l.b16 %v2861
    %v2990 = vunpack.c.l.b16 %v2862
    %v2991 = vunpack.c.l.b16 %v2863
    %v2992 = vunpack.c.l.b16 %v2864
    %v2993 = vunpack.c.l.b16 %v2865
    %v2994 = vunpack.c.l.b16 %v2866
    %v2995 = vunpack.c.l.b16 %v2867
    %v2996 = vunpack.c.l.b16 %v2868
    %v2997 = vunpack.c.l.b16 %v2869
    %v2998 = vunpack.c.l.b16 %v2870
    %v2999 = vunpack.c.l.b16 %v2871
    %v3000 = vunpack.c.l.b16 %v2872
    %v3001 = vunpack.c.l.b16 %v2873
    %v3002 = vunpack.c.l.b16 %v2874
    %v3003 = vunpack.c.l.b16 %v2875
    %v3004 = vunpack.c.l.b16 %v2876
    %v3005 = vunpack.c.l.b16 %v2877
    %v3006 = vunpack.c.l.b16 %v2878
    %v3007 = vunpack.c.l.b16 %v2879
    %v3008 = vunpack.c.l.b16 %v2880
    %v3009 = vunpack.c.l.b16 %v2881
    %v3010 = vunpack.c.l.b16 %v2882
    %v3011 = vunpack.c.l.b16 %v2883
    %v3012 = vunpack.c.l.b16 %v2884
    %v3013 = vunpack.c.l.b16 %v2885
    %v3014 = vunpack.c.l.b16 %v2886
    %v3015 = vpack.c.b16 %v2952, %v2951
    %v3016 = vpack.c.b16 %v2954, %v2953
    %v3017 = vpack.c.b16 %v2956, %v2955
    %v3018 = vpack.c.b16 %v2958, %v2957
    %v3019 = vpack.c.b16 %v2960, %v2959
    %v3020 = vpack.c.b16 %v2962, %v2961
    %v3021 = vpack.c.b16 %v2964, %v2963
    %v3022 = vpack.c.b16 %v2966, %v2965
    %v3023 = vpack.c.b16 %v2968, %v2967
    %v3024 = vpack.c.b16 %v2970, %v2969
    %v3025 = vpack.c.b16 %v2972, %v2971
    %v3026 = vpack.c.b16 %v2974, %v2973
    %v3027 = vpack.c.b16 %v2976, %v2975
    %v3028 = vpack.c.b16 %v2978, %v2977
    %v3029 = vpack.c.b16 %v2980, %v2979
    %v3030 = vpack.c.b16 %v2982, %v2981
    %v3031 = vpack.c.b16 %v2984, %v2983
    %v3032 = vpack.c.b16 %v2986, %v2985
    %v3033 = vpack.c.b16 %v2988, %v2987
    %v3034 = vpack.c.b16 %v2990, %v2989
    %v3035 = vpack.c.b16 %v2992, %v2991
    %v3036 = vpack.c.b16 %v2994, %v2993
    %v3037 = vpack.c.b16 %v2996, %v2995
    %v3038 = vpack.c.b16 %v2998, %v2997
    %v3039 = vpack.c.b16 %v3000, %v2999
    %v3040 = vpack.c.b16 %v3002, %v3001
    %v3041 = vpack.c.b16 %v3004, %v3003
    %v3042 = vpack.c.b16 %v3006, %v3005
    %v3043 = vpack.c.b16 %v3008, %v3007
    %v3044 = vpack.c.b16 %v3010, %v3009
    %v3045 = vpack.c.b16 %v3012, %v3011
    %v3046 = vpack.c.b16 %v3014, %v3013
    %3079 = vmatprep.subr.bf16.mxu0 0
    %3080 = vmatpush1.bf16.msra.mxu0 %v3022
    %3081 = vmatprep.subr.bf16.mxu0 0
    %3082 = vmatpush1.bf16.msra.mxu0 %v3021
    %3083 = vmatprep.subr.bf16.mxu0 0
    %3084 = vmatpush1.bf16.msra.mxu0 %v3020
    %3085 = vmatprep.subr.bf16.mxu0 0
    %3086 = vmatpush1.bf16.msra.mxu0 %v3019
    %3087 = vmatprep.subr.bf16.mxu0 0
    %3088 = vmatpush1.bf16.msra.mxu0 %v3018
    %3089 = vmatprep.subr.bf16.mxu0 0
    %3090 = vmatpush1.bf16.msra.mxu0 %v3017
    %3091 = vmatprep.subr.bf16.mxu0 0
    %3092 = vmatpush1.bf16.msra.mxu0 %v3016
    %3093 = vmatprep.subr.bf16.mxu0 0
    %3094 = vmatpush1.bf16.msra.mxu0 %v3015
    %3095 = vmatprep.subr.bf16.mxu0 0
    %3096 = vmatpush2.bf16.msra.mxu0 %v3030
    %3097 = vmatprep.subr.bf16.mxu0 0
    %3098 = vmatpush2.bf16.msra.mxu0 %v3029
    %3099 = vmatprep.subr.bf16.mxu0 0
    %3100 = vmatpush2.bf16.msra.mxu0 %v3028
    %3101 = vmatprep.subr.bf16.mxu0 0
    %3102 = vmatpush2.bf16.msra.mxu0 %v3027
    %3103 = vmatprep.subr.bf16.mxu0 0
    %3104 = vmatpush2.bf16.msra.mxu0 %v3026
    %3105 = vmatprep.subr.bf16.mxu0 0
    %3106 = vmatpush2.bf16.msra.mxu0 %v3025
    %3107 = vmatprep.subr.bf16.mxu0 0
    %3108 = vmatpush2.bf16.msra.mxu0 %v3024
    %3109 = vmatprep.subr.bf16.mxu0 0
    %3110 = vmatpush2.bf16.msra.mxu0 %v3023
    %3111 = vmatprep.mubr.bf16.mxu0 %v2760
    %3112 = vmatmul.mubr.bf16.gmra.mxu0 %v2759
    %v3113 = vpop.f32.mrf.mxu0
    %v3114 = vadd.f32 0.0, %v3113
    %v3115 = vpop.f32.mrf.mxu0
    %v3116 = vpop.f32.mrf.mxu0
    %v3117 = vadd.f32 0.0, %v3116
    %v3118 = vpop.f32.mrf.mxu0
    %3119 = vmatprep.mubr.bf16.mxu0 %v2764
    %3120 = vmatmul.mubr.bf16.gmra.mxu0 %v2763
    %v3121 = vpop.f32.mrf.mxu0
    %v3122 = vadd.f32 0.0, %v3121
    %v3123 = vpop.f32.mrf.mxu0
    %v3124 = vpop.f32.mrf.mxu0
    %v3125 = vadd.f32 0.0, %v3124
    %v3126 = vpop.f32.mrf.mxu0
    %3127 = vmatprep.mubr.bf16.mxu0 %v2768
    %3128 = vmatmul.mubr.bf16.gmra.mxu0 %v2767
    %v3129 = vpop.f32.mrf.mxu0
    %v3130 = vadd.f32 0.0, %v3129
    %v3131 = vpop.f32.mrf.mxu0
    %v3132 = vpop.f32.mrf.mxu0
    %v3133 = vadd.f32 0.0, %v3132
    %v3134 = vpop.f32.mrf.mxu0
    %3135 = vmatprep.mubr.bf16.mxu0 %v2772
    %3136 = vmatmul.mubr.bf16.gmra.mxu0 %v2771
    %v3137 = vpop.f32.mrf.mxu0
    %v3138 = vadd.f32 0.0, %v3137
    %v3139 = vpop.f32.mrf.mxu0
    %v3140 = vpop.f32.mrf.mxu0
    %v3141 = vadd.f32 0.0, %v3140
    %v3142 = vpop.f32.mrf.mxu0
    %3143 = vmatprep.mubr.bf16.mxu0 %v2776
    %3144 = vmatmul.mubr.bf16.gmra.mxu0 %v2775
    %v3145 = vpop.f32.mrf.mxu0
    %v3146 = vadd.f32 0.0, %v3145
    %v3147 = vpop.f32.mrf.mxu0
    %v3148 = vpop.f32.mrf.mxu0
    %v3149 = vadd.f32 0.0, %v3148
    %v3150 = vpop.f32.mrf.mxu0
    %3151 = vmatprep.mubr.bf16.mxu0 %v2780
    %3152 = vmatmul.mubr.bf16.gmra.mxu0 %v2779
    %v3153 = vpop.f32.mrf.mxu0
    %v3154 = vadd.f32 0.0, %v3153
    %v3155 = vpop.f32.mrf.mxu0
    %v3156 = vpop.f32.mrf.mxu0
    %v3157 = vadd.f32 0.0, %v3156
    %v3158 = vpop.f32.mrf.mxu0
    %3159 = vmatprep.mubr.bf16.mxu0 %v2784
    %3160 = vmatmul.mubr.bf16.gmra.mxu0 %v2783
    %v3161 = vpop.f32.mrf.mxu0
    %v3162 = vadd.f32 0.0, %v3161
    %v3163 = vpop.f32.mrf.mxu0
    %v3164 = vpop.f32.mrf.mxu0
    %v3165 = vadd.f32 0.0, %v3164
    %v3166 = vpop.f32.mrf.mxu0
    %3167 = vmatprep.mubr.bf16.mxu0 %v2788
    %3168 = vmatmul.mubr.bf16.gmra.mxu0 %v2787
    %v3169 = vpop.f32.mrf.mxu0
    %v3170 = vadd.f32 0.0, %v3169
    %v3171 = vpop.f32.mrf.mxu0
    %v3172 = vpop.f32.mrf.mxu0
    %v3173 = vadd.f32 0.0, %v3172
    %v3174 = vpop.f32.mrf.mxu0
    %3175 = vmatprep.mubr.bf16.mxu0 %v2792
    %3176 = vmatmul.mubr.bf16.gmra.mxu0 %v2791
    %v3177 = vpop.f32.mrf.mxu0
    %v3178 = vadd.f32 0.0, %v3177
    %v3179 = vpop.f32.mrf.mxu0
    %v3180 = vpop.f32.mrf.mxu0
    %v3181 = vadd.f32 0.0, %v3180
    %v3182 = vpop.f32.mrf.mxu0
    %3183 = vmatprep.mubr.bf16.mxu0 %v2796
    %3184 = vmatmul.mubr.bf16.gmra.mxu0 %v2795
    %v3185 = vpop.f32.mrf.mxu0
    %v3186 = vadd.f32 0.0, %v3185
    %v3187 = vpop.f32.mrf.mxu0
    %v3188 = vpop.f32.mrf.mxu0
    %v3189 = vadd.f32 0.0, %v3188
    %v3190 = vpop.f32.mrf.mxu0
    %3191 = vmatprep.mubr.bf16.mxu0 %v2800
    %3192 = vmatmul.mubr.bf16.gmra.mxu0 %v2799
    %v3193 = vpop.f32.mrf.mxu0
    %v3194 = vadd.f32 0.0, %v3193
    %v3195 = vpop.f32.mrf.mxu0
    %v3196 = vpop.f32.mrf.mxu0
    %v3197 = vadd.f32 0.0, %v3196
    %v3198 = vpop.f32.mrf.mxu0
    %3199 = vmatprep.mubr.bf16.mxu0 %v2804
    %3200 = vmatmul.mubr.bf16.gmra.mxu0 %v2803
    %v3201 = vpop.f32.mrf.mxu0
    %v3202 = vadd.f32 0.0, %v3201
    %v3203 = vpop.f32.mrf.mxu0
    %v3204 = vpop.f32.mrf.mxu0
    %v3205 = vadd.f32 0.0, %v3204
    %v3206 = vpop.f32.mrf.mxu0
    %3207 = vmatprep.mubr.bf16.mxu0 %v2808
    %3208 = vmatmul.mubr.bf16.gmra.mxu0 %v2807
    %v3209 = vpop.f32.mrf.mxu0
    %v3210 = vadd.f32 0.0, %v3209
    %v3211 = vpop.f32.mrf.mxu0
    %v3212 = vpop.f32.mrf.mxu0
    %v3213 = vadd.f32 0.0, %v3212
    %v3214 = vpop.f32.mrf.mxu0
    %3215 = vmatprep.mubr.bf16.mxu0 %v2812
    %3216 = vmatmul.mubr.bf16.gmra.mxu0 %v2811
    %v3217 = vpop.f32.mrf.mxu0
    %v3218 = vadd.f32 0.0, %v3217
    %v3219 = vpop.f32.mrf.mxu0
    %v3220 = vpop.f32.mrf.mxu0
    %v3221 = vadd.f32 0.0, %v3220
    %v3222 = vpop.f32.mrf.mxu0
    %3223 = vmatprep.mubr.bf16.mxu0 %v2816
    %3224 = vmatmul.mubr.bf16.gmra.mxu0 %v2815
    %v3225 = vpop.f32.mrf.mxu0
    %v3226 = vadd.f32 0.0, %v3225
    %v3227 = vpop.f32.mrf.mxu0
    %v3228 = vpop.f32.mrf.mxu0
    %v3229 = vadd.f32 0.0, %v3228
    %v3230 = vpop.f32.mrf.mxu0
    %3231 = vmatprep.mubr.bf16.mxu0 %v2820
    %3232 = vmatmul.mubr.bf16.gmra.mxu0 %v2819
    %v3233 = vpop.f32.mrf.mxu0
    %v3234 = vadd.f32 0.0, %v3233
    %v3235 = vpop.f32.mrf.mxu0
    %v3236 = vpop.f32.mrf.mxu0
    %v3237 = vadd.f32 0.0, %v3236
    %v3238 = vpop.f32.mrf.mxu0
    %3239 = vdwg.mxu0
    %3240 = vmatprep.subr.bf16.mxu0 0
    %3241 = vmatpush1.bf16.msra.mxu0 %v3038
    %3242 = vmatprep.subr.bf16.mxu0 0
    %3243 = vmatpush1.bf16.msra.mxu0 %v3037
    %3244 = vmatprep.subr.bf16.mxu0 0
    %3245 = vmatpush1.bf16.msra.mxu0 %v3036
    %3246 = vmatprep.subr.bf16.mxu0 0
    %3247 = vmatpush1.bf16.msra.mxu0 %v3035
    %3248 = vmatprep.subr.bf16.mxu0 0
    %3249 = vmatpush1.bf16.msra.mxu0 %v3034
    %3250 = vmatprep.subr.bf16.mxu0 0
    %3251 = vmatpush1.bf16.msra.mxu0 %v3033
    %3252 = vmatprep.subr.bf16.mxu0 0
    %3253 = vmatpush1.bf16.msra.mxu0 %v3032
    %3254 = vmatprep.subr.bf16.mxu0 0
    %3255 = vmatpush1.bf16.msra.mxu0 %v3031
    %3256 = vmatprep.subr.bf16.mxu0 0
    %3257 = vmatpush2.bf16.msra.mxu0 %v3046
    %3258 = vmatprep.subr.bf16.mxu0 0
    %3259 = vmatpush2.bf16.msra.mxu0 %v3045
    %3260 = vmatprep.subr.bf16.mxu0 0
    %3261 = vmatpush2.bf16.msra.mxu0 %v3044
    %3262 = vmatprep.subr.bf16.mxu0 0
    %3263 = vmatpush2.bf16.msra.mxu0 %v3043
    %3264 = vmatprep.subr.bf16.mxu0 0
    %3265 = vmatpush2.bf16.msra.mxu0 %v3042
    %3266 = vmatprep.subr.bf16.mxu0 0
    %3267 = vmatpush2.bf16.msra.mxu0 %v3041
    %3268 = vmatprep.subr.bf16.mxu0 0
    %3269 = vmatpush2.bf16.msra.mxu0 %v3040
    %3270 = vmatprep.subr.bf16.mxu0 0
    %3271 = vmatpush2.bf16.msra.mxu0 %v3039
    %3272 = vmatprep.mubr.bf16.mxu0 %v2762
    %3273 = vmatmul.mubr.bf16.gmra.mxu0 %v2761
    %v3274 = vpop.f32.mrf.mxu0
    %v3275 = vadd.f32 %v3114, %v3274
    %v3276 = vpop.f32.mrf.mxu0
    %v3277 = vpop.f32.mrf.mxu0
    %v3278 = vadd.f32 %v3117, %v3277
    %v3279 = vpop.f32.mrf.mxu0
    %3280 = vmatprep.mubr.bf16.mxu0 %v2766
    %3281 = vmatmul.mubr.bf16.gmra.mxu0 %v2765
    %v3282 = vpop.f32.mrf.mxu0
    %v3283 = vadd.f32 %v3122, %v3282
    %v3284 = vpop.f32.mrf.mxu0
    %v3285 = vpop.f32.mrf.mxu0
    %v3286 = vadd.f32 %v3125, %v3285
    %v3287 = vpop.f32.mrf.mxu0
    %3288 = vmatprep.mubr.bf16.mxu0 %v2770
    %3289 = vmatmul.mubr.bf16.gmra.mxu0 %v2769
    %v3290 = vpop.f32.mrf.mxu0
    %v3291 = vadd.f32 %v3130, %v3290
    %v3292 = vpop.f32.mrf.mxu0
    %v3293 = vpop.f32.mrf.mxu0
    %v3294 = vadd.f32 %v3133, %v3293
    %v3295 = vpop.f32.mrf.mxu0
    %3296 = vmatprep.mubr.bf16.mxu0 %v2774
    %3297 = vmatmul.mubr.bf16.gmra.mxu0 %v2773
    %v3298 = vpop.f32.mrf.mxu0
    %v3299 = vadd.f32 %v3138, %v3298
    %v3300 = vpop.f32.mrf.mxu0
    %v3301 = vpop.f32.mrf.mxu0
    %v3302 = vadd.f32 %v3141, %v3301
    %v3303 = vpop.f32.mrf.mxu0
    %3304 = vmatprep.mubr.bf16.mxu0 %v2778
    %3305 = vmatmul.mubr.bf16.gmra.mxu0 %v2777
    %v3306 = vpop.f32.mrf.mxu0
    %v3307 = vadd.f32 %v3146, %v3306
    %v3308 = vpop.f32.mrf.mxu0
    %v3309 = vpop.f32.mrf.mxu0
    %v3310 = vadd.f32 %v3149, %v3309
    %v3311 = vpop.f32.mrf.mxu0
    %3312 = vmatprep.mubr.bf16.mxu0 %v2782
    %3313 = vmatmul.mubr.bf16.gmra.mxu0 %v2781
    %v3314 = vpop.f32.mrf.mxu0
    %v3315 = vadd.f32 %v3154, %v3314
    %v3316 = vpop.f32.mrf.mxu0
    %v3317 = vpop.f32.mrf.mxu0
    %v3318 = vadd.f32 %v3157, %v3317
    %v3319 = vpop.f32.mrf.mxu0
    %3320 = vmatprep.mubr.bf16.mxu0 %v2786
    %3321 = vmatmul.mubr.bf16.gmra.mxu0 %v2785
    %v3322 = vpop.f32.mrf.mxu0
    %v3323 = vadd.f32 %v3162, %v3322
    %v3324 = vpop.f32.mrf.mxu0
    %v3325 = vpop.f32.mrf.mxu0
    %v3326 = vadd.f32 %v3165, %v3325
    %v3327 = vpop.f32.mrf.mxu0
    %3328 = vmatprep.mubr.bf16.mxu0 %v2790
    %3329 = vmatmul.mubr.bf16.gmra.mxu0 %v2789
    %v3330 = vpop.f32.mrf.mxu0
    %v3331 = vadd.f32 %v3170, %v3330
    %v3332 = vpop.f32.mrf.mxu0
    %v3333 = vpop.f32.mrf.mxu0
    %v3334 = vadd.f32 %v3173, %v3333
    %v3335 = vpop.f32.mrf.mxu0
    %3336 = vmatprep.mubr.bf16.mxu0 %v2794
    %3337 = vmatmul.mubr.bf16.gmra.mxu0 %v2793
    %v3338 = vpop.f32.mrf.mxu0
    %v3339 = vadd.f32 %v3178, %v3338
    %v3340 = vpop.f32.mrf.mxu0
    %v3341 = vpop.f32.mrf.mxu0
    %v3342 = vadd.f32 %v3181, %v3341
    %v3343 = vpop.f32.mrf.mxu0
    %3344 = vmatprep.mubr.bf16.mxu0 %v2798
    %3345 = vmatmul.mubr.bf16.gmra.mxu0 %v2797
    %v3346 = vpop.f32.mrf.mxu0
    %v3347 = vadd.f32 %v3186, %v3346
    %v3348 = vpop.f32.mrf.mxu0
    %v3349 = vpop.f32.mrf.mxu0
    %v3350 = vadd.f32 %v3189, %v3349
    %v3351 = vpop.f32.mrf.mxu0
    %3352 = vmatprep.mubr.bf16.mxu0 %v2802
    %3353 = vmatmul.mubr.bf16.gmra.mxu0 %v2801
    %v3354 = vpop.f32.mrf.mxu0
    %v3355 = vadd.f32 %v3194, %v3354
    %v3356 = vpop.f32.mrf.mxu0
    %v3357 = vpop.f32.mrf.mxu0
    %v3358 = vadd.f32 %v3197, %v3357
    %v3359 = vpop.f32.mrf.mxu0
    %3360 = vmatprep.mubr.bf16.mxu0 %v2806
    %3361 = vmatmul.mubr.bf16.gmra.mxu0 %v2805
    %v3362 = vpop.f32.mrf.mxu0
    %v3363 = vadd.f32 %v3202, %v3362
    %v3364 = vpop.f32.mrf.mxu0
    %v3365 = vpop.f32.mrf.mxu0
    %v3366 = vadd.f32 %v3205, %v3365
    %v3367 = vpop.f32.mrf.mxu0
    %3368 = vmatprep.mubr.bf16.mxu0 %v2810
    %3369 = vmatmul.mubr.bf16.gmra.mxu0 %v2809
    %v3370 = vpop.f32.mrf.mxu0
    %v3371 = vadd.f32 %v3210, %v3370
    %v3372 = vpop.f32.mrf.mxu0
    %v3373 = vpop.f32.mrf.mxu0
    %v3374 = vadd.f32 %v3213, %v3373
    %v3375 = vpop.f32.mrf.mxu0
    %3376 = vmatprep.mubr.bf16.mxu0 %v2814
    %3377 = vmatmul.mubr.bf16.gmra.mxu0 %v2813
    %v3378 = vpop.f32.mrf.mxu0
    %v3379 = vadd.f32 %v3218, %v3378
    %v3380 = vpop.f32.mrf.mxu0
    %v3381 = vpop.f32.mrf.mxu0
    %v3382 = vadd.f32 %v3221, %v3381
    %v3383 = vpop.f32.mrf.mxu0
    %3384 = vmatprep.mubr.bf16.mxu0 %v2818
    %3385 = vmatmul.mubr.bf16.gmra.mxu0 %v2817
    %v3386 = vpop.f32.mrf.mxu0
    %v3387 = vadd.f32 %v3226, %v3386
    %v3388 = vpop.f32.mrf.mxu0
    %v3389 = vpop.f32.mrf.mxu0
    %v3390 = vadd.f32 %v3229, %v3389
    %v3391 = vpop.f32.mrf.mxu0
    %3392 = vmatprep.mubr.bf16.mxu0 %v2822
    %3393 = vmatmul.mubr.bf16.gmra.mxu0 %v2821
    %v3394 = vpop.f32.mrf.mxu0
    %v3395 = vadd.f32 %v3234, %v3394
    %v3396 = vpop.f32.mrf.mxu0
    %v3397 = vpop.f32.mrf.mxu0
    %v3398 = vadd.f32 %v3237, %v3397
    %v3399 = vpop.f32.mrf.mxu0
    %3400 = vdwg.mxu0
    %v3401 = vmax.f32 %v3275, %v3278
    %v3402 = vmax.f32 %v3401, %v3283
    %v3403 = vmax.f32 %v3402, %v3286
    %v3404 = vrot.slane %v3403, 4
    %v3405 = vmax.f32 %v3403, %v3404
    %v3406 = vrot.slane %v3405, 2
    %v3407 = vmax.f32 %v3405, %v3406
    %v3408 = vrot.slane %v3407, 1
    %v3409 = vmax.f32 %v3407, %v3408
    %v3410 = vmax.f32 %v3291, %v3294
    %v3411 = vmax.f32 %v3410, %v3299
    %v3412 = vmax.f32 %v3411, %v3302
    %v3413 = vrot.slane %v3412, 4
    %v3414 = vmax.f32 %v3412, %v3413
    %v3415 = vrot.slane %v3414, 2
    %v3416 = vmax.f32 %v3414, %v3415
    %v3417 = vrot.slane %v3416, 1
    %v3418 = vmax.f32 %v3416, %v3417
    %v3419 = vmax.f32 %v3307, %v3310
    %v3420 = vmax.f32 %v3419, %v3315
    %v3421 = vmax.f32 %v3420, %v3318
    %v3422 = vrot.slane %v3421, 4
    %v3423 = vmax.f32 %v3421, %v3422
    %v3424 = vrot.slane %v3423, 2
    %v3425 = vmax.f32 %v3423, %v3424
    %v3426 = vrot.slane %v3425, 1
    %v3427 = vmax.f32 %v3425, %v3426
    %v3428 = vmax.f32 %v3323, %v3326
    %v3429 = vmax.f32 %v3428, %v3331
    %v3430 = vmax.f32 %v3429, %v3334
    %v3431 = vrot.slane %v3430, 4
    %v3432 = vmax.f32 %v3430, %v3431
    %v3433 = vrot.slane %v3432, 2
    %v3434 = vmax.f32 %v3432, %v3433
    %v3435 = vrot.slane %v3434, 1
    %v3436 = vmax.f32 %v3434, %v3435
    %v3437 = vmax.f32 %v3339, %v3342
    %v3438 = vmax.f32 %v3437, %v3347
    %v3439 = vmax.f32 %v3438, %v3350
    %v3440 = vrot.slane %v3439, 4
    %v3441 = vmax.f32 %v3439, %v3440
    %v3442 = vrot.slane %v3441, 2
    %v3443 = vmax.f32 %v3441, %v3442
    %v3444 = vrot.slane %v3443, 1
    %v3445 = vmax.f32 %v3443, %v3444
    %v3446 = vmax.f32 %v3355, %v3358
    %v3447 = vmax.f32 %v3446, %v3363
    %v3448 = vmax.f32 %v3447, %v3366
    %v3449 = vrot.slane %v3448, 4
    %v3450 = vmax.f32 %v3448, %v3449
    %v3451 = vrot.slane %v3450, 2
    %v3452 = vmax.f32 %v3450, %v3451
    %v3453 = vrot.slane %v3452, 1
    %v3454 = vmax.f32 %v3452, %v3453
    %v3455 = vmax.f32 %v3371, %v3374
    %v3456 = vmax.f32 %v3455, %v3379
    %v3457 = vmax.f32 %v3456, %v3382
    %v3458 = vrot.slane %v3457, 4
    %v3459 = vmax.f32 %v3457, %v3458
    %v3460 = vrot.slane %v3459, 2
    %v3461 = vmax.f32 %v3459, %v3460
    %v3462 = vrot.slane %v3461, 1
    %v3463 = vmax.f32 %v3461, %v3462
    %v3464 = vmax.f32 %v3387, %v3390
    %v3465 = vmax.f32 %v3464, %v3395
    %v3466 = vmax.f32 %v3465, %v3398
    %v3467 = vrot.slane %v3466, 4
    %v3468 = vmax.f32 %v3466, %v3467
    %v3469 = vrot.slane %v3468, 2
    %v3470 = vmax.f32 %v3468, %v3469
    %v3471 = vrot.slane %v3470, 1
    %v3472 = vmax.f32 %v3470, %v3471
    %v3473 = vld [vmem:[%s7] sm:$0x1]
    %v3475 = vlaneseq
    %v3476 = vshrl.u32 %v3475, 7
    %v3477 = vsub.s32 0, %v3476
    %v3478 = vrot.slane %v3473, %v3477
    %v3480 = vadd.f32 %v3409, %v3478
    %v3481 = vadd.f32 %v3418, %v3478
    %v3482 = vadd.f32 %v3427, %v3478
    %v3483 = vadd.f32 %v3436, %v3478
    %v3484 = vadd.f32 %v3445, %v3478
    %v3485 = vadd.f32 %v3454, %v3478
    %v3486 = vadd.f32 %v3463, %v3478
    %v3487 = vadd.f32 %v3472, %v3478
    %v3496 = vrot.slane %v3481, 7
    %v3497 = vsel %vm1042, %v3496, %v3480
    %v3498 = vrot.slane %v3482, 6
    %v3499 = vsel %vm1044, %v3498, %v3497
    %v3500 = vrot.slane %v3483, 5
    %v3501 = vsel %vm1046, %v3500, %v3499
    %v3502 = vrot.slane %v3484, 4
    %v3503 = vsel %vm1048, %v3502, %v3501
    %v3504 = vrot.slane %v3485, 3
    %v3505 = vsel %vm1050, %v3504, %v3503
    %v3506 = vrot.slane %v3486, 2
    %v3507 = vsel %vm1052, %v3506, %v3505
    %v3508 = vrot.slane %v3487, 1
    %v3509 = vsel %vm1054, %v3508, %v3507
    %3511 = vst [vmem:[#allocation8] sm:$0xff] %v3509
    // Predicated region
    $region46: #{tpu_custom_call.1} parent=1 // pred_check
      _
    $region47: #{tpu_custom_call.1} parent=1 // pred_check_branch
      %3513 = sbr.rel (0) target = $region49
    $region48: #{tpu_custom_call.1} parent=1 // pred_region
      %s3515 = ssub.s32 128, 128
      %3516 = vsyncadd [#allocation4], %s3515
      %s3518 = sshll.u32 [#allocation8], 4
      %s3519 = int_to_ptr.vmem [resolvable:$true] %s3518
      %3521 = dma.vmem_to_hbm [thread:$0]  %s3519, 128, %s8, [#allocation4]
    $region49: #{tpu_custom_call.1} parent=1 // pred_fallthru
      _
    // Predicated region
    $region50: #{tpu_custom_call.1} parent=1 // pred_check
      _
    $region51: #{tpu_custom_call.1} parent=1 // pred_check_branch
      %3523 = sbr.rel (0) target = $region53
    $region52: #{tpu_custom_call.1} parent=1 // pred_region
      %3524 = dma.done [#allocation4], 128
    $region53: #{tpu_custom_call.1} parent=1 // pred_fallthru
      _
    %3525 = vsyncpa [#allocation3], 1
    %3526 = vsyncpa [#allocation6], 1
    %3527 = vsyncpa [#allocation4], 1

</llo_original>
